<compile_context>
chip_gen: v6e
topology: v6e:2x2x1
jax: 0.10.0
libtpu: 0.0.40
codegen_flags: <defaults>
</compile_context>

<pallas_src>
import functools

import jax
import jax.numpy as jnp
from jax import lax
from jax.experimental import pallas as pl
from jax.experimental.pallas import tpu as pltpu


_INV_SQRT2 = 0.7071067811865476


def _is_pow2(v):
    return v > 0 and (v & (v - 1)) == 0


def _erf_f32(x):
    """Abramowitz & Stegun 7.1.26 erf approximation (|err| <= 1.5e-7).

    Only mul/add/exp/rcp: the exp and the approximate reciprocal both issue to
    the EUP slot; one Newton step restores ~f32 accuracy of the reciprocal so
    the 5e-4 end-to-end tolerance is preserved.
    """
    p = 0.3275911
    a1, a2, a3, a4, a5 = (0.254829592, -0.284496736, 1.421413741,
                          -1.453152027, 1.061405429)
    ax = jnp.abs(x)
    d = 1.0 + p * ax
    t = pl.reciprocal(d, approx=True)
    t = t * (2.0 - d * t)                      # Newton refinement
    poly = t * (a1 + t * (a2 + t * (a3 + t * (a4 + t * a5))))
    y = 1.0 - poly * jnp.exp(-ax * ax)
    return jnp.where(x < 0.0, -y, y)


def _gelu_exact(x):
    return 0.5 * x * (1.0 + _erf_f32(x * _INV_SQRT2))


# ----------------------------- Pallas kernel ------------------------------ #
def _fused_upsampler_kernel(x_ref, w1_ref, b1_ref, w2_ref, b2_ref, o_ref,
                            taps_ref, *, hu, wu, imgs):
    # x_ref   : (Cin, imgs*Hu*Wu)   upsampled images packed along lanes
    # w1_ref  : (Cmid, 9*Cin)       conv1 weights, tap-major columns
    # b1_ref  : (Cmid, 1)           f32
    # w2_ref  : (Cout, 9*Cmid)      conv2 weights, tap-major columns
    # b2_ref  : (Cout, 1)           f32
    # o_ref   : (imgs, Cout, Hu*Wu) lane-dense per-image output slabs
    # taps_ref: (9*Cin, imgs*Hu*Wu) VMEM scratch for the stacked-tap matmul
    hw = hu * wu
    L = x_ref.shape[-1]
    cin = x_ref.shape[0]

    # ---- in-kernel boundary masks from iota (no 9xHW mask DMA) ---- #
    idx = lax.broadcasted_iota(jnp.int32, (1, L), 1)
    if _is_pow2(hw) and _is_pow2(wu):
        local = idx & (hw - 1)
        col = idx & (wu - 1)
        row = local >> (wu.bit_length() - 1)
    else:
        # Fallback path (assumes Mosaic i32 vector div/rem support).
        local = idx % hw
        row = local // wu
        col = local - row * wu

    not_top, not_bot = row >= 1, row < hu - 1
    not_left, not_right = col >= 1, col < wu - 1

    def tap_mask(dy, dx):
        m = None
        for cond, use in ((not_top, dy < 0), (not_bot, dy > 0),
                          (not_left, dx < 0), (not_right, dx > 0)):
            if use:
                m = cond if m is None else (m & cond)
        return m                                 # None for the centre tap

    masks = [tap_mask(t // 3 - 1, t % 3 - 1) for t in range(9)]

    def build_taps(x):
        # 9 shifted+masked copies stacked on sublanes -> single K=9*Cin matmul.
        # Rolls issue on the XLU slot; cross-image / cross-edge wrap positions
        # are exactly the masked ones, so zeroing them keeps the conv exact.
        for t in range(9):
            dy, dx = t // 3 - 1, t % 3 - 1
            off = dy * wu + dx
            tap = x if off == 0 else pltpu.roll(x, shift=(-off) % L, axis=1)
            if masks[t] is not None:
                tap = jnp.where(masks[t], tap, 0.0)
            taps_ref[pl.ds(t * cin, cin), :] = tap

    def conv(w_ref, b_ref):
        return (jnp.dot(w_ref[...], taps_ref[...],
                        preferred_element_type=jnp.float32)
                + b_ref[...].astype(jnp.float32))

    x = x_ref[...]
    build_taps(x)
    h = _gelu_exact(conv(w1_ref, b1_ref)).astype(x.dtype)
    build_taps(h)
    y = conv(w2_ref, b2_ref)                     # (Cout, imgs*hw) f32
    for i in range(imgs):                        # lane-aligned static slices
        o_ref[i] = y[:, i * hw:(i + 1) * hw].astype(o_ref.dtype)


# ------------------------------ wrapper ------------------------------------ #
def nearest_conv_upsampler(x_nchw, params, sf, *, compute_dtype=jnp.float32,
                           max_block_lanes=16384):
    """x: (N, c_in, H, W) -> (N, c_out, H*sf, W*sf).  Matches the PyTorch module."""
    N, Cin, H, W = x_nchw.shape
    Cmid = params["w1"].shape[0]
    Cout = params["w2"].shape[0]
    assert params["w1"].shape == (Cmid, Cin, 3, 3) and Cmid == Cin
    assert params["w2"].shape == (Cout, Cmid, 3, 3)
    Hu, Wu = H * sf, W * sf
    HWu = Hu * Wu

    # Nearest upsample + channel-major packing in one XLA broadcast producer:
    #   x_flat[c, n*HWu + (y*sf+py)*Wu + x*sf+px] = x[n, c, y, x]
    # TODO(synk): fold this into the kernel (see module header).
    xp = jnp.transpose(x_nchw, (1, 0, 2, 3))                       # small, low-res
    x_flat = jnp.broadcast_to(
        xp[:, :, :, None, :, None], (Cin, N, H, sf, W, sf)
    ).reshape(Cin, N * HWu).astype(compute_dtype)

    # Stacked per-tap weights: column index = (ky*3 + kx)*Cin + i, matching the
    # tap-major layout of the in-kernel taps scratch.
    w1s = jnp.transpose(params["w1"], (0, 2, 3, 1)).reshape(Cmid, 9 * Cin)
    w2s = jnp.transpose(params["w2"], (0, 2, 3, 1)).reshape(Cout, 9 * Cmid)
    w1s = w1s.astype(compute_dtype)
    w2s = w2s.astype(compute_dtype)
    b1 = params["b1"].reshape(Cmid, 1).astype(jnp.float32)
    b2 = params["b2"].reshape(Cout, 1).astype(jnp.float32)

    # Pack as many whole images per grid step as the lane budget allows
    # (amortises per-step pipeline overhead, lengthens the MXU RHS).
    imgs = 1
    for d in range(N, 0, -1):
        if N % d == 0 and d * HWu <= max_block_lanes:
            imgs = d
            break
    n_blocks = N // imgs
    L_blk = imgs * HWu

    itemsize = jnp.dtype(compute_dtype).itemsize
    cost = pl.CostEstimate(
        flops=2 * 9 * (Cin * Cmid + Cmid * Cout) * N * HWu,
        transcendentals=2 * Cmid * N * HWu,            # exp + approx rcp
        bytes_accessed=(Cin * N * HWu * itemsize
                        + 9 * (Cin * Cmid + Cmid * Cout) * itemsize
                        + (Cmid + Cout) * 4
                        + Cout * N * HWu * x_nchw.dtype.itemsize))

    kernel = functools.partial(_fused_upsampler_kernel, hu=Hu, wu=Wu, imgs=imgs)

    out = pl.pallas_call(
        kernel,
        out_shape=jax.ShapeDtypeStruct((N, Cout, HWu), x_nchw.dtype),
        grid_spec=pltpu.PrefetchScalarGridSpec(
            num_scalar_prefetch=0,
            grid=(n_blocks,),
            in_specs=[
                pl.BlockSpec((Cin, L_blk), lambda b: (0, b)),
                pl.BlockSpec((Cmid, 9 * Cin), lambda b: (0, 0)),
                pl.BlockSpec((Cmid, 1), lambda b: (0, 0)),
                pl.BlockSpec((Cout, 9 * Cmid), lambda b: (0, 0)),
                pl.BlockSpec((Cout, 1), lambda b: (0, 0)),
            ],
            out_specs=pl.BlockSpec((imgs, Cout, HWu), lambda b: (b, 0, 0)),
            scratch_shapes=[pltpu.VMEM((9 * Cin, L_blk), compute_dtype)],
        ),
        compiler_params=pltpu.CompilerParams(
            dimension_semantics=("parallel",),
            # TODO(synk): per-generation vmem limit once row-tiled (v5e/v6e can
            # go ~64-100 MiB); 32 MiB is safe everywhere incl. v7x (64 MiB VMEM).
            vmem_limit_bytes=32 * 1024 * 1024,
        ),
        cost_estimate=cost,
    )(x_flat, w1s, b1, w2s, b2)

    return out.reshape(N, Cout, Hu, Wu)


# --------------------------- deterministic init ----------------------------- #
def init_params(key, c_in, c_out):
    k1, k2, k3, k4 = jax.random.split(key, 4)
    bound = 1.0 / (c_in * 9) ** 0.5          # fan_in = c_in*3*3 for both convs
    return {
        "w1": jax.random.uniform(k1, (c_in, c_in, 3, 3), jnp.float32,
                                 -bound, bound),
        "b1": jax.random.uniform(k2, (c_in,), jnp.float32, -bound, bound),
        "w2": jax.random.uniform(k3, (c_out, c_in, 3, 3), jnp.float32,
                                 -bound, bound),
        "b2": jax.random.uniform(k4, (c_out,), jnp.float32, -bound, bound),
    }


# ------------------------------- reference ---------------------------------- #
def _ref_forward(x, params, sf):
    def conv(v, w, b):
        y = lax.conv_general_dilated(
            v, w, (1, 1), ((1, 1), (1, 1)),
            dimension_numbers=("NCHW", "OIHW", "NCHW"),
            precision=lax.Precision.HIGHEST)
        return y + b[None, :, None, None]

    xu = jnp.repeat(jnp.repeat(x, sf, axis=2), sf, axis=3)    # nearest upsample
    y = conv(xu, params["w1"], params["b1"])
    y = jax.nn.gelu(y, approximate=False)                     # exact GELU
    return conv(y, params["w2"], params["b2"])


# ---------------------------------- main ------------------------------------ #
if __name__ == "__main__":
    N, c_in, c_out, sf = 2, 4, 4, 2
    H = W = 16

    key = jax.random.PRNGKey(0)
    kx, kp = jax.random.split(key)
    x = jax.random.normal(kx, (N, c_in, H, W), jnp.float32)
    params = init_params(kp, c_in, c_out)

    fwd = jax.jit(functools.partial(nearest_conv_upsampler, sf=sf))
    out = fwd(x, params)
    jax.block_until_ready(out)

    assert out.shape == (N, c_out, H * sf, W * sf), out.shape

    ref = _ref_forward(x, params, sf)
    if not jnp.allclose(out, ref, atol=5e-4, rtol=5e-4):
        err = float(jnp.max(jnp.abs(out - ref)))
        raise AssertionError(f"Pallas result mismatch vs reference, max|err|={err}")

    print("KERNEL_OK")
</pallas_src>

<mosaic_0001>
module attributes {stable_mosaic.version = 11 : i64} {
  func.func @_fused_upsampler_kernel(%arg0: i32, %arg1: memref<4x2048xf32, #tpu.memory_space<vmem>>, %arg2: memref<4x36xf32, #tpu.memory_space<vmem>>, %arg3: memref<4x1xf32, #tpu.memory_space<vmem>>, %arg4: memref<4x36xf32, #tpu.memory_space<vmem>>, %arg5: memref<4x1xf32, #tpu.memory_space<vmem>>, %arg6: memref<2x4x1024xf32, #tpu.memory_space<vmem>>, %arg7: memref<36x2048xf32, #tpu.memory_space<vmem>>) attributes {dimension_semantics = [#tpu.dimension_semantics<parallel>], iteration_bounds = array<i64: 1>, scalar_prefetch = 0 : i64, scratch_operands = 1 : i64, tpu.core_type = #tpu.core_type<tc>, window_params = [{transform_indices = @transform_0, window_bounds = array<i64: 4, 2048>}, {pipeline_mode = #tpu.pipeline_mode<synchronous>, transform_indices = @transform_1, window_bounds = array<i64: 4, 36>}, {pipeline_mode = #tpu.pipeline_mode<synchronous>, transform_indices = @transform_2, window_bounds = array<i64: 4, 1>}, {pipeline_mode = #tpu.pipeline_mode<synchronous>, transform_indices = @transform_3, window_bounds = array<i64: 4, 36>}, {pipeline_mode = #tpu.pipeline_mode<synchronous>, transform_indices = @transform_4, window_bounds = array<i64: 4, 1>}, {transform_indices = @transform_5, window_bounds = array<i64: 2, 4, 1024>}]} {
    %0 = tpu.iota {dimensions = array<i32: 1>} : vector<1x2048xi32>
    %c1023_i32 = arith.constant 1023 : i32
    %1 = vector.broadcast %c1023_i32 : i32 to vector<1x2048xi32>
    %2 = arith.andi %0, %1 : vector<1x2048xi32>
    %c31_i32 = arith.constant 31 : i32
    %3 = vector.broadcast %c31_i32 : i32 to vector<1x2048xi32>
    %4 = arith.andi %0, %3 : vector<1x2048xi32>
    %c5_i32 = arith.constant 5 : i32
    %5 = vector.broadcast %c5_i32 : i32 to vector<1x2048xi32>
    %6 = arith.shrsi %2, %5 : vector<1x2048xi32>
    %c1_i32 = arith.constant 1 : i32
    %7 = vector.broadcast %c1_i32 : i32 to vector<1x2048xi32>
    %8 = arith.cmpi sge, %6, %7 : vector<1x2048xi32>
    %c31_i32_0 = arith.constant 31 : i32
    %9 = vector.broadcast %c31_i32_0 : i32 to vector<1x2048xi32>
    %10 = arith.cmpi slt, %6, %9 : vector<1x2048xi32>
    %c1_i32_1 = arith.constant 1 : i32
    %11 = vector.broadcast %c1_i32_1 : i32 to vector<1x2048xi32>
    %12 = arith.cmpi sge, %4, %11 : vector<1x2048xi32>
    %c31_i32_2 = arith.constant 31 : i32
    %13 = vector.broadcast %c31_i32_2 : i32 to vector<1x2048xi32>
    %14 = arith.cmpi slt, %4, %13 : vector<1x2048xi32>
    %15 = arith.andi %8, %12 : vector<1x2048xi1>
    %16 = arith.andi %8, %14 : vector<1x2048xi1>
    %17 = arith.andi %10, %12 : vector<1x2048xi1>
    %18 = arith.andi %10, %14 : vector<1x2048xi1>
    %c0 = arith.constant 0 : index
    %c0_3 = arith.constant 0 : index
    %19 = vector.load %arg1[%c0, %c0_3] : memref<4x2048xf32, #tpu.memory_space<vmem>>, vector<4x2048xf32>
    %c33_i32 = arith.constant 33 : i32
    %20 = tpu.dynamic_rotate %19 by %c33_i32 dim 1 : vector<4x2048xf32>, i32 -> vector<4x2048xf32>
    %cst = arith.constant 0.000000e+00 : f32
    %21 = vector.shape_cast %15 : vector<1x2048xi1> to vector<1x2048xi1>
    %22 = vector.broadcast %21 : vector<1x2048xi1> to vector<4x2048xi1>
    %23 = vector.broadcast %cst : f32 to vector<4x2048xf32>
    %24 = arith.select %22, %20, %23 : vector<4x2048xi1>, vector<4x2048xf32>
    %c0_4 = arith.constant 0 : index
    %c0_5 = arith.constant 0 : index
    %25 = vector.load %arg7[%c0_4, %c0_5] : memref<36x2048xf32, #tpu.memory_space<vmem>>, vector<4x2048xf32>
    tpu.vector_store %arg7[%c0_4, %c0_5], %24 {strides = array<i32>} : memref<36x2048xf32, #tpu.memory_space<vmem>>, vector<4x2048xf32>,
    %c32_i32 = arith.constant 32 : i32
    %26 = tpu.dynamic_rotate %19 by %c32_i32 dim 1 : vector<4x2048xf32>, i32 -> vector<4x2048xf32>
    %cst_6 = arith.constant 0.000000e+00 : f32
    %27 = vector.shape_cast %8 : vector<1x2048xi1> to vector<1x2048xi1>
    %28 = vector.broadcast %27 : vector<1x2048xi1> to vector<4x2048xi1>
    %29 = vector.broadcast %cst_6 : f32 to vector<4x2048xf32>
    %30 = arith.select %28, %26, %29 : vector<4x2048xi1>, vector<4x2048xf32>
    %c4 = arith.constant 4 : index
    %c0_7 = arith.constant 0 : index
    %31 = vector.load %arg7[%c4, %c0_7] : memref<36x2048xf32, #tpu.memory_space<vmem>>, vector<4x2048xf32>
    tpu.vector_store %arg7[%c4, %c0_7], %30 {strides = array<i32>} : memref<36x2048xf32, #tpu.memory_space<vmem>>, vector<4x2048xf32>,
    %c31_i32_8 = arith.constant 31 : i32
    %32 = tpu.dynamic_rotate %19 by %c31_i32_8 dim 1 : vector<4x2048xf32>, i32 -> vector<4x2048xf32>
    %cst_9 = arith.constant 0.000000e+00 : f32
    %33 = vector.shape_cast %16 : vector<1x2048xi1> to vector<1x2048xi1>
    %34 = vector.broadcast %33 : vector<1x2048xi1> to vector<4x2048xi1>
    %35 = vector.broadcast %cst_9 : f32 to vector<4x2048xf32>
    %36 = arith.select %34, %32, %35 : vector<4x2048xi1>, vector<4x2048xf32>
    %c8 = arith.constant 8 : index
    %c0_10 = arith.constant 0 : index
    %37 = vector.load %arg7[%c8, %c0_10] : memref<36x2048xf32, #tpu.memory_space<vmem>>, vector<4x2048xf32>
    tpu.vector_store %arg7[%c8, %c0_10], %36 {strides = array<i32>} : memref<36x2048xf32, #tpu.memory_space<vmem>>, vector<4x2048xf32>,
    %c1_i32_11 = arith.constant 1 : i32
    %38 = tpu.dynamic_rotate %19 by %c1_i32_11 dim 1 : vector<4x2048xf32>, i32 -> vector<4x2048xf32>
    %cst_12 = arith.constant 0.000000e+00 : f32
    %39 = vector.shape_cast %12 : vector<1x2048xi1> to vector<1x2048xi1>
    %40 = vector.broadcast %39 : vector<1x2048xi1> to vector<4x2048xi1>
    %41 = vector.broadcast %cst_12 : f32 to vector<4x2048xf32>
    %42 = arith.select %40, %38, %41 : vector<4x2048xi1>, vector<4x2048xf32>
    %c12 = arith.constant 12 : index
    %c0_13 = arith.constant 0 : index
    %43 = vector.load %arg7[%c12, %c0_13] : memref<36x2048xf32, #tpu.memory_space<vmem>>, vector<4x2048xf32>
    tpu.vector_store %arg7[%c12, %c0_13], %42 {strides = array<i32>} : memref<36x2048xf32, #tpu.memory_space<vmem>>, vector<4x2048xf32>,
    %c16 = arith.constant 16 : index
    %c0_14 = arith.constant 0 : index
    %44 = vector.load %arg7[%c16, %c0_14] : memref<36x2048xf32, #tpu.memory_space<vmem>>, vector<4x2048xf32>
    tpu.vector_store %arg7[%c16, %c0_14], %19 {strides = array<i32>} : memref<36x2048xf32, #tpu.memory_space<vmem>>, vector<4x2048xf32>,
    %c2047_i32 = arith.constant 2047 : i32
    %45 = tpu.dynamic_rotate %19 by %c2047_i32 dim 1 : vector<4x2048xf32>, i32 -> vector<4x2048xf32>
    %cst_15 = arith.constant 0.000000e+00 : f32
    %46 = vector.shape_cast %14 : vector<1x2048xi1> to vector<1x2048xi1>
    %47 = vector.broadcast %46 : vector<1x2048xi1> to vector<4x2048xi1>
    %48 = vector.broadcast %cst_15 : f32 to vector<4x2048xf32>
    %49 = arith.select %47, %45, %48 : vector<4x2048xi1>, vector<4x2048xf32>
    %c20 = arith.constant 20 : index
    %c0_16 = arith.constant 0 : index
    %50 = vector.load %arg7[%c20, %c0_16] : memref<36x2048xf32, #tpu.memory_space<vmem>>, vector<4x2048xf32>
    tpu.vector_store %arg7[%c20, %c0_16], %49 {strides = array<i32>} : memref<36x2048xf32, #tpu.memory_space<vmem>>, vector<4x2048xf32>,
    %c2017_i32 = arith.constant 2017 : i32
    %51 = tpu.dynamic_rotate %19 by %c2017_i32 dim 1 : vector<4x2048xf32>, i32 -> vector<4x2048xf32>
    %cst_17 = arith.constant 0.000000e+00 : f32
    %52 = vector.shape_cast %17 : vector<1x2048xi1> to vector<1x2048xi1>
    %53 = vector.broadcast %52 : vector<1x2048xi1> to vector<4x2048xi1>
    %54 = vector.broadcast %cst_17 : f32 to vector<4x2048xf32>
    %55 = arith.select %53, %51, %54 : vector<4x2048xi1>, vector<4x2048xf32>
    %c24 = arith.constant 24 : index
    %c0_18 = arith.constant 0 : index
    %56 = vector.load %arg7[%c24, %c0_18] : memref<36x2048xf32, #tpu.memory_space<vmem>>, vector<4x2048xf32>
    tpu.vector_store %arg7[%c24, %c0_18], %55 {strides = array<i32>} : memref<36x2048xf32, #tpu.memory_space<vmem>>, vector<4x2048xf32>,
    %c2016_i32 = arith.constant 2016 : i32
    %57 = tpu.dynamic_rotate %19 by %c2016_i32 dim 1 : vector<4x2048xf32>, i32 -> vector<4x2048xf32>
    %cst_19 = arith.constant 0.000000e+00 : f32
    %58 = vector.shape_cast %10 : vector<1x2048xi1> to vector<1x2048xi1>
    %59 = vector.broadcast %58 : vector<1x2048xi1> to vector<4x2048xi1>
    %60 = vector.broadcast %cst_19 : f32 to vector<4x2048xf32>
    %61 = arith.select %59, %57, %60 : vector<4x2048xi1>, vector<4x2048xf32>
    %c28 = arith.constant 28 : index
    %c0_20 = arith.constant 0 : index
    %62 = vector.load %arg7[%c28, %c0_20] : memref<36x2048xf32, #tpu.memory_space<vmem>>, vector<4x2048xf32>
    tpu.vector_store %arg7[%c28, %c0_20], %61 {strides = array<i32>} : memref<36x2048xf32, #tpu.memory_space<vmem>>, vector<4x2048xf32>,
    %c2015_i32 = arith.constant 2015 : i32
    %63 = tpu.dynamic_rotate %19 by %c2015_i32 dim 1 : vector<4x2048xf32>, i32 -> vector<4x2048xf32>
    %cst_21 = arith.constant 0.000000e+00 : f32
    %64 = vector.shape_cast %18 : vector<1x2048xi1> to vector<1x2048xi1>
    %65 = vector.broadcast %64 : vector<1x2048xi1> to vector<4x2048xi1>
    %66 = vector.broadcast %cst_21 : f32 to vector<4x2048xf32>
    %67 = arith.select %65, %63, %66 : vector<4x2048xi1>, vector<4x2048xf32>
    %c32 = arith.constant 32 : index
    %c0_22 = arith.constant 0 : index
    %68 = vector.load %arg7[%c32, %c0_22] : memref<36x2048xf32, #tpu.memory_space<vmem>>, vector<4x2048xf32>
    tpu.vector_store %arg7[%c32, %c0_22], %67 {strides = array<i32>} : memref<36x2048xf32, #tpu.memory_space<vmem>>, vector<4x2048xf32>,
    %c0_23 = arith.constant 0 : index
    %c0_24 = arith.constant 0 : index
    %69 = vector.load %arg2[%c0_23, %c0_24] : memref<4x36xf32, #tpu.memory_space<vmem>>, vector<4x36xf32>
    %c0_25 = arith.constant 0 : index
    %c0_26 = arith.constant 0 : index
    %70 = vector.load %arg7[%c0_25, %c0_26] : memref<36x2048xf32, #tpu.memory_space<vmem>>, vector<36x2048xf32>
    %cst_27 = arith.constant dense<0.000000e+00> : vector<4x2048xf32>
    %71 = tpu.matmul %69, %70, %cst_27 {dimension_numbers = #tpu.dot_dimension_numbers<[1], [0], [0], [1], [0, 0, 1, 1], [], []>} : vector<4x36xf32>, vector<36x2048xf32>, vector<4x2048xf32> -> vector<4x2048xf32>
    %c0_28 = arith.constant 0 : index
    %c0_29 = arith.constant 0 : index
    %72 = vector.load %arg3[%c0_28, %c0_29] : memref<4x1xf32, #tpu.memory_space<vmem>>, vector<4x1xf32>
    %73 = vector.broadcast %72 : vector<4x1xf32> to vector<4x2048xf32>
    %74 = arith.addf %71, %73 : vector<4x2048xf32>
    %cst_30 = arith.constant 5.000000e-01 : f32
    %75 = vector.broadcast %cst_30 : f32 to vector<4x2048xf32>
    %76 = arith.mulf %75, %74 : vector<4x2048xf32>
    %cst_31 = arith.constant 0.707106769 : f32
    %77 = vector.broadcast %cst_31 : f32 to vector<4x2048xf32>
    %78 = arith.mulf %74, %77 : vector<4x2048xf32>
    %79 = math.absf %78 : vector<4x2048xf32>
    %cst_32 = arith.constant 0.327591091 : f32
    %80 = vector.broadcast %cst_32 : f32 to vector<4x2048xf32>
    %81 = arith.mulf %80, %79 : vector<4x2048xf32>
    %cst_33 = arith.constant 1.000000e+00 : f32
    %82 = vector.broadcast %cst_33 : f32 to vector<4x2048xf32>
    %83 = arith.addf %82, %81 : vector<4x2048xf32>
    %84 = tpu.reciprocal %83 {approx = true} : vector<4x2048xf32> -> vector<4x2048xf32>
    %85 = arith.mulf %83, %84 : vector<4x2048xf32>
    %cst_34 = arith.constant 2.000000e+00 : f32
    %86 = vector.broadcast %cst_34 : f32 to vector<4x2048xf32>
    %87 = arith.subf %86, %85 : vector<4x2048xf32>
    %88 = arith.mulf %84, %87 : vector<4x2048xf32>
    %cst_35 = arith.constant 1.06140542 : f32
    %89 = vector.broadcast %cst_35 : f32 to vector<4x2048xf32>
    %90 = arith.mulf %88, %89 : vector<4x2048xf32>
    %cst_36 = arith.constant -1.45315206 : f32
    %91 = vector.broadcast %cst_36 : f32 to vector<4x2048xf32>
    %92 = arith.addf %91, %90 : vector<4x2048xf32>
    %93 = arith.mulf %88, %92 : vector<4x2048xf32>
    %cst_37 = arith.constant 1.42141378 : f32
    %94 = vector.broadcast %cst_37 : f32 to vector<4x2048xf32>
    %95 = arith.addf %94, %93 : vector<4x2048xf32>
    %96 = arith.mulf %88, %95 : vector<4x2048xf32>
    %cst_38 = arith.constant -0.284496725 : f32
    %97 = vector.broadcast %cst_38 : f32 to vector<4x2048xf32>
    %98 = arith.addf %97, %96 : vector<4x2048xf32>
    %99 = arith.mulf %88, %98 : vector<4x2048xf32>
    %cst_39 = arith.constant 0.254829586 : f32
    %100 = vector.broadcast %cst_39 : f32 to vector<4x2048xf32>
    %101 = arith.addf %100, %99 : vector<4x2048xf32>
    %102 = arith.mulf %88, %101 : vector<4x2048xf32>
    %cst_40 = arith.constant 0.000000e+00 : f32
    %103 = vector.broadcast %cst_40 : f32 to vector<4x2048xf32>
    %104 = arith.subf %103, %79 : vector<4x2048xf32>
    %105 = arith.mulf %104, %79 : vector<4x2048xf32>
    %106 = math.exp %105 : vector<4x2048xf32>
    %107 = arith.mulf %102, %106 : vector<4x2048xf32>
    %cst_41 = arith.constant 1.000000e+00 : f32
    %108 = vector.broadcast %cst_41 : f32 to vector<4x2048xf32>
    %109 = arith.subf %108, %107 : vector<4x2048xf32>
    %cst_42 = arith.constant 0.000000e+00 : f32
    %110 = vector.broadcast %cst_42 : f32 to vector<4x2048xf32>
    %111 = arith.cmpf olt, %78, %110 : vector<4x2048xf32>
    %cst_43 = arith.constant 0.000000e+00 : f32
    %112 = vector.broadcast %cst_43 : f32 to vector<4x2048xf32>
    %113 = arith.subf %112, %109 : vector<4x2048xf32>
    %114 = arith.select %111, %113, %109 : vector<4x2048xi1>, vector<4x2048xf32>
    %cst_44 = arith.constant 1.000000e+00 : f32
    %115 = vector.broadcast %cst_44 : f32 to vector<4x2048xf32>
    %116 = arith.addf %115, %114 : vector<4x2048xf32>
    %117 = arith.mulf %76, %116 : vector<4x2048xf32>
    %c33_i32_45 = arith.constant 33 : i32
    %118 = tpu.dynamic_rotate %117 by %c33_i32_45 dim 1 : vector<4x2048xf32>, i32 -> vector<4x2048xf32>
    %cst_46 = arith.constant 0.000000e+00 : f32
    %119 = vector.shape_cast %15 : vector<1x2048xi1> to vector<1x2048xi1>
    %120 = vector.broadcast %119 : vector<1x2048xi1> to vector<4x2048xi1>
    %121 = vector.broadcast %cst_46 : f32 to vector<4x2048xf32>
    %122 = arith.select %120, %118, %121 : vector<4x2048xi1>, vector<4x2048xf32>
    %c0_47 = arith.constant 0 : index
    %c0_48 = arith.constant 0 : index
    %123 = vector.load %arg7[%c0_47, %c0_48] : memref<36x2048xf32, #tpu.memory_space<vmem>>, vector<4x2048xf32>
    tpu.vector_store %arg7[%c0_47, %c0_48], %122 {strides = array<i32>} : memref<36x2048xf32, #tpu.memory_space<vmem>>, vector<4x2048xf32>,
    %c32_i32_49 = arith.constant 32 : i32
    %124 = tpu.dynamic_rotate %117 by %c32_i32_49 dim 1 : vector<4x2048xf32>, i32 -> vector<4x2048xf32>
    %cst_50 = arith.constant 0.000000e+00 : f32
    %125 = vector.shape_cast %8 : vector<1x2048xi1> to vector<1x2048xi1>
    %126 = vector.broadcast %125 : vector<1x2048xi1> to vector<4x2048xi1>
    %127 = vector.broadcast %cst_50 : f32 to vector<4x2048xf32>
    %128 = arith.select %126, %124, %127 : vector<4x2048xi1>, vector<4x2048xf32>
    %c4_51 = arith.constant 4 : index
    %c0_52 = arith.constant 0 : index
    %129 = vector.load %arg7[%c4_51, %c0_52] : memref<36x2048xf32, #tpu.memory_space<vmem>>, vector<4x2048xf32>
    tpu.vector_store %arg7[%c4_51, %c0_52], %128 {strides = array<i32>} : memref<36x2048xf32, #tpu.memory_space<vmem>>, vector<4x2048xf32>,
    %c31_i32_53 = arith.constant 31 : i32
    %130 = tpu.dynamic_rotate %117 by %c31_i32_53 dim 1 : vector<4x2048xf32>, i32 -> vector<4x2048xf32>
    %cst_54 = arith.constant 0.000000e+00 : f32
    %131 = vector.shape_cast %16 : vector<1x2048xi1> to vector<1x2048xi1>
    %132 = vector.broadcast %131 : vector<1x2048xi1> to vector<4x2048xi1>
    %133 = vector.broadcast %cst_54 : f32 to vector<4x2048xf32>
    %134 = arith.select %132, %130, %133 : vector<4x2048xi1>, vector<4x2048xf32>
    %c8_55 = arith.constant 8 : index
    %c0_56 = arith.constant 0 : index
    %135 = vector.load %arg7[%c8_55, %c0_56] : memref<36x2048xf32, #tpu.memory_space<vmem>>, vector<4x2048xf32>
    tpu.vector_store %arg7[%c8_55, %c0_56], %134 {strides = array<i32>} : memref<36x2048xf32, #tpu.memory_space<vmem>>, vector<4x2048xf32>,
    %c1_i32_57 = arith.constant 1 : i32
    %136 = tpu.dynamic_rotate %117 by %c1_i32_57 dim 1 : vector<4x2048xf32>, i32 -> vector<4x2048xf32>
    %cst_58 = arith.constant 0.000000e+00 : f32
    %137 = vector.shape_cast %12 : vector<1x2048xi1> to vector<1x2048xi1>
    %138 = vector.broadcast %137 : vector<1x2048xi1> to vector<4x2048xi1>
    %139 = vector.broadcast %cst_58 : f32 to vector<4x2048xf32>
    %140 = arith.select %138, %136, %139 : vector<4x2048xi1>, vector<4x2048xf32>
    %c12_59 = arith.constant 12 : index
    %c0_60 = arith.constant 0 : index
    %141 = vector.load %arg7[%c12_59, %c0_60] : memref<36x2048xf32, #tpu.memory_space<vmem>>, vector<4x2048xf32>
    tpu.vector_store %arg7[%c12_59, %c0_60], %140 {strides = array<i32>} : memref<36x2048xf32, #tpu.memory_space<vmem>>, vector<4x2048xf32>,
    %c16_61 = arith.constant 16 : index
    %c0_62 = arith.constant 0 : index
    %142 = vector.load %arg7[%c16_61, %c0_62] : memref<36x2048xf32, #tpu.memory_space<vmem>>, vector<4x2048xf32>
    tpu.vector_store %arg7[%c16_61, %c0_62], %117 {strides = array<i32>} : memref<36x2048xf32, #tpu.memory_space<vmem>>, vector<4x2048xf32>,
    %c2047_i32_63 = arith.constant 2047 : i32
    %143 = tpu.dynamic_rotate %117 by %c2047_i32_63 dim 1 : vector<4x2048xf32>, i32 -> vector<4x2048xf32>
    %cst_64 = arith.constant 0.000000e+00 : f32
    %144 = vector.shape_cast %14 : vector<1x2048xi1> to vector<1x2048xi1>
    %145 = vector.broadcast %144 : vector<1x2048xi1> to vector<4x2048xi1>
    %146 = vector.broadcast %cst_64 : f32 to vector<4x2048xf32>
    %147 = arith.select %145, %143, %146 : vector<4x2048xi1>, vector<4x2048xf32>
    %c20_65 = arith.constant 20 : index
    %c0_66 = arith.constant 0 : index
    %148 = vector.load %arg7[%c20_65, %c0_66] : memref<36x2048xf32, #tpu.memory_space<vmem>>, vector<4x2048xf32>
    tpu.vector_store %arg7[%c20_65, %c0_66], %147 {strides = array<i32>} : memref<36x2048xf32, #tpu.memory_space<vmem>>, vector<4x2048xf32>,
    %c2017_i32_67 = arith.constant 2017 : i32
    %149 = tpu.dynamic_rotate %117 by %c2017_i32_67 dim 1 : vector<4x2048xf32>, i32 -> vector<4x2048xf32>
    %cst_68 = arith.constant 0.000000e+00 : f32
    %150 = vector.shape_cast %17 : vector<1x2048xi1> to vector<1x2048xi1>
    %151 = vector.broadcast %150 : vector<1x2048xi1> to vector<4x2048xi1>
    %152 = vector.broadcast %cst_68 : f32 to vector<4x2048xf32>
    %153 = arith.select %151, %149, %152 : vector<4x2048xi1>, vector<4x2048xf32>
    %c24_69 = arith.constant 24 : index
    %c0_70 = arith.constant 0 : index
    %154 = vector.load %arg7[%c24_69, %c0_70] : memref<36x2048xf32, #tpu.memory_space<vmem>>, vector<4x2048xf32>
    tpu.vector_store %arg7[%c24_69, %c0_70], %153 {strides = array<i32>} : memref<36x2048xf32, #tpu.memory_space<vmem>>, vector<4x2048xf32>,
    %c2016_i32_71 = arith.constant 2016 : i32
    %155 = tpu.dynamic_rotate %117 by %c2016_i32_71 dim 1 : vector<4x2048xf32>, i32 -> vector<4x2048xf32>
    %cst_72 = arith.constant 0.000000e+00 : f32
    %156 = vector.shape_cast %10 : vector<1x2048xi1> to vector<1x2048xi1>
    %157 = vector.broadcast %156 : vector<1x2048xi1> to vector<4x2048xi1>
    %158 = vector.broadcast %cst_72 : f32 to vector<4x2048xf32>
    %159 = arith.select %157, %155, %158 : vector<4x2048xi1>, vector<4x2048xf32>
    %c28_73 = arith.constant 28 : index
    %c0_74 = arith.constant 0 : index
    %160 = vector.load %arg7[%c28_73, %c0_74] : memref<36x2048xf32, #tpu.memory_space<vmem>>, vector<4x2048xf32>
    tpu.vector_store %arg7[%c28_73, %c0_74], %159 {strides = array<i32>} : memref<36x2048xf32, #tpu.memory_space<vmem>>, vector<4x2048xf32>,
    %c2015_i32_75 = arith.constant 2015 : i32
    %161 = tpu.dynamic_rotate %117 by %c2015_i32_75 dim 1 : vector<4x2048xf32>, i32 -> vector<4x2048xf32>
    %cst_76 = arith.constant 0.000000e+00 : f32
    %162 = vector.shape_cast %18 : vector<1x2048xi1> to vector<1x2048xi1>
    %163 = vector.broadcast %162 : vector<1x2048xi1> to vector<4x2048xi1>
    %164 = vector.broadcast %cst_76 : f32 to vector<4x2048xf32>
    %165 = arith.select %163, %161, %164 : vector<4x2048xi1>, vector<4x2048xf32>
    %c32_77 = arith.constant 32 : index
    %c0_78 = arith.constant 0 : index
    %166 = vector.load %arg7[%c32_77, %c0_78] : memref<36x2048xf32, #tpu.memory_space<vmem>>, vector<4x2048xf32>
    tpu.vector_store %arg7[%c32_77, %c0_78], %165 {strides = array<i32>} : memref<36x2048xf32, #tpu.memory_space<vmem>>, vector<4x2048xf32>,
    %c0_79 = arith.constant 0 : index
    %c0_80 = arith.constant 0 : index
    %167 = vector.load %arg4[%c0_79, %c0_80] : memref<4x36xf32, #tpu.memory_space<vmem>>, vector<4x36xf32>
    %c0_81 = arith.constant 0 : index
    %c0_82 = arith.constant 0 : index
    %168 = vector.load %arg7[%c0_81, %c0_82] : memref<36x2048xf32, #tpu.memory_space<vmem>>, vector<36x2048xf32>
    %cst_83 = arith.constant dense<0.000000e+00> : vector<4x2048xf32>
    %169 = tpu.matmul %167, %168, %cst_83 {dimension_numbers = #tpu.dot_dimension_numbers<[1], [0], [0], [1], [0, 0, 1, 1], [], []>} : vector<4x36xf32>, vector<36x2048xf32>, vector<4x2048xf32> -> vector<4x2048xf32>
    %c0_84 = arith.constant 0 : index
    %c0_85 = arith.constant 0 : index
    %170 = vector.load %arg5[%c0_84, %c0_85] : memref<4x1xf32, #tpu.memory_space<vmem>>, vector<4x1xf32>
    %171 = vector.broadcast %170 : vector<4x1xf32> to vector<4x2048xf32>
    %172 = arith.addf %169, %171 : vector<4x2048xf32>
    %173 = vector.extract_strided_slice %172 {offsets = [0, 0], sizes = [4, 1024], strides = [1, 1]} : vector<4x2048xf32> to vector<4x1024xf32>
    %c0_86 = arith.constant 0 : index
    %c0_87 = arith.constant 0 : index
    %c0_88 = arith.constant 0 : index
    %174 = vector.load %arg6[%c0_86, %c0_87, %c0_88] : memref<2x4x1024xf32, #tpu.memory_space<vmem>>, vector<1x4x1024xf32>
    %175 = vector.shape_cast %174 : vector<1x4x1024xf32> to vector<4x1024xf32>
    %176 = vector.shape_cast %173 : vector<4x1024xf32> to vector<1x4x1024xf32>
    tpu.vector_store %arg6[%c0_86, %c0_87, %c0_88], %176 {strides = array<i32>} : memref<2x4x1024xf32, #tpu.memory_space<vmem>>, vector<1x4x1024xf32>,
    %177 = vector.extract_strided_slice %172 {offsets = [0, 1024], sizes = [4, 1024], strides = [1, 1]} : vector<4x2048xf32> to vector<4x1024xf32>
    %c1 = arith.constant 1 : index
    %c0_89 = arith.constant 0 : index
    %c0_90 = arith.constant 0 : index
    %178 = vector.load %arg6[%c1, %c0_89, %c0_90] : memref<2x4x1024xf32, #tpu.memory_space<vmem>>, vector<1x4x1024xf32>
    %179 = vector.shape_cast %178 : vector<1x4x1024xf32> to vector<4x1024xf32>
    %180 = vector.shape_cast %177 : vector<4x1024xf32> to vector<1x4x1024xf32>
    tpu.vector_store %arg6[%c1, %c0_89, %c0_90], %180 {strides = array<i32>} : memref<2x4x1024xf32, #tpu.memory_space<vmem>>, vector<1x4x1024xf32>,
    return
  }
  func.func @transform_0(%arg0: i32) -> (i32, i32) {
    %c0_i32 = arith.constant 0 : i32
    %c0_i32_0 = arith.constant 0 : i32
    return %c0_i32, %arg0 : i32, i32
  }
  func.func @transform_1(%arg0: i32) -> (i32, i32) {
    %c0_i32 = arith.constant 0 : i32
    %c0_i32_0 = arith.constant 0 : i32
    %c0_i32_1 = arith.constant 0 : i32
    return %c0_i32, %c0_i32_0 : i32, i32
  }
  func.func @transform_2(%arg0: i32) -> (i32, i32) {
    %c0_i32 = arith.constant 0 : i32
    %c0_i32_0 = arith.constant 0 : i32
    %c0_i32_1 = arith.constant 0 : i32
    return %c0_i32, %c0_i32_0 : i32, i32
  }
  func.func @transform_3(%arg0: i32) -> (i32, i32) {
    %c0_i32 = arith.constant 0 : i32
    %c0_i32_0 = arith.constant 0 : i32
    %c0_i32_1 = arith.constant 0 : i32
    return %c0_i32, %c0_i32_0 : i32, i32
  }
  func.func @transform_4(%arg0: i32) -> (i32, i32) {
    %c0_i32 = arith.constant 0 : i32
    %c0_i32_0 = arith.constant 0 : i32
    %c0_i32_1 = arith.constant 0 : i32
    return %c0_i32, %c0_i32_0 : i32, i32
  }
  func.func @transform_5(%arg0: i32) -> (i32, i32, i32) {
    %c0_i32 = arith.constant 0 : i32
    %c0_i32_0 = arith.constant 0 : i32
    %c0_i32_1 = arith.constant 0 : i32
    return %arg0, %c0_i32, %c0_i32_0 : i32, i32, i32
  }
}

</mosaic_0001>

<llo_original>
// kernel: nearest_conv_upsampler.1
$region0: #{nearest_conv_upsampler.1}
  #allocation0 [shape = 'u32[]', space=smem, size = 0x4, offset = 0x4, fixed_abs, tag = 'smem constant byte address 0x4 - core index']
  #allocation1 [shape = 'u32[144,128]{1,0:T(1,128)}', space=vmem, size = 0x12000, scoped, tag = 'internal scratch']
  #allocation2 [shape = 'f32[36,2048]{1,0:T(8,128)}', space=vmem, size = 0x50000, scoped, tag = 'scratch operand']
  %s0 = inlined_call_operand.vmem [shape: f32[4,2048], index: 0, kind: input, shape index: {}]
  %s1 = inlined_call_operand.vmem [shape: f32[4,36], index: 1, kind: input, shape index: {}]
  %s2 = inlined_call_operand.vmem [shape: f32[4,1], index: 2, kind: input, shape index: {}]
  %s3 = inlined_call_operand.vmem [shape: f32[4,36], index: 3, kind: input, shape index: {}]
  %s4 = inlined_call_operand.vmem [shape: f32[4,1], index: 4, kind: input, shape index: {}]
  %s5 = inlined_call_operand.vmem [shape: f32[2,4,1024], index: 5, kind: output, shape index: {}]
  %s6 = sld [smem:[#allocation0]]
  $region30: #{nearest_conv_upsampler.1} parent=0
    _
  %s8 = ssub.s32 1, %s6
  %s9 = scalar_select 0, %s8, %s6
  // Predicated region
  $region2: #{nearest_conv_upsampler.1} parent=0 // pred_check
    _
  $region3: #{nearest_conv_upsampler.1} parent=0 // pred_check_branch
    %11 = sbr.rel (0) target = $region5
  $region4: #{nearest_conv_upsampler.1} parent=0 // pred_region
    _
  $region5: #{nearest_conv_upsampler.1} parent=0 // pred_fallthru
    _
  // Predicated region
  $region6: #{nearest_conv_upsampler.1} parent=0 // pred_check
    _
  $region7: #{nearest_conv_upsampler.1} parent=0 // pred_check_branch
    %13 = sbr.rel (0) target = $region9
  $region8: #{nearest_conv_upsampler.1} parent=0 // pred_region
    _
  $region9: #{nearest_conv_upsampler.1} parent=0 // pred_fallthru
    _
  // Predicated region
  $region10: #{nearest_conv_upsampler.1} parent=0 // pred_check
    _
  $region11: #{nearest_conv_upsampler.1} parent=0 // pred_check_branch
    %15 = sbr.rel (0) target = $region13
  $region12: #{nearest_conv_upsampler.1} parent=0 // pred_region
    _
  $region13: #{nearest_conv_upsampler.1} parent=0 // pred_fallthru
    _
  // Predicated region
  $region14: #{nearest_conv_upsampler.1} parent=0 // pred_check
    _
  $region15: #{nearest_conv_upsampler.1} parent=0 // pred_check_branch
    %17 = sbr.rel (0) target = $region17
  $region16: #{nearest_conv_upsampler.1} parent=0 // pred_region
    _
  $region17: #{nearest_conv_upsampler.1} parent=0 // pred_fallthru
    _
  // Predicated region
  $region18: #{nearest_conv_upsampler.1} parent=0 // pred_check
    _
  $region19: #{nearest_conv_upsampler.1} parent=0 // pred_check_branch
    %19 = sbr.rel (0) target = $region21
  $region20: #{nearest_conv_upsampler.1} parent=0 // pred_region
    _
  $region21: #{nearest_conv_upsampler.1} parent=0 // pred_fallthru
    _
  %v20 = vlaneseq
  %v21 = vand.u32 %v20, 127
  %v22 = vadd.s32 %v21, 128
  %v23 = vadd.s32 %v21, 256
  %v24 = vadd.s32 %v21, 384
  %v25 = vadd.s32 %v21, 512
  %v26 = vadd.s32 %v21, 640
  %v27 = vadd.s32 %v21, 768
  %v28 = vadd.s32 %v21, 896
  %v29 = vadd.s32 %v21, 1024
  %v30 = vadd.s32 %v21, 1152
  %v31 = vadd.s32 %v21, 1280
  %v32 = vadd.s32 %v21, 1408
  %v33 = vadd.s32 %v21, 1536
  %v34 = vadd.s32 %v21, 1664
  %v35 = vadd.s32 %v21, 1792
  %v36 = vadd.s32 %v21, 1920
  %v37 = vand.u32 %v21, 1023
  %v38 = vand.u32 %v22, 1023
  %v39 = vand.u32 %v23, 1023
  %v40 = vand.u32 %v24, 1023
  %v41 = vand.u32 %v25, 1023
  %v42 = vand.u32 %v26, 1023
  %v43 = vand.u32 %v27, 1023
  %v44 = vand.u32 %v28, 1023
  %v45 = vand.u32 %v29, 1023
  %v46 = vand.u32 %v30, 1023
  %v47 = vand.u32 %v31, 1023
  %v48 = vand.u32 %v32, 1023
  %v49 = vand.u32 %v33, 1023
  %v50 = vand.u32 %v34, 1023
  %v51 = vand.u32 %v35, 1023
  %v52 = vand.u32 %v36, 1023
  %v53 = vand.u32 %v21, 31
  %v54 = vand.u32 %v22, 31
  %v55 = vand.u32 %v23, 31
  %v56 = vand.u32 %v24, 31
  %v57 = vand.u32 %v25, 31
  %v58 = vand.u32 %v26, 31
  %v59 = vand.u32 %v27, 31
  %v60 = vand.u32 %v28, 31
  %v61 = vand.u32 %v29, 31
  %v62 = vand.u32 %v30, 31
  %v63 = vand.u32 %v31, 31
  %v64 = vand.u32 %v32, 31
  %v65 = vand.u32 %v33, 31
  %v66 = vand.u32 %v34, 31
  %v67 = vand.u32 %v35, 31
  %v68 = vand.u32 %v36, 31
  %v69 = vshra.s32 %v37, 5
  %v70 = vshra.s32 %v38, 5
  %v71 = vshra.s32 %v39, 5
  %v72 = vshra.s32 %v40, 5
  %v73 = vshra.s32 %v41, 5
  %v74 = vshra.s32 %v42, 5
  %v75 = vshra.s32 %v43, 5
  %v76 = vshra.s32 %v44, 5
  %v77 = vshra.s32 %v45, 5
  %v78 = vshra.s32 %v46, 5
  %v79 = vshra.s32 %v47, 5
  %v80 = vshra.s32 %v48, 5
  %v81 = vshra.s32 %v49, 5
  %v82 = vshra.s32 %v50, 5
  %v83 = vshra.s32 %v51, 5
  %v84 = vshra.s32 %v52, 5
  %vm85 = vcmp.ge.s32.totalorder %v69, 1
  %vm86 = vcmp.ge.s32.totalorder %v70, 1
  %vm87 = vcmp.ge.s32.totalorder %v71, 1
  %vm88 = vcmp.ge.s32.totalorder %v72, 1
  %vm89 = vcmp.ge.s32.totalorder %v73, 1
  %vm90 = vcmp.ge.s32.totalorder %v74, 1
  %vm91 = vcmp.ge.s32.totalorder %v75, 1
  %vm92 = vcmp.ge.s32.totalorder %v76, 1
  %vm93 = vcmp.ge.s32.totalorder %v77, 1
  %vm94 = vcmp.ge.s32.totalorder %v78, 1
  %vm95 = vcmp.ge.s32.totalorder %v79, 1
  %vm96 = vcmp.ge.s32.totalorder %v80, 1
  %vm97 = vcmp.ge.s32.totalorder %v81, 1
  %vm98 = vcmp.ge.s32.totalorder %v82, 1
  %vm99 = vcmp.ge.s32.totalorder %v83, 1
  %vm100 = vcmp.ge.s32.totalorder %v84, 1
  %vm101 = vcmp.lt.s32.totalorder %v69, 31
  %vm102 = vcmp.lt.s32.totalorder %v70, 31
  %vm103 = vcmp.lt.s32.totalorder %v71, 31
  %vm104 = vcmp.lt.s32.totalorder %v72, 31
  %vm105 = vcmp.lt.s32.totalorder %v73, 31
  %vm106 = vcmp.lt.s32.totalorder %v74, 31
  %vm107 = vcmp.lt.s32.totalorder %v75, 31
  %vm108 = vcmp.lt.s32.totalorder %v76, 31
  %vm109 = vcmp.lt.s32.totalorder %v77, 31
  %vm110 = vcmp.lt.s32.totalorder %v78, 31
  %vm111 = vcmp.lt.s32.totalorder %v79, 31
  %vm112 = vcmp.lt.s32.totalorder %v80, 31
  %vm113 = vcmp.lt.s32.totalorder %v81, 31
  %vm114 = vcmp.lt.s32.totalorder %v82, 31
  %vm115 = vcmp.lt.s32.totalorder %v83, 31
  %vm116 = vcmp.lt.s32.totalorder %v84, 31
  %vm117 = vcmp.ge.s32.totalorder %v53, 1
  %vm118 = vcmp.ge.s32.totalorder %v54, 1
  %vm119 = vcmp.ge.s32.totalorder %v55, 1
  %vm120 = vcmp.ge.s32.totalorder %v56, 1
  %vm121 = vcmp.ge.s32.totalorder %v57, 1
  %vm122 = vcmp.ge.s32.totalorder %v58, 1
  %vm123 = vcmp.ge.s32.totalorder %v59, 1
  %vm124 = vcmp.ge.s32.totalorder %v60, 1
  %vm125 = vcmp.ge.s32.totalorder %v61, 1
  %vm126 = vcmp.ge.s32.totalorder %v62, 1
  %vm127 = vcmp.ge.s32.totalorder %v63, 1
  %vm128 = vcmp.ge.s32.totalorder %v64, 1
  %vm129 = vcmp.ge.s32.totalorder %v65, 1
  %vm130 = vcmp.ge.s32.totalorder %v66, 1
  %vm131 = vcmp.ge.s32.totalorder %v67, 1
  %vm132 = vcmp.ge.s32.totalorder %v68, 1
  %vm133 = vcmp.lt.s32.totalorder %v53, 31
  %vm134 = vcmp.lt.s32.totalorder %v54, 31
  %vm135 = vcmp.lt.s32.totalorder %v55, 31
  %vm136 = vcmp.lt.s32.totalorder %v56, 31
  %vm137 = vcmp.lt.s32.totalorder %v57, 31
  %vm138 = vcmp.lt.s32.totalorder %v58, 31
  %vm139 = vcmp.lt.s32.totalorder %v59, 31
  %vm140 = vcmp.lt.s32.totalorder %v60, 31
  %vm141 = vcmp.lt.s32.totalorder %v61, 31
  %vm142 = vcmp.lt.s32.totalorder %v62, 31
  %vm143 = vcmp.lt.s32.totalorder %v63, 31
  %vm144 = vcmp.lt.s32.totalorder %v64, 31
  %vm145 = vcmp.lt.s32.totalorder %v65, 31
  %vm146 = vcmp.lt.s32.totalorder %v66, 31
  %vm147 = vcmp.lt.s32.totalorder %v67, 31
  %vm148 = vcmp.lt.s32.totalorder %v68, 31
  %vm149 = vmand %vm85, %vm117
  %vm150 = vmand %vm86, %vm118
  %vm151 = vmand %vm87, %vm119
  %vm152 = vmand %vm88, %vm120
  %vm153 = vmand %vm89, %vm121
  %vm154 = vmand %vm90, %vm122
  %vm155 = vmand %vm91, %vm123
  %vm156 = vmand %vm92, %vm124
  %vm157 = vmand %vm93, %vm125
  %vm158 = vmand %vm94, %vm126
  %vm159 = vmand %vm95, %vm127
  %vm160 = vmand %vm96, %vm128
  %vm161 = vmand %vm97, %vm129
  %vm162 = vmand %vm98, %vm130
  %vm163 = vmand %vm99, %vm131
  %vm164 = vmand %vm100, %vm132
  %vm165 = vmand %vm85, %vm133
  %vm166 = vmand %vm86, %vm134
  %vm167 = vmand %vm87, %vm135
  %vm168 = vmand %vm88, %vm136
  %vm169 = vmand %vm89, %vm137
  %vm170 = vmand %vm90, %vm138
  %vm171 = vmand %vm91, %vm139
  %vm172 = vmand %vm92, %vm140
  %vm173 = vmand %vm93, %vm141
  %vm174 = vmand %vm94, %vm142
  %vm175 = vmand %vm95, %vm143
  %vm176 = vmand %vm96, %vm144
  %vm177 = vmand %vm97, %vm145
  %vm178 = vmand %vm98, %vm146
  %vm179 = vmand %vm99, %vm147
  %vm180 = vmand %vm100, %vm148
  %vm181 = vmand %vm101, %vm117
  %vm182 = vmand %vm102, %vm118
  %vm183 = vmand %vm103, %vm119
  %vm184 = vmand %vm104, %vm120
  %vm185 = vmand %vm105, %vm121
  %vm186 = vmand %vm106, %vm122
  %vm187 = vmand %vm107, %vm123
  %vm188 = vmand %vm108, %vm124
  %vm189 = vmand %vm109, %vm125
  %vm190 = vmand %vm110, %vm126
  %vm191 = vmand %vm111, %vm127
  %vm192 = vmand %vm112, %vm128
  %vm193 = vmand %vm113, %vm129
  %vm194 = vmand %vm114, %vm130
  %vm195 = vmand %vm115, %vm131
  %vm196 = vmand %vm116, %vm132
  %vm197 = vmand %vm101, %vm133
  %vm198 = vmand %vm102, %vm134
  %vm199 = vmand %vm103, %vm135
  %vm200 = vmand %vm104, %vm136
  %vm201 = vmand %vm105, %vm137
  %vm202 = vmand %vm106, %vm138
  %vm203 = vmand %vm107, %vm139
  %vm204 = vmand %vm108, %vm140
  %vm205 = vmand %vm109, %vm141
  %vm206 = vmand %vm110, %vm142
  %vm207 = vmand %vm111, %vm143
  %vm208 = vmand %vm112, %vm144
  %vm209 = vmand %vm113, %vm145
  %vm210 = vmand %vm114, %vm146
  %vm211 = vmand %vm115, %vm147
  %vm212 = vmand %vm116, %vm148
  %v213 = vld [vmem:[%s0] sm:$0xff]
  %v214 = vld [vmem:[%s0 + $0x8] sm:$0xff]
  %v215 = vld [vmem:[%s0 + $0x10] sm:$0xff]
  %v216 = vld [vmem:[%s0 + $0x18] sm:$0xff]
  %v217 = vld [vmem:[%s0 + $0x20] sm:$0xff]
  %v218 = vld [vmem:[%s0 + $0x28] sm:$0xff]
  %v219 = vld [vmem:[%s0 + $0x30] sm:$0xff]
  %v220 = vld [vmem:[%s0 + $0x38] sm:$0xff]
  %v229 = vcombine.high %v213, %v213
  %v230 = vcombine.high %v214, %v214
  %v231 = vcombine.high %v215, %v215
  %v232 = vcombine.high %v216, %v216
  %v233 = vcombine.high %v217, %v217
  %v234 = vcombine.high %v218, %v218
  %v235 = vcombine.high %v219, %v219
  %v236 = vcombine.high %v220, %v220
  %245 = vrot.lane.b32.xlu0 %v213, 33
  %v246 = vpop.permute.xlu0 %245
  %247 = vrot.lane.b32.xlu0 %v229, 33
  %v248 = vpop.permute.xlu0 %247
  %249 = vrot.lane.b32.xlu0 %v214, 33
  %v250 = vpop.permute.xlu0 %249
  %251 = vrot.lane.b32.xlu0 %v230, 33
  %v252 = vpop.permute.xlu0 %251
  %253 = vrot.lane.b32.xlu0 %v215, 33
  %v254 = vpop.permute.xlu0 %253
  %255 = vrot.lane.b32.xlu0 %v231, 33
  %v256 = vpop.permute.xlu0 %255
  %257 = vrot.lane.b32.xlu0 %v216, 33
  %v258 = vpop.permute.xlu0 %257
  %259 = vrot.lane.b32.xlu0 %v232, 33
  %v260 = vpop.permute.xlu0 %259
  %261 = vrot.lane.b32.xlu0 %v217, 33
  %v262 = vpop.permute.xlu0 %261
  %263 = vrot.lane.b32.xlu0 %v233, 33
  %v264 = vpop.permute.xlu0 %263
  %265 = vrot.lane.b32.xlu0 %v218, 33
  %v266 = vpop.permute.xlu0 %265
  %267 = vrot.lane.b32.xlu0 %v234, 33
  %v268 = vpop.permute.xlu0 %267
  %269 = vrot.lane.b32.xlu0 %v219, 33
  %v270 = vpop.permute.xlu0 %269
  %271 = vrot.lane.b32.xlu0 %v235, 33
  %v272 = vpop.permute.xlu0 %271
  %273 = vrot.lane.b32.xlu0 %v220, 33
  %v274 = vpop.permute.xlu0 %273
  %275 = vrot.lane.b32.xlu0 %v236, 33
  %v276 = vpop.permute.xlu0 %275
  %vm277 = vcmp.lt.s32.totalorder %v21, 33
  %v278 = vsel %vm277, %v274, %v276
  %v279 = vsel %vm277, %v272, %v274
  %v280 = vsel %vm277, %v270, %v272
  %v281 = vsel %vm277, %v268, %v270
  %v282 = vsel %vm277, %v266, %v268
  %v283 = vsel %vm277, %v264, %v266
  %v284 = vsel %vm277, %v262, %v264
  %v285 = vsel %vm277, %v260, %v262
  %v286 = vsel %vm277, %v258, %v260
  %v287 = vsel %vm277, %v256, %v258
  %v288 = vsel %vm277, %v254, %v256
  %v289 = vsel %vm277, %v252, %v254
  %v290 = vsel %vm277, %v250, %v252
  %v291 = vsel %vm277, %v248, %v250
  %v292 = vsel %vm277, %v246, %v248
  %v293 = vsel %vm277, %v276, %v246
  %v294 = vsel %vm149, 1, 0
  %v295 = vsel %vm150, 1, 0
  %v296 = vsel %vm151, 1, 0
  %v297 = vsel %vm152, 1, 0
  %v298 = vsel %vm153, 1, 0
  %v299 = vsel %vm154, 1, 0
  %v300 = vsel %vm155, 1, 0
  %v301 = vsel %vm156, 1, 0
  %v302 = vsel %vm157, 1, 0
  %v303 = vsel %vm158, 1, 0
  %v304 = vsel %vm159, 1, 0
  %v305 = vsel %vm160, 1, 0
  %v306 = vsel %vm161, 1, 0
  %v307 = vsel %vm162, 1, 0
  %v308 = vsel %vm163, 1, 0
  %v309 = vsel %vm164, 1, 0
  %vm310 = vcmp.eq.s32.totalorder %v294, 1
  %vm311 = vcmp.eq.s32.totalorder %v295, 1
  %vm312 = vcmp.eq.s32.totalorder %v296, 1
  %vm313 = vcmp.eq.s32.totalorder %v297, 1
  %vm314 = vcmp.eq.s32.totalorder %v298, 1
  %vm315 = vcmp.eq.s32.totalorder %v299, 1
  %vm316 = vcmp.eq.s32.totalorder %v300, 1
  %vm317 = vcmp.eq.s32.totalorder %v301, 1
  %vm318 = vcmp.eq.s32.totalorder %v302, 1
  %vm319 = vcmp.eq.s32.totalorder %v303, 1
  %vm320 = vcmp.eq.s32.totalorder %v304, 1
  %vm321 = vcmp.eq.s32.totalorder %v305, 1
  %vm322 = vcmp.eq.s32.totalorder %v306, 1
  %vm323 = vcmp.eq.s32.totalorder %v307, 1
  %vm324 = vcmp.eq.s32.totalorder %v308, 1
  %vm325 = vcmp.eq.s32.totalorder %v309, 1
  %v326 = vsel %vm310, %v293, 0.0
  %v327 = vsel %vm311, %v292, 0.0
  %v328 = vsel %vm312, %v291, 0.0
  %v329 = vsel %vm313, %v290, 0.0
  %v330 = vsel %vm314, %v289, 0.0
  %v331 = vsel %vm315, %v288, 0.0
  %v332 = vsel %vm316, %v287, 0.0
  %v333 = vsel %vm317, %v286, 0.0
  %v334 = vsel %vm318, %v285, 0.0
  %v335 = vsel %vm319, %v284, 0.0
  %v336 = vsel %vm320, %v283, 0.0
  %v337 = vsel %vm321, %v282, 0.0
  %v338 = vsel %vm322, %v281, 0.0
  %v339 = vsel %vm323, %v280, 0.0
  %v340 = vsel %vm324, %v279, 0.0
  %v341 = vsel %vm325, %v278, 0.0
  %342 = vst [vmem:[#allocation2] sm:$0xf] %v326
  %343 = vst [vmem:[#allocation2 + $0x8] sm:$0xf] %v327
  %344 = vst [vmem:[#allocation2 + $0x10] sm:$0xf] %v328
  %345 = vst [vmem:[#allocation2 + $0x18] sm:$0xf] %v329
  %346 = vst [vmem:[#allocation2 + $0x20] sm:$0xf] %v330
  %347 = vst [vmem:[#allocation2 + $0x28] sm:$0xf] %v331
  %348 = vst [vmem:[#allocation2 + $0x30] sm:$0xf] %v332
  %349 = vst [vmem:[#allocation2 + $0x38] sm:$0xf] %v333
  %350 = vst [vmem:[#allocation2 + $0x40] sm:$0xf] %v334
  %351 = vst [vmem:[#allocation2 + $0x48] sm:$0xf] %v335
  %352 = vst [vmem:[#allocation2 + $0x50] sm:$0xf] %v336
  %353 = vst [vmem:[#allocation2 + $0x58] sm:$0xf] %v337
  %354 = vst [vmem:[#allocation2 + $0x60] sm:$0xf] %v338
  %355 = vst [vmem:[#allocation2 + $0x68] sm:$0xf] %v339
  %356 = vst [vmem:[#allocation2 + $0x70] sm:$0xf] %v340
  %357 = vst [vmem:[#allocation2 + $0x78] sm:$0xf] %v341
  %358 = vrot.lane.b32.xlu0 %v213, 32
  %v359 = vpop.permute.xlu0 %358
  %360 = vrot.lane.b32.xlu0 %v229, 32
  %v361 = vpop.permute.xlu0 %360
  %362 = vrot.lane.b32.xlu0 %v214, 32
  %v363 = vpop.permute.xlu0 %362
  %364 = vrot.lane.b32.xlu0 %v230, 32
  %v365 = vpop.permute.xlu0 %364
  %366 = vrot.lane.b32.xlu0 %v215, 32
  %v367 = vpop.permute.xlu0 %366
  %368 = vrot.lane.b32.xlu0 %v231, 32
  %v369 = vpop.permute.xlu0 %368
  %370 = vrot.lane.b32.xlu0 %v216, 32
  %v371 = vpop.permute.xlu0 %370
  %372 = vrot.lane.b32.xlu0 %v232, 32
  %v373 = vpop.permute.xlu0 %372
  %374 = vrot.lane.b32.xlu0 %v217, 32
  %v375 = vpop.permute.xlu0 %374
  %376 = vrot.lane.b32.xlu0 %v233, 32
  %v377 = vpop.permute.xlu0 %376
  %378 = vrot.lane.b32.xlu0 %v218, 32
  %v379 = vpop.permute.xlu0 %378
  %380 = vrot.lane.b32.xlu0 %v234, 32
  %v381 = vpop.permute.xlu0 %380
  %382 = vrot.lane.b32.xlu0 %v219, 32
  %v383 = vpop.permute.xlu0 %382
  %384 = vrot.lane.b32.xlu0 %v235, 32
  %v385 = vpop.permute.xlu0 %384
  %386 = vrot.lane.b32.xlu0 %v220, 32
  %v387 = vpop.permute.xlu0 %386
  %388 = vrot.lane.b32.xlu0 %v236, 32
  %v389 = vpop.permute.xlu0 %388
  %vm390 = vcmp.lt.s32.totalorder %v21, 32
  %v391 = vsel %vm390, %v387, %v389
  %v392 = vsel %vm390, %v385, %v387
  %v393 = vsel %vm390, %v383, %v385
  %v394 = vsel %vm390, %v381, %v383
  %v395 = vsel %vm390, %v379, %v381
  %v396 = vsel %vm390, %v377, %v379
  %v397 = vsel %vm390, %v375, %v377
  %v398 = vsel %vm390, %v373, %v375
  %v399 = vsel %vm390, %v371, %v373
  %v400 = vsel %vm390, %v369, %v371
  %v401 = vsel %vm390, %v367, %v369
  %v402 = vsel %vm390, %v365, %v367
  %v403 = vsel %vm390, %v363, %v365
  %v404 = vsel %vm390, %v361, %v363
  %v405 = vsel %vm390, %v359, %v361
  %v406 = vsel %vm390, %v389, %v359
  %v407 = vsel %vm85, 1, 0
  %v408 = vsel %vm86, 1, 0
  %v409 = vsel %vm87, 1, 0
  %v410 = vsel %vm88, 1, 0
  %v411 = vsel %vm89, 1, 0
  %v412 = vsel %vm90, 1, 0
  %v413 = vsel %vm91, 1, 0
  %v414 = vsel %vm92, 1, 0
  %v415 = vsel %vm93, 1, 0
  %v416 = vsel %vm94, 1, 0
  %v417 = vsel %vm95, 1, 0
  %v418 = vsel %vm96, 1, 0
  %v419 = vsel %vm97, 1, 0
  %v420 = vsel %vm98, 1, 0
  %v421 = vsel %vm99, 1, 0
  %v422 = vsel %vm100, 1, 0
  %vm423 = vcmp.eq.s32.totalorder %v407, 1
  %vm424 = vcmp.eq.s32.totalorder %v408, 1
  %vm425 = vcmp.eq.s32.totalorder %v409, 1
  %vm426 = vcmp.eq.s32.totalorder %v410, 1
  %vm427 = vcmp.eq.s32.totalorder %v411, 1
  %vm428 = vcmp.eq.s32.totalorder %v412, 1
  %vm429 = vcmp.eq.s32.totalorder %v413, 1
  %vm430 = vcmp.eq.s32.totalorder %v414, 1
  %vm431 = vcmp.eq.s32.totalorder %v415, 1
  %vm432 = vcmp.eq.s32.totalorder %v416, 1
  %vm433 = vcmp.eq.s32.totalorder %v417, 1
  %vm434 = vcmp.eq.s32.totalorder %v418, 1
  %vm435 = vcmp.eq.s32.totalorder %v419, 1
  %vm436 = vcmp.eq.s32.totalorder %v420, 1
  %vm437 = vcmp.eq.s32.totalorder %v421, 1
  %vm438 = vcmp.eq.s32.totalorder %v422, 1
  %v439 = vsel %vm423, %v406, 0.0
  %v440 = vsel %vm424, %v405, 0.0
  %v441 = vsel %vm425, %v404, 0.0
  %v442 = vsel %vm426, %v403, 0.0
  %v443 = vsel %vm427, %v402, 0.0
  %v444 = vsel %vm428, %v401, 0.0
  %v445 = vsel %vm429, %v400, 0.0
  %v446 = vsel %vm430, %v399, 0.0
  %v447 = vsel %vm431, %v398, 0.0
  %v448 = vsel %vm432, %v397, 0.0
  %v449 = vsel %vm433, %v396, 0.0
  %v450 = vsel %vm434, %v395, 0.0
  %v451 = vsel %vm435, %v394, 0.0
  %v452 = vsel %vm436, %v393, 0.0
  %v453 = vsel %vm437, %v392, 0.0
  %v454 = vsel %vm438, %v391, 0.0
  %v471 = vrot.slane %v439, 4
  %v472 = vrot.slane %v440, 4
  %v473 = vrot.slane %v441, 4
  %v474 = vrot.slane %v442, 4
  %v475 = vrot.slane %v443, 4
  %v476 = vrot.slane %v444, 4
  %v477 = vrot.slane %v445, 4
  %v478 = vrot.slane %v446, 4
  %v479 = vrot.slane %v447, 4
  %v480 = vrot.slane %v448, 4
  %v481 = vrot.slane %v449, 4
  %v482 = vrot.slane %v450, 4
  %v483 = vrot.slane %v451, 4
  %v484 = vrot.slane %v452, 4
  %v485 = vrot.slane %v453, 4
  %v486 = vrot.slane %v454, 4
  %503 = vst [vmem:[#allocation2] sm:$0xf0] %v471
  %504 = vst [vmem:[#allocation2 + $0x8] sm:$0xf0] %v472
  %505 = vst [vmem:[#allocation2 + $0x10] sm:$0xf0] %v473
  %506 = vst [vmem:[#allocation2 + $0x18] sm:$0xf0] %v474
  %507 = vst [vmem:[#allocation2 + $0x20] sm:$0xf0] %v475
  %508 = vst [vmem:[#allocation2 + $0x28] sm:$0xf0] %v476
  %509 = vst [vmem:[#allocation2 + $0x30] sm:$0xf0] %v477
  %510 = vst [vmem:[#allocation2 + $0x38] sm:$0xf0] %v478
  %511 = vst [vmem:[#allocation2 + $0x40] sm:$0xf0] %v479
  %512 = vst [vmem:[#allocation2 + $0x48] sm:$0xf0] %v480
  %513 = vst [vmem:[#allocation2 + $0x50] sm:$0xf0] %v481
  %514 = vst [vmem:[#allocation2 + $0x58] sm:$0xf0] %v482
  %515 = vst [vmem:[#allocation2 + $0x60] sm:$0xf0] %v483
  %516 = vst [vmem:[#allocation2 + $0x68] sm:$0xf0] %v484
  %517 = vst [vmem:[#allocation2 + $0x70] sm:$0xf0] %v485
  %518 = vst [vmem:[#allocation2 + $0x78] sm:$0xf0] %v486
  %519 = vrot.lane.b32.xlu0 %v213, 31
  %v520 = vpop.permute.xlu0 %519
  %521 = vrot.lane.b32.xlu0 %v229, 31
  %v522 = vpop.permute.xlu0 %521
  %523 = vrot.lane.b32.xlu0 %v214, 31
  %v524 = vpop.permute.xlu0 %523
  %525 = vrot.lane.b32.xlu0 %v230, 31
  %v526 = vpop.permute.xlu0 %525
  %527 = vrot.lane.b32.xlu0 %v215, 31
  %v528 = vpop.permute.xlu0 %527
  %529 = vrot.lane.b32.xlu0 %v231, 31
  %v530 = vpop.permute.xlu0 %529
  %531 = vrot.lane.b32.xlu0 %v216, 31
  %v532 = vpop.permute.xlu0 %531
  %533 = vrot.lane.b32.xlu0 %v232, 31
  %v534 = vpop.permute.xlu0 %533
  %535 = vrot.lane.b32.xlu0 %v217, 31
  %v536 = vpop.permute.xlu0 %535
  %537 = vrot.lane.b32.xlu0 %v233, 31
  %v538 = vpop.permute.xlu0 %537
  %539 = vrot.lane.b32.xlu0 %v218, 31
  %v540 = vpop.permute.xlu0 %539
  %541 = vrot.lane.b32.xlu0 %v234, 31
  %v542 = vpop.permute.xlu0 %541
  %543 = vrot.lane.b32.xlu0 %v219, 31
  %v544 = vpop.permute.xlu0 %543
  %545 = vrot.lane.b32.xlu0 %v235, 31
  %v546 = vpop.permute.xlu0 %545
  %547 = vrot.lane.b32.xlu0 %v220, 31
  %v548 = vpop.permute.xlu0 %547
  %549 = vrot.lane.b32.xlu0 %v236, 31
  %v550 = vpop.permute.xlu0 %549
  %vm551 = vcmp.lt.s32.totalorder %v21, 31
  %v552 = vsel %vm551, %v548, %v550
  %v553 = vsel %vm551, %v546, %v548
  %v554 = vsel %vm551, %v544, %v546
  %v555 = vsel %vm551, %v542, %v544
  %v556 = vsel %vm551, %v540, %v542
  %v557 = vsel %vm551, %v538, %v540
  %v558 = vsel %vm551, %v536, %v538
  %v559 = vsel %vm551, %v534, %v536
  %v560 = vsel %vm551, %v532, %v534
  %v561 = vsel %vm551, %v530, %v532
  %v562 = vsel %vm551, %v528, %v530
  %v563 = vsel %vm551, %v526, %v528
  %v564 = vsel %vm551, %v524, %v526
  %v565 = vsel %vm551, %v522, %v524
  %v566 = vsel %vm551, %v520, %v522
  %v567 = vsel %vm551, %v550, %v520
  %v568 = vsel %vm165, 1, 0
  %v569 = vsel %vm166, 1, 0
  %v570 = vsel %vm167, 1, 0
  %v571 = vsel %vm168, 1, 0
  %v572 = vsel %vm169, 1, 0
  %v573 = vsel %vm170, 1, 0
  %v574 = vsel %vm171, 1, 0
  %v575 = vsel %vm172, 1, 0
  %v576 = vsel %vm173, 1, 0
  %v577 = vsel %vm174, 1, 0
  %v578 = vsel %vm175, 1, 0
  %v579 = vsel %vm176, 1, 0
  %v580 = vsel %vm177, 1, 0
  %v581 = vsel %vm178, 1, 0
  %v582 = vsel %vm179, 1, 0
  %v583 = vsel %vm180, 1, 0
  %vm584 = vcmp.eq.s32.totalorder %v568, 1
  %vm585 = vcmp.eq.s32.totalorder %v569, 1
  %vm586 = vcmp.eq.s32.totalorder %v570, 1
  %vm587 = vcmp.eq.s32.totalorder %v571, 1
  %vm588 = vcmp.eq.s32.totalorder %v572, 1
  %vm589 = vcmp.eq.s32.totalorder %v573, 1
  %vm590 = vcmp.eq.s32.totalorder %v574, 1
  %vm591 = vcmp.eq.s32.totalorder %v575, 1
  %vm592 = vcmp.eq.s32.totalorder %v576, 1
  %vm593 = vcmp.eq.s32.totalorder %v577, 1
  %vm594 = vcmp.eq.s32.totalorder %v578, 1
  %vm595 = vcmp.eq.s32.totalorder %v579, 1
  %vm596 = vcmp.eq.s32.totalorder %v580, 1
  %vm597 = vcmp.eq.s32.totalorder %v581, 1
  %vm598 = vcmp.eq.s32.totalorder %v582, 1
  %vm599 = vcmp.eq.s32.totalorder %v583, 1
  %v600 = vsel %vm584, %v567, 0.0
  %v601 = vsel %vm585, %v566, 0.0
  %v602 = vsel %vm586, %v565, 0.0
  %v603 = vsel %vm587, %v564, 0.0
  %v604 = vsel %vm588, %v563, 0.0
  %v605 = vsel %vm589, %v562, 0.0
  %v606 = vsel %vm590, %v561, 0.0
  %v607 = vsel %vm591, %v560, 0.0
  %v608 = vsel %vm592, %v559, 0.0
  %v609 = vsel %vm593, %v558, 0.0
  %v610 = vsel %vm594, %v557, 0.0
  %v611 = vsel %vm595, %v556, 0.0
  %v612 = vsel %vm596, %v555, 0.0
  %v613 = vsel %vm597, %v554, 0.0
  %v614 = vsel %vm598, %v553, 0.0
  %v615 = vsel %vm599, %v552, 0.0
  %616 = vst [vmem:[#allocation2 + $0x80] sm:$0xf] %v600
  %617 = vst [vmem:[#allocation2 + $0x88] sm:$0xf] %v601
  %618 = vst [vmem:[#allocation2 + $0x90] sm:$0xf] %v602
  %619 = vst [vmem:[#allocation2 + $0x98] sm:$0xf] %v603
  %620 = vst [vmem:[#allocation2 + $0xa0] sm:$0xf] %v604
  %621 = vst [vmem:[#allocation2 + $0xa8] sm:$0xf] %v605
  %622 = vst [vmem:[#allocation2 + $0xb0] sm:$0xf] %v606
  %623 = vst [vmem:[#allocation2 + $0xb8] sm:$0xf] %v607
  %624 = vst [vmem:[#allocation2 + $0xc0] sm:$0xf] %v608
  %625 = vst [vmem:[#allocation2 + $0xc8] sm:$0xf] %v609
  %626 = vst [vmem:[#allocation2 + $0xd0] sm:$0xf] %v610
  %627 = vst [vmem:[#allocation2 + $0xd8] sm:$0xf] %v611
  %628 = vst [vmem:[#allocation2 + $0xe0] sm:$0xf] %v612
  %629 = vst [vmem:[#allocation2 + $0xe8] sm:$0xf] %v613
  %630 = vst [vmem:[#allocation2 + $0xf0] sm:$0xf] %v614
  %631 = vst [vmem:[#allocation2 + $0xf8] sm:$0xf] %v615
  %632 = vrot.lane.b32.xlu0 %v213, 1
  %v633 = vpop.permute.xlu0 %632
  %634 = vrot.lane.b32.xlu0 %v229, 1
  %v635 = vpop.permute.xlu0 %634
  %636 = vrot.lane.b32.xlu0 %v214, 1
  %v637 = vpop.permute.xlu0 %636
  %638 = vrot.lane.b32.xlu0 %v230, 1
  %v639 = vpop.permute.xlu0 %638
  %640 = vrot.lane.b32.xlu0 %v215, 1
  %v641 = vpop.permute.xlu0 %640
  %642 = vrot.lane.b32.xlu0 %v231, 1
  %v643 = vpop.permute.xlu0 %642
  %644 = vrot.lane.b32.xlu0 %v216, 1
  %v645 = vpop.permute.xlu0 %644
  %646 = vrot.lane.b32.xlu0 %v232, 1
  %v647 = vpop.permute.xlu0 %646
  %648 = vrot.lane.b32.xlu0 %v217, 1
  %v649 = vpop.permute.xlu0 %648
  %650 = vrot.lane.b32.xlu0 %v233, 1
  %v651 = vpop.permute.xlu0 %650
  %652 = vrot.lane.b32.xlu0 %v218, 1
  %v653 = vpop.permute.xlu0 %652
  %654 = vrot.lane.b32.xlu0 %v234, 1
  %v655 = vpop.permute.xlu0 %654
  %656 = vrot.lane.b32.xlu0 %v219, 1
  %v657 = vpop.permute.xlu0 %656
  %658 = vrot.lane.b32.xlu0 %v235, 1
  %v659 = vpop.permute.xlu0 %658
  %660 = vrot.lane.b32.xlu0 %v220, 1
  %v661 = vpop.permute.xlu0 %660
  %662 = vrot.lane.b32.xlu0 %v236, 1
  %v663 = vpop.permute.xlu0 %662
  %vm664 = vcmp.lt.s32.totalorder %v21, 1
  %v665 = vsel %vm664, %v661, %v663
  %v666 = vsel %vm664, %v659, %v661
  %v667 = vsel %vm664, %v657, %v659
  %v668 = vsel %vm664, %v655, %v657
  %v669 = vsel %vm664, %v653, %v655
  %v670 = vsel %vm664, %v651, %v653
  %v671 = vsel %vm664, %v649, %v651
  %v672 = vsel %vm664, %v647, %v649
  %v673 = vsel %vm664, %v645, %v647
  %v674 = vsel %vm664, %v643, %v645
  %v675 = vsel %vm664, %v641, %v643
  %v676 = vsel %vm664, %v639, %v641
  %v677 = vsel %vm664, %v637, %v639
  %v678 = vsel %vm664, %v635, %v637
  %v679 = vsel %vm664, %v633, %v635
  %v680 = vsel %vm664, %v663, %v633
  %v681 = vsel %vm117, 1, 0
  %v682 = vsel %vm118, 1, 0
  %v683 = vsel %vm119, 1, 0
  %v684 = vsel %vm120, 1, 0
  %v685 = vsel %vm121, 1, 0
  %v686 = vsel %vm122, 1, 0
  %v687 = vsel %vm123, 1, 0
  %v688 = vsel %vm124, 1, 0
  %v689 = vsel %vm125, 1, 0
  %v690 = vsel %vm126, 1, 0
  %v691 = vsel %vm127, 1, 0
  %v692 = vsel %vm128, 1, 0
  %v693 = vsel %vm129, 1, 0
  %v694 = vsel %vm130, 1, 0
  %v695 = vsel %vm131, 1, 0
  %v696 = vsel %vm132, 1, 0
  %vm697 = vcmp.eq.s32.totalorder %v681, 1
  %vm698 = vcmp.eq.s32.totalorder %v682, 1
  %vm699 = vcmp.eq.s32.totalorder %v683, 1
  %vm700 = vcmp.eq.s32.totalorder %v684, 1
  %vm701 = vcmp.eq.s32.totalorder %v685, 1
  %vm702 = vcmp.eq.s32.totalorder %v686, 1
  %vm703 = vcmp.eq.s32.totalorder %v687, 1
  %vm704 = vcmp.eq.s32.totalorder %v688, 1
  %vm705 = vcmp.eq.s32.totalorder %v689, 1
  %vm706 = vcmp.eq.s32.totalorder %v690, 1
  %vm707 = vcmp.eq.s32.totalorder %v691, 1
  %vm708 = vcmp.eq.s32.totalorder %v692, 1
  %vm709 = vcmp.eq.s32.totalorder %v693, 1
  %vm710 = vcmp.eq.s32.totalorder %v694, 1
  %vm711 = vcmp.eq.s32.totalorder %v695, 1
  %vm712 = vcmp.eq.s32.totalorder %v696, 1
  %v713 = vsel %vm697, %v680, 0.0
  %v714 = vsel %vm698, %v679, 0.0
  %v715 = vsel %vm699, %v678, 0.0
  %v716 = vsel %vm700, %v677, 0.0
  %v717 = vsel %vm701, %v676, 0.0
  %v718 = vsel %vm702, %v675, 0.0
  %v719 = vsel %vm703, %v674, 0.0
  %v720 = vsel %vm704, %v673, 0.0
  %v721 = vsel %vm705, %v672, 0.0
  %v722 = vsel %vm706, %v671, 0.0
  %v723 = vsel %vm707, %v670, 0.0
  %v724 = vsel %vm708, %v669, 0.0
  %v725 = vsel %vm709, %v668, 0.0
  %v726 = vsel %vm710, %v667, 0.0
  %v727 = vsel %vm711, %v666, 0.0
  %v728 = vsel %vm712, %v665, 0.0
  %v745 = vrot.slane %v713, 4
  %v746 = vrot.slane %v714, 4
  %v747 = vrot.slane %v715, 4
  %v748 = vrot.slane %v716, 4
  %v749 = vrot.slane %v717, 4
  %v750 = vrot.slane %v718, 4
  %v751 = vrot.slane %v719, 4
  %v752 = vrot.slane %v720, 4
  %v753 = vrot.slane %v721, 4
  %v754 = vrot.slane %v722, 4
  %v755 = vrot.slane %v723, 4
  %v756 = vrot.slane %v724, 4
  %v757 = vrot.slane %v725, 4
  %v758 = vrot.slane %v726, 4
  %v759 = vrot.slane %v727, 4
  %v760 = vrot.slane %v728, 4
  %777 = vst [vmem:[#allocation2 + $0x80] sm:$0xf0] %v745
  %778 = vst [vmem:[#allocation2 + $0x88] sm:$0xf0] %v746
  %779 = vst [vmem:[#allocation2 + $0x90] sm:$0xf0] %v747
  %780 = vst [vmem:[#allocation2 + $0x98] sm:$0xf0] %v748
  %781 = vst [vmem:[#allocation2 + $0xa0] sm:$0xf0] %v749
  %782 = vst [vmem:[#allocation2 + $0xa8] sm:$0xf0] %v750
  %783 = vst [vmem:[#allocation2 + $0xb0] sm:$0xf0] %v751
  %784 = vst [vmem:[#allocation2 + $0xb8] sm:$0xf0] %v752
  %785 = vst [vmem:[#allocation2 + $0xc0] sm:$0xf0] %v753
  %786 = vst [vmem:[#allocation2 + $0xc8] sm:$0xf0] %v754
  %787 = vst [vmem:[#allocation2 + $0xd0] sm:$0xf0] %v755
  %788 = vst [vmem:[#allocation2 + $0xd8] sm:$0xf0] %v756
  %789 = vst [vmem:[#allocation2 + $0xe0] sm:$0xf0] %v757
  %790 = vst [vmem:[#allocation2 + $0xe8] sm:$0xf0] %v758
  %791 = vst [vmem:[#allocation2 + $0xf0] sm:$0xf0] %v759
  %792 = vst [vmem:[#allocation2 + $0xf8] sm:$0xf0] %v760
  %793 = vst [vmem:[#allocation2 + $0x100] sm:$0xf] %v213
  %794 = vst [vmem:[#allocation2 + $0x108] sm:$0xf] %v229
  %795 = vst [vmem:[#allocation2 + $0x110] sm:$0xf] %v214
  %796 = vst [vmem:[#allocation2 + $0x118] sm:$0xf] %v230
  %797 = vst [vmem:[#allocation2 + $0x120] sm:$0xf] %v215
  %798 = vst [vmem:[#allocation2 + $0x128] sm:$0xf] %v231
  %799 = vst [vmem:[#allocation2 + $0x130] sm:$0xf] %v216
  %800 = vst [vmem:[#allocation2 + $0x138] sm:$0xf] %v232
  %801 = vst [vmem:[#allocation2 + $0x140] sm:$0xf] %v217
  %802 = vst [vmem:[#allocation2 + $0x148] sm:$0xf] %v233
  %803 = vst [vmem:[#allocation2 + $0x150] sm:$0xf] %v218
  %804 = vst [vmem:[#allocation2 + $0x158] sm:$0xf] %v234
  %805 = vst [vmem:[#allocation2 + $0x160] sm:$0xf] %v219
  %806 = vst [vmem:[#allocation2 + $0x168] sm:$0xf] %v235
  %807 = vst [vmem:[#allocation2 + $0x170] sm:$0xf] %v220
  %808 = vst [vmem:[#allocation2 + $0x178] sm:$0xf] %v236
  %809 = vrot.lane.b32.xlu0 %v213, 127
  %v810 = vpop.permute.xlu0 %809
  %811 = vrot.lane.b32.xlu0 %v229, 127
  %v812 = vpop.permute.xlu0 %811
  %813 = vrot.lane.b32.xlu0 %v214, 127
  %v814 = vpop.permute.xlu0 %813
  %815 = vrot.lane.b32.xlu0 %v230, 127
  %v816 = vpop.permute.xlu0 %815
  %817 = vrot.lane.b32.xlu0 %v215, 127
  %v818 = vpop.permute.xlu0 %817
  %819 = vrot.lane.b32.xlu0 %v231, 127
  %v820 = vpop.permute.xlu0 %819
  %821 = vrot.lane.b32.xlu0 %v216, 127
  %v822 = vpop.permute.xlu0 %821
  %823 = vrot.lane.b32.xlu0 %v232, 127
  %v824 = vpop.permute.xlu0 %823
  %825 = vrot.lane.b32.xlu0 %v217, 127
  %v826 = vpop.permute.xlu0 %825
  %827 = vrot.lane.b32.xlu0 %v233, 127
  %v828 = vpop.permute.xlu0 %827
  %829 = vrot.lane.b32.xlu0 %v218, 127
  %v830 = vpop.permute.xlu0 %829
  %831 = vrot.lane.b32.xlu0 %v234, 127
  %v832 = vpop.permute.xlu0 %831
  %833 = vrot.lane.b32.xlu0 %v219, 127
  %v834 = vpop.permute.xlu0 %833
  %835 = vrot.lane.b32.xlu0 %v235, 127
  %v836 = vpop.permute.xlu0 %835
  %837 = vrot.lane.b32.xlu0 %v220, 127
  %v838 = vpop.permute.xlu0 %837
  %839 = vrot.lane.b32.xlu0 %v236, 127
  %v840 = vpop.permute.xlu0 %839
  %vm841 = vcmp.lt.s32.totalorder %v21, 127
  %v842 = vsel %vm841, %v838, %v840
  %v843 = vsel %vm841, %v836, %v838
  %v844 = vsel %vm841, %v834, %v836
  %v845 = vsel %vm841, %v832, %v834
  %v846 = vsel %vm841, %v830, %v832
  %v847 = vsel %vm841, %v828, %v830
  %v848 = vsel %vm841, %v826, %v828
  %v849 = vsel %vm841, %v824, %v826
  %v850 = vsel %vm841, %v822, %v824
  %v851 = vsel %vm841, %v820, %v822
  %v852 = vsel %vm841, %v818, %v820
  %v853 = vsel %vm841, %v816, %v818
  %v854 = vsel %vm841, %v814, %v816
  %v855 = vsel %vm841, %v812, %v814
  %v856 = vsel %vm841, %v810, %v812
  %v857 = vsel %vm841, %v840, %v810
  %v858 = vsel %vm133, 1, 0
  %v859 = vsel %vm134, 1, 0
  %v860 = vsel %vm135, 1, 0
  %v861 = vsel %vm136, 1, 0
  %v862 = vsel %vm137, 1, 0
  %v863 = vsel %vm138, 1, 0
  %v864 = vsel %vm139, 1, 0
  %v865 = vsel %vm140, 1, 0
  %v866 = vsel %vm141, 1, 0
  %v867 = vsel %vm142, 1, 0
  %v868 = vsel %vm143, 1, 0
  %v869 = vsel %vm144, 1, 0
  %v870 = vsel %vm145, 1, 0
  %v871 = vsel %vm146, 1, 0
  %v872 = vsel %vm147, 1, 0
  %v873 = vsel %vm148, 1, 0
  %vm874 = vcmp.eq.s32.totalorder %v858, 1
  %vm875 = vcmp.eq.s32.totalorder %v859, 1
  %vm876 = vcmp.eq.s32.totalorder %v860, 1
  %vm877 = vcmp.eq.s32.totalorder %v861, 1
  %vm878 = vcmp.eq.s32.totalorder %v862, 1
  %vm879 = vcmp.eq.s32.totalorder %v863, 1
  %vm880 = vcmp.eq.s32.totalorder %v864, 1
  %vm881 = vcmp.eq.s32.totalorder %v865, 1
  %vm882 = vcmp.eq.s32.totalorder %v866, 1
  %vm883 = vcmp.eq.s32.totalorder %v867, 1
  %vm884 = vcmp.eq.s32.totalorder %v868, 1
  %vm885 = vcmp.eq.s32.totalorder %v869, 1
  %vm886 = vcmp.eq.s32.totalorder %v870, 1
  %vm887 = vcmp.eq.s32.totalorder %v871, 1
  %vm888 = vcmp.eq.s32.totalorder %v872, 1
  %vm889 = vcmp.eq.s32.totalorder %v873, 1
  %v890 = vsel %vm874, %v856, 0.0
  %v891 = vsel %vm875, %v855, 0.0
  %v892 = vsel %vm876, %v854, 0.0
  %v893 = vsel %vm877, %v853, 0.0
  %v894 = vsel %vm878, %v852, 0.0
  %v895 = vsel %vm879, %v851, 0.0
  %v896 = vsel %vm880, %v850, 0.0
  %v897 = vsel %vm881, %v849, 0.0
  %v898 = vsel %vm882, %v848, 0.0
  %v899 = vsel %vm883, %v847, 0.0
  %v900 = vsel %vm884, %v846, 0.0
  %v901 = vsel %vm885, %v845, 0.0
  %v902 = vsel %vm886, %v844, 0.0
  %v903 = vsel %vm887, %v843, 0.0
  %v904 = vsel %vm888, %v842, 0.0
  %v905 = vsel %vm889, %v857, 0.0
  %v922 = vrot.slane %v890, 4
  %v923 = vrot.slane %v891, 4
  %v924 = vrot.slane %v892, 4
  %v925 = vrot.slane %v893, 4
  %v926 = vrot.slane %v894, 4
  %v927 = vrot.slane %v895, 4
  %v928 = vrot.slane %v896, 4
  %v929 = vrot.slane %v897, 4
  %v930 = vrot.slane %v898, 4
  %v931 = vrot.slane %v899, 4
  %v932 = vrot.slane %v900, 4
  %v933 = vrot.slane %v901, 4
  %v934 = vrot.slane %v902, 4
  %v935 = vrot.slane %v903, 4
  %v936 = vrot.slane %v904, 4
  %v937 = vrot.slane %v905, 4
  %954 = vst [vmem:[#allocation2 + $0x100] sm:$0xf0] %v922
  %955 = vst [vmem:[#allocation2 + $0x108] sm:$0xf0] %v923
  %956 = vst [vmem:[#allocation2 + $0x110] sm:$0xf0] %v924
  %957 = vst [vmem:[#allocation2 + $0x118] sm:$0xf0] %v925
  %958 = vst [vmem:[#allocation2 + $0x120] sm:$0xf0] %v926
  %959 = vst [vmem:[#allocation2 + $0x128] sm:$0xf0] %v927
  %960 = vst [vmem:[#allocation2 + $0x130] sm:$0xf0] %v928
  %961 = vst [vmem:[#allocation2 + $0x138] sm:$0xf0] %v929
  %962 = vst [vmem:[#allocation2 + $0x140] sm:$0xf0] %v930
  %963 = vst [vmem:[#allocation2 + $0x148] sm:$0xf0] %v931
  %964 = vst [vmem:[#allocation2 + $0x150] sm:$0xf0] %v932
  %965 = vst [vmem:[#allocation2 + $0x158] sm:$0xf0] %v933
  %966 = vst [vmem:[#allocation2 + $0x160] sm:$0xf0] %v934
  %967 = vst [vmem:[#allocation2 + $0x168] sm:$0xf0] %v935
  %968 = vst [vmem:[#allocation2 + $0x170] sm:$0xf0] %v936
  %969 = vst [vmem:[#allocation2 + $0x178] sm:$0xf0] %v937
  %970 = vrot.lane.b32.xlu0 %v213, 97
  %v971 = vpop.permute.xlu0 %970
  %972 = vrot.lane.b32.xlu0 %v229, 97
  %v973 = vpop.permute.xlu0 %972
  %974 = vrot.lane.b32.xlu0 %v214, 97
  %v975 = vpop.permute.xlu0 %974
  %976 = vrot.lane.b32.xlu0 %v230, 97
  %v977 = vpop.permute.xlu0 %976
  %978 = vrot.lane.b32.xlu0 %v215, 97
  %v979 = vpop.permute.xlu0 %978
  %980 = vrot.lane.b32.xlu0 %v231, 97
  %v981 = vpop.permute.xlu0 %980
  %982 = vrot.lane.b32.xlu0 %v216, 97
  %v983 = vpop.permute.xlu0 %982
  %984 = vrot.lane.b32.xlu0 %v232, 97
  %v985 = vpop.permute.xlu0 %984
  %986 = vrot.lane.b32.xlu0 %v217, 97
  %v987 = vpop.permute.xlu0 %986
  %988 = vrot.lane.b32.xlu0 %v233, 97
  %v989 = vpop.permute.xlu0 %988
  %990 = vrot.lane.b32.xlu0 %v218, 97
  %v991 = vpop.permute.xlu0 %990
  %992 = vrot.lane.b32.xlu0 %v234, 97
  %v993 = vpop.permute.xlu0 %992
  %994 = vrot.lane.b32.xlu0 %v219, 97
  %v995 = vpop.permute.xlu0 %994
  %996 = vrot.lane.b32.xlu0 %v235, 97
  %v997 = vpop.permute.xlu0 %996
  %998 = vrot.lane.b32.xlu0 %v220, 97
  %v999 = vpop.permute.xlu0 %998
  %1000 = vrot.lane.b32.xlu0 %v236, 97
  %v1001 = vpop.permute.xlu0 %1000
  %vm1002 = vcmp.lt.s32.totalorder %v21, 97
  %v1003 = vsel %vm1002, %v999, %v1001
  %v1004 = vsel %vm1002, %v997, %v999
  %v1005 = vsel %vm1002, %v995, %v997
  %v1006 = vsel %vm1002, %v993, %v995
  %v1007 = vsel %vm1002, %v991, %v993
  %v1008 = vsel %vm1002, %v989, %v991
  %v1009 = vsel %vm1002, %v987, %v989
  %v1010 = vsel %vm1002, %v985, %v987
  %v1011 = vsel %vm1002, %v983, %v985
  %v1012 = vsel %vm1002, %v981, %v983
  %v1013 = vsel %vm1002, %v979, %v981
  %v1014 = vsel %vm1002, %v977, %v979
  %v1015 = vsel %vm1002, %v975, %v977
  %v1016 = vsel %vm1002, %v973, %v975
  %v1017 = vsel %vm1002, %v971, %v973
  %v1018 = vsel %vm1002, %v1001, %v971
  %v1019 = vsel %vm181, 1, 0
  %v1020 = vsel %vm182, 1, 0
  %v1021 = vsel %vm183, 1, 0
  %v1022 = vsel %vm184, 1, 0
  %v1023 = vsel %vm185, 1, 0
  %v1024 = vsel %vm186, 1, 0
  %v1025 = vsel %vm187, 1, 0
  %v1026 = vsel %vm188, 1, 0
  %v1027 = vsel %vm189, 1, 0
  %v1028 = vsel %vm190, 1, 0
  %v1029 = vsel %vm191, 1, 0
  %v1030 = vsel %vm192, 1, 0
  %v1031 = vsel %vm193, 1, 0
  %v1032 = vsel %vm194, 1, 0
  %v1033 = vsel %vm195, 1, 0
  %v1034 = vsel %vm196, 1, 0
  %vm1035 = vcmp.eq.s32.totalorder %v1019, 1
  %vm1036 = vcmp.eq.s32.totalorder %v1020, 1
  %vm1037 = vcmp.eq.s32.totalorder %v1021, 1
  %vm1038 = vcmp.eq.s32.totalorder %v1022, 1
  %vm1039 = vcmp.eq.s32.totalorder %v1023, 1
  %vm1040 = vcmp.eq.s32.totalorder %v1024, 1
  %vm1041 = vcmp.eq.s32.totalorder %v1025, 1
  %vm1042 = vcmp.eq.s32.totalorder %v1026, 1
  %vm1043 = vcmp.eq.s32.totalorder %v1027, 1
  %vm1044 = vcmp.eq.s32.totalorder %v1028, 1
  %vm1045 = vcmp.eq.s32.totalorder %v1029, 1
  %vm1046 = vcmp.eq.s32.totalorder %v1030, 1
  %vm1047 = vcmp.eq.s32.totalorder %v1031, 1
  %vm1048 = vcmp.eq.s32.totalorder %v1032, 1
  %vm1049 = vcmp.eq.s32.totalorder %v1033, 1
  %vm1050 = vcmp.eq.s32.totalorder %v1034, 1
  %v1051 = vsel %vm1035, %v1017, 0.0
  %v1052 = vsel %vm1036, %v1016, 0.0
  %v1053 = vsel %vm1037, %v1015, 0.0
  %v1054 = vsel %vm1038, %v1014, 0.0
  %v1055 = vsel %vm1039, %v1013, 0.0
  %v1056 = vsel %vm1040, %v1012, 0.0
  %v1057 = vsel %vm1041, %v1011, 0.0
  %v1058 = vsel %vm1042, %v1010, 0.0
  %v1059 = vsel %vm1043, %v1009, 0.0
  %v1060 = vsel %vm1044, %v1008, 0.0
  %v1061 = vsel %vm1045, %v1007, 0.0
  %v1062 = vsel %vm1046, %v1006, 0.0
  %v1063 = vsel %vm1047, %v1005, 0.0
  %v1064 = vsel %vm1048, %v1004, 0.0
  %v1065 = vsel %vm1049, %v1003, 0.0
  %v1066 = vsel %vm1050, %v1018, 0.0
  %1067 = vst [vmem:[#allocation2 + $0x180] sm:$0xf] %v1051
  %1068 = vst [vmem:[#allocation2 + $0x188] sm:$0xf] %v1052
  %1069 = vst [vmem:[#allocation2 + $0x190] sm:$0xf] %v1053
  %1070 = vst [vmem:[#allocation2 + $0x198] sm:$0xf] %v1054
  %1071 = vst [vmem:[#allocation2 + $0x1a0] sm:$0xf] %v1055
  %1072 = vst [vmem:[#allocation2 + $0x1a8] sm:$0xf] %v1056
  %1073 = vst [vmem:[#allocation2 + $0x1b0] sm:$0xf] %v1057
  %1074 = vst [vmem:[#allocation2 + $0x1b8] sm:$0xf] %v1058
  %1075 = vst [vmem:[#allocation2 + $0x1c0] sm:$0xf] %v1059
  %1076 = vst [vmem:[#allocation2 + $0x1c8] sm:$0xf] %v1060
  %1077 = vst [vmem:[#allocation2 + $0x1d0] sm:$0xf] %v1061
  %1078 = vst [vmem:[#allocation2 + $0x1d8] sm:$0xf] %v1062
  %1079 = vst [vmem:[#allocation2 + $0x1e0] sm:$0xf] %v1063
  %1080 = vst [vmem:[#allocation2 + $0x1e8] sm:$0xf] %v1064
  %1081 = vst [vmem:[#allocation2 + $0x1f0] sm:$0xf] %v1065
  %1082 = vst [vmem:[#allocation2 + $0x1f8] sm:$0xf] %v1066
  %1083 = vrot.lane.b32.xlu0 %v213, 96
  %v1084 = vpop.permute.xlu0 %1083
  %1085 = vrot.lane.b32.xlu0 %v229, 96
  %v1086 = vpop.permute.xlu0 %1085
  %1087 = vrot.lane.b32.xlu0 %v214, 96
  %v1088 = vpop.permute.xlu0 %1087
  %1089 = vrot.lane.b32.xlu0 %v230, 96
  %v1090 = vpop.permute.xlu0 %1089
  %1091 = vrot.lane.b32.xlu0 %v215, 96
  %v1092 = vpop.permute.xlu0 %1091
  %1093 = vrot.lane.b32.xlu0 %v231, 96
  %v1094 = vpop.permute.xlu0 %1093
  %1095 = vrot.lane.b32.xlu0 %v216, 96
  %v1096 = vpop.permute.xlu0 %1095
  %1097 = vrot.lane.b32.xlu0 %v232, 96
  %v1098 = vpop.permute.xlu0 %1097
  %1099 = vrot.lane.b32.xlu0 %v217, 96
  %v1100 = vpop.permute.xlu0 %1099
  %1101 = vrot.lane.b32.xlu0 %v233, 96
  %v1102 = vpop.permute.xlu0 %1101
  %1103 = vrot.lane.b32.xlu0 %v218, 96
  %v1104 = vpop.permute.xlu0 %1103
  %1105 = vrot.lane.b32.xlu0 %v234, 96
  %v1106 = vpop.permute.xlu0 %1105
  %1107 = vrot.lane.b32.xlu0 %v219, 96
  %v1108 = vpop.permute.xlu0 %1107
  %1109 = vrot.lane.b32.xlu0 %v235, 96
  %v1110 = vpop.permute.xlu0 %1109
  %1111 = vrot.lane.b32.xlu0 %v220, 96
  %v1112 = vpop.permute.xlu0 %1111
  %1113 = vrot.lane.b32.xlu0 %v236, 96
  %v1114 = vpop.permute.xlu0 %1113
  %vm1115 = vcmp.lt.s32.totalorder %v21, 96
  %v1116 = vsel %vm1115, %v1112, %v1114
  %v1117 = vsel %vm1115, %v1110, %v1112
  %v1118 = vsel %vm1115, %v1108, %v1110
  %v1119 = vsel %vm1115, %v1106, %v1108
  %v1120 = vsel %vm1115, %v1104, %v1106
  %v1121 = vsel %vm1115, %v1102, %v1104
  %v1122 = vsel %vm1115, %v1100, %v1102
  %v1123 = vsel %vm1115, %v1098, %v1100
  %v1124 = vsel %vm1115, %v1096, %v1098
  %v1125 = vsel %vm1115, %v1094, %v1096
  %v1126 = vsel %vm1115, %v1092, %v1094
  %v1127 = vsel %vm1115, %v1090, %v1092
  %v1128 = vsel %vm1115, %v1088, %v1090
  %v1129 = vsel %vm1115, %v1086, %v1088
  %v1130 = vsel %vm1115, %v1084, %v1086
  %v1131 = vsel %vm1115, %v1114, %v1084
  %v1132 = vsel %vm101, 1, 0
  %v1133 = vsel %vm102, 1, 0
  %v1134 = vsel %vm103, 1, 0
  %v1135 = vsel %vm104, 1, 0
  %v1136 = vsel %vm105, 1, 0
  %v1137 = vsel %vm106, 1, 0
  %v1138 = vsel %vm107, 1, 0
  %v1139 = vsel %vm108, 1, 0
  %v1140 = vsel %vm109, 1, 0
  %v1141 = vsel %vm110, 1, 0
  %v1142 = vsel %vm111, 1, 0
  %v1143 = vsel %vm112, 1, 0
  %v1144 = vsel %vm113, 1, 0
  %v1145 = vsel %vm114, 1, 0
  %v1146 = vsel %vm115, 1, 0
  %v1147 = vsel %vm116, 1, 0
  %vm1148 = vcmp.eq.s32.totalorder %v1132, 1
  %vm1149 = vcmp.eq.s32.totalorder %v1133, 1
  %vm1150 = vcmp.eq.s32.totalorder %v1134, 1
  %vm1151 = vcmp.eq.s32.totalorder %v1135, 1
  %vm1152 = vcmp.eq.s32.totalorder %v1136, 1
  %vm1153 = vcmp.eq.s32.totalorder %v1137, 1
  %vm1154 = vcmp.eq.s32.totalorder %v1138, 1
  %vm1155 = vcmp.eq.s32.totalorder %v1139, 1
  %vm1156 = vcmp.eq.s32.totalorder %v1140, 1
  %vm1157 = vcmp.eq.s32.totalorder %v1141, 1
  %vm1158 = vcmp.eq.s32.totalorder %v1142, 1
  %vm1159 = vcmp.eq.s32.totalorder %v1143, 1
  %vm1160 = vcmp.eq.s32.totalorder %v1144, 1
  %vm1161 = vcmp.eq.s32.totalorder %v1145, 1
  %vm1162 = vcmp.eq.s32.totalorder %v1146, 1
  %vm1163 = vcmp.eq.s32.totalorder %v1147, 1
  %v1164 = vsel %vm1148, %v1130, 0.0
  %v1165 = vsel %vm1149, %v1129, 0.0
  %v1166 = vsel %vm1150, %v1128, 0.0
  %v1167 = vsel %vm1151, %v1127, 0.0
  %v1168 = vsel %vm1152, %v1126, 0.0
  %v1169 = vsel %vm1153, %v1125, 0.0
  %v1170 = vsel %vm1154, %v1124, 0.0
  %v1171 = vsel %vm1155, %v1123, 0.0
  %v1172 = vsel %vm1156, %v1122, 0.0
  %v1173 = vsel %vm1157, %v1121, 0.0
  %v1174 = vsel %vm1158, %v1120, 0.0
  %v1175 = vsel %vm1159, %v1119, 0.0
  %v1176 = vsel %vm1160, %v1118, 0.0
  %v1177 = vsel %vm1161, %v1117, 0.0
  %v1178 = vsel %vm1162, %v1116, 0.0
  %v1179 = vsel %vm1163, %v1131, 0.0
  %v1196 = vrot.slane %v1164, 4
  %v1197 = vrot.slane %v1165, 4
  %v1198 = vrot.slane %v1166, 4
  %v1199 = vrot.slane %v1167, 4
  %v1200 = vrot.slane %v1168, 4
  %v1201 = vrot.slane %v1169, 4
  %v1202 = vrot.slane %v1170, 4
  %v1203 = vrot.slane %v1171, 4
  %v1204 = vrot.slane %v1172, 4
  %v1205 = vrot.slane %v1173, 4
  %v1206 = vrot.slane %v1174, 4
  %v1207 = vrot.slane %v1175, 4
  %v1208 = vrot.slane %v1176, 4
  %v1209 = vrot.slane %v1177, 4
  %v1210 = vrot.slane %v1178, 4
  %v1211 = vrot.slane %v1179, 4
  %1228 = vst [vmem:[#allocation2 + $0x180] sm:$0xf0] %v1196
  %1229 = vst [vmem:[#allocation2 + $0x188] sm:$0xf0] %v1197
  %1230 = vst [vmem:[#allocation2 + $0x190] sm:$0xf0] %v1198
  %1231 = vst [vmem:[#allocation2 + $0x198] sm:$0xf0] %v1199
  %1232 = vst [vmem:[#allocation2 + $0x1a0] sm:$0xf0] %v1200
  %1233 = vst [vmem:[#allocation2 + $0x1a8] sm:$0xf0] %v1201
  %1234 = vst [vmem:[#allocation2 + $0x1b0] sm:$0xf0] %v1202
  %1235 = vst [vmem:[#allocation2 + $0x1b8] sm:$0xf0] %v1203
  %1236 = vst [vmem:[#allocation2 + $0x1c0] sm:$0xf0] %v1204
  %1237 = vst [vmem:[#allocation2 + $0x1c8] sm:$0xf0] %v1205
  %1238 = vst [vmem:[#allocation2 + $0x1d0] sm:$0xf0] %v1206
  %1239 = vst [vmem:[#allocation2 + $0x1d8] sm:$0xf0] %v1207
  %1240 = vst [vmem:[#allocation2 + $0x1e0] sm:$0xf0] %v1208
  %1241 = vst [vmem:[#allocation2 + $0x1e8] sm:$0xf0] %v1209
  %1242 = vst [vmem:[#allocation2 + $0x1f0] sm:$0xf0] %v1210
  %1243 = vst [vmem:[#allocation2 + $0x1f8] sm:$0xf0] %v1211
  %1244 = vrot.lane.b32.xlu0 %v213, 95
  %v1245 = vpop.permute.xlu0 %1244
  %1246 = vrot.lane.b32.xlu0 %v229, 95
  %v1247 = vpop.permute.xlu0 %1246
  %1248 = vrot.lane.b32.xlu0 %v214, 95
  %v1249 = vpop.permute.xlu0 %1248
  %1250 = vrot.lane.b32.xlu0 %v230, 95
  %v1251 = vpop.permute.xlu0 %1250
  %1252 = vrot.lane.b32.xlu0 %v215, 95
  %v1253 = vpop.permute.xlu0 %1252
  %1254 = vrot.lane.b32.xlu0 %v231, 95
  %v1255 = vpop.permute.xlu0 %1254
  %1256 = vrot.lane.b32.xlu0 %v216, 95
  %v1257 = vpop.permute.xlu0 %1256
  %1258 = vrot.lane.b32.xlu0 %v232, 95
  %v1259 = vpop.permute.xlu0 %1258
  %1260 = vrot.lane.b32.xlu0 %v217, 95
  %v1261 = vpop.permute.xlu0 %1260
  %1262 = vrot.lane.b32.xlu0 %v233, 95
  %v1263 = vpop.permute.xlu0 %1262
  %1264 = vrot.lane.b32.xlu0 %v218, 95
  %v1265 = vpop.permute.xlu0 %1264
  %1266 = vrot.lane.b32.xlu0 %v234, 95
  %v1267 = vpop.permute.xlu0 %1266
  %1268 = vrot.lane.b32.xlu0 %v219, 95
  %v1269 = vpop.permute.xlu0 %1268
  %1270 = vrot.lane.b32.xlu0 %v235, 95
  %v1271 = vpop.permute.xlu0 %1270
  %1272 = vrot.lane.b32.xlu0 %v220, 95
  %v1273 = vpop.permute.xlu0 %1272
  %1274 = vrot.lane.b32.xlu0 %v236, 95
  %v1275 = vpop.permute.xlu0 %1274
  %vm1276 = vcmp.lt.s32.totalorder %v21, 95
  %v1277 = vsel %vm1276, %v1273, %v1275
  %v1278 = vsel %vm1276, %v1271, %v1273
  %v1279 = vsel %vm1276, %v1269, %v1271
  %v1280 = vsel %vm1276, %v1267, %v1269
  %v1281 = vsel %vm1276, %v1265, %v1267
  %v1282 = vsel %vm1276, %v1263, %v1265
  %v1283 = vsel %vm1276, %v1261, %v1263
  %v1284 = vsel %vm1276, %v1259, %v1261
  %v1285 = vsel %vm1276, %v1257, %v1259
  %v1286 = vsel %vm1276, %v1255, %v1257
  %v1287 = vsel %vm1276, %v1253, %v1255
  %v1288 = vsel %vm1276, %v1251, %v1253
  %v1289 = vsel %vm1276, %v1249, %v1251
  %v1290 = vsel %vm1276, %v1247, %v1249
  %v1291 = vsel %vm1276, %v1245, %v1247
  %v1292 = vsel %vm1276, %v1275, %v1245
  %v1293 = vsel %vm197, 1, 0
  %v1294 = vsel %vm198, 1, 0
  %v1295 = vsel %vm199, 1, 0
  %v1296 = vsel %vm200, 1, 0
  %v1297 = vsel %vm201, 1, 0
  %v1298 = vsel %vm202, 1, 0
  %v1299 = vsel %vm203, 1, 0
  %v1300 = vsel %vm204, 1, 0
  %v1301 = vsel %vm205, 1, 0
  %v1302 = vsel %vm206, 1, 0
  %v1303 = vsel %vm207, 1, 0
  %v1304 = vsel %vm208, 1, 0
  %v1305 = vsel %vm209, 1, 0
  %v1306 = vsel %vm210, 1, 0
  %v1307 = vsel %vm211, 1, 0
  %v1308 = vsel %vm212, 1, 0
  %vm1309 = vcmp.eq.s32.totalorder %v1293, 1
  %vm1310 = vcmp.eq.s32.totalorder %v1294, 1
  %vm1311 = vcmp.eq.s32.totalorder %v1295, 1
  %vm1312 = vcmp.eq.s32.totalorder %v1296, 1
  %vm1313 = vcmp.eq.s32.totalorder %v1297, 1
  %vm1314 = vcmp.eq.s32.totalorder %v1298, 1
  %vm1315 = vcmp.eq.s32.totalorder %v1299, 1
  %vm1316 = vcmp.eq.s32.totalorder %v1300, 1
  %vm1317 = vcmp.eq.s32.totalorder %v1301, 1
  %vm1318 = vcmp.eq.s32.totalorder %v1302, 1
  %vm1319 = vcmp.eq.s32.totalorder %v1303, 1
  %vm1320 = vcmp.eq.s32.totalorder %v1304, 1
  %vm1321 = vcmp.eq.s32.totalorder %v1305, 1
  %vm1322 = vcmp.eq.s32.totalorder %v1306, 1
  %vm1323 = vcmp.eq.s32.totalorder %v1307, 1
  %vm1324 = vcmp.eq.s32.totalorder %v1308, 1
  %v1325 = vsel %vm1309, %v1291, 0.0
  %v1326 = vsel %vm1310, %v1290, 0.0
  %v1327 = vsel %vm1311, %v1289, 0.0
  %v1328 = vsel %vm1312, %v1288, 0.0
  %v1329 = vsel %vm1313, %v1287, 0.0
  %v1330 = vsel %vm1314, %v1286, 0.0
  %v1331 = vsel %vm1315, %v1285, 0.0
  %v1332 = vsel %vm1316, %v1284, 0.0
  %v1333 = vsel %vm1317, %v1283, 0.0
  %v1334 = vsel %vm1318, %v1282, 0.0
  %v1335 = vsel %vm1319, %v1281, 0.0
  %v1336 = vsel %vm1320, %v1280, 0.0
  %v1337 = vsel %vm1321, %v1279, 0.0
  %v1338 = vsel %vm1322, %v1278, 0.0
  %v1339 = vsel %vm1323, %v1277, 0.0
  %v1340 = vsel %vm1324, %v1292, 0.0
  %1341 = vst [vmem:[#allocation2 + $0x200] sm:$0xf] %v1325
  %1342 = vst [vmem:[#allocation2 + $0x208] sm:$0xf] %v1326
  %1343 = vst [vmem:[#allocation2 + $0x210] sm:$0xf] %v1327
  %1344 = vst [vmem:[#allocation2 + $0x218] sm:$0xf] %v1328
  %1345 = vst [vmem:[#allocation2 + $0x220] sm:$0xf] %v1329
  %1346 = vst [vmem:[#allocation2 + $0x228] sm:$0xf] %v1330
  %1347 = vst [vmem:[#allocation2 + $0x230] sm:$0xf] %v1331
  %1348 = vst [vmem:[#allocation2 + $0x238] sm:$0xf] %v1332
  %1349 = vst [vmem:[#allocation2 + $0x240] sm:$0xf] %v1333
  %1350 = vst [vmem:[#allocation2 + $0x248] sm:$0xf] %v1334
  %1351 = vst [vmem:[#allocation2 + $0x250] sm:$0xf] %v1335
  %1352 = vst [vmem:[#allocation2 + $0x258] sm:$0xf] %v1336
  %1353 = vst [vmem:[#allocation2 + $0x260] sm:$0xf] %v1337
  %1354 = vst [vmem:[#allocation2 + $0x268] sm:$0xf] %v1338
  %1355 = vst [vmem:[#allocation2 + $0x270] sm:$0xf] %v1339
  %1356 = vst [vmem:[#allocation2 + $0x278] sm:$0xf] %v1340
  %v1357 = vld [vmem:[%s1] sm:$0xf]
  %v1358 = vld [vmem:[#allocation2] sm:$0xff]
  %v1359 = vld [vmem:[#allocation2 + $0x8] sm:$0xff]
  %v1360 = vld [vmem:[#allocation2 + $0x10] sm:$0xff]
  %v1361 = vld [vmem:[#allocation2 + $0x18] sm:$0xff]
  %v1362 = vld [vmem:[#allocation2 + $0x20] sm:$0xff]
  %v1363 = vld [vmem:[#allocation2 + $0x28] sm:$0xff]
  %v1364 = vld [vmem:[#allocation2 + $0x30] sm:$0xff]
  %v1365 = vld [vmem:[#allocation2 + $0x38] sm:$0xff]
  %v1366 = vld [vmem:[#allocation2 + $0x40] sm:$0xff]
  %v1367 = vld [vmem:[#allocation2 + $0x48] sm:$0xff]
  %v1368 = vld [vmem:[#allocation2 + $0x50] sm:$0xff]
  %v1369 = vld [vmem:[#allocation2 + $0x58] sm:$0xff]
  %v1370 = vld [vmem:[#allocation2 + $0x60] sm:$0xff]
  %v1371 = vld [vmem:[#allocation2 + $0x68] sm:$0xff]
  %v1372 = vld [vmem:[#allocation2 + $0x70] sm:$0xff]
  %v1373 = vld [vmem:[#allocation2 + $0x78] sm:$0xff]
  %v1374 = vld [vmem:[#allocation2 + $0x80] sm:$0xff]
  %v1375 = vld [vmem:[#allocation2 + $0x88] sm:$0xff]
  %v1376 = vld [vmem:[#allocation2 + $0x90] sm:$0xff]
  %v1377 = vld [vmem:[#allocation2 + $0x98] sm:$0xff]
  %v1378 = vld [vmem:[#allocation2 + $0xa0] sm:$0xff]
  %v1379 = vld [vmem:[#allocation2 + $0xa8] sm:$0xff]
  %v1380 = vld [vmem:[#allocation2 + $0xb0] sm:$0xff]
  %v1381 = vld [vmem:[#allocation2 + $0xb8] sm:$0xff]
  %v1382 = vld [vmem:[#allocation2 + $0xc0] sm:$0xff]
  %v1383 = vld [vmem:[#allocation2 + $0xc8] sm:$0xff]
  %v1384 = vld [vmem:[#allocation2 + $0xd0] sm:$0xff]
  %v1385 = vld [vmem:[#allocation2 + $0xd8] sm:$0xff]
  %v1386 = vld [vmem:[#allocation2 + $0xe0] sm:$0xff]
  %v1387 = vld [vmem:[#allocation2 + $0xe8] sm:$0xff]
  %v1388 = vld [vmem:[#allocation2 + $0xf0] sm:$0xff]
  %v1389 = vld [vmem:[#allocation2 + $0xf8] sm:$0xff]
  %v1390 = vld [vmem:[#allocation2 + $0x100] sm:$0xff]
  %v1391 = vld [vmem:[#allocation2 + $0x108] sm:$0xff]
  %v1392 = vld [vmem:[#allocation2 + $0x110] sm:$0xff]
  %v1393 = vld [vmem:[#allocation2 + $0x118] sm:$0xff]
  %v1394 = vld [vmem:[#allocation2 + $0x120] sm:$0xff]
  %v1395 = vld [vmem:[#allocation2 + $0x128] sm:$0xff]
  %v1396 = vld [vmem:[#allocation2 + $0x130] sm:$0xff]
  %v1397 = vld [vmem:[#allocation2 + $0x138] sm:$0xff]
  %v1398 = vld [vmem:[#allocation2 + $0x140] sm:$0xff]
  %v1399 = vld [vmem:[#allocation2 + $0x148] sm:$0xff]
  %v1400 = vld [vmem:[#allocation2 + $0x150] sm:$0xff]
  %v1401 = vld [vmem:[#allocation2 + $0x158] sm:$0xff]
  %v1402 = vld [vmem:[#allocation2 + $0x160] sm:$0xff]
  %v1403 = vld [vmem:[#allocation2 + $0x168] sm:$0xff]
  %v1404 = vld [vmem:[#allocation2 + $0x170] sm:$0xff]
  %v1405 = vld [vmem:[#allocation2 + $0x178] sm:$0xff]
  %v1406 = vld [vmem:[#allocation2 + $0x180] sm:$0xff]
  %v1407 = vld [vmem:[#allocation2 + $0x188] sm:$0xff]
  %v1408 = vld [vmem:[#allocation2 + $0x190] sm:$0xff]
  %v1409 = vld [vmem:[#allocation2 + $0x198] sm:$0xff]
  %v1410 = vld [vmem:[#allocation2 + $0x1a0] sm:$0xff]
  %v1411 = vld [vmem:[#allocation2 + $0x1a8] sm:$0xff]
  %v1412 = vld [vmem:[#allocation2 + $0x1b0] sm:$0xff]
  %v1413 = vld [vmem:[#allocation2 + $0x1b8] sm:$0xff]
  %v1414 = vld [vmem:[#allocation2 + $0x1c0] sm:$0xff]
  %v1415 = vld [vmem:[#allocation2 + $0x1c8] sm:$0xff]
  %v1416 = vld [vmem:[#allocation2 + $0x1d0] sm:$0xff]
  %v1417 = vld [vmem:[#allocation2 + $0x1d8] sm:$0xff]
  %v1418 = vld [vmem:[#allocation2 + $0x1e0] sm:$0xff]
  %v1419 = vld [vmem:[#allocation2 + $0x1e8] sm:$0xff]
  %v1420 = vld [vmem:[#allocation2 + $0x1f0] sm:$0xff]
  %v1421 = vld [vmem:[#allocation2 + $0x1f8] sm:$0xff]
  %v1422 = vld [vmem:[#allocation2 + $0x200] sm:$0xf]
  %v1423 = vld [vmem:[#allocation2 + $0x208] sm:$0xf]
  %v1424 = vld [vmem:[#allocation2 + $0x210] sm:$0xf]
  %v1425 = vld [vmem:[#allocation2 + $0x218] sm:$0xf]
  %v1426 = vld [vmem:[#allocation2 + $0x220] sm:$0xf]
  %v1427 = vld [vmem:[#allocation2 + $0x228] sm:$0xf]
  %v1428 = vld [vmem:[#allocation2 + $0x230] sm:$0xf]
  %v1429 = vld [vmem:[#allocation2 + $0x238] sm:$0xf]
  %v1430 = vld [vmem:[#allocation2 + $0x240] sm:$0xf]
  %v1431 = vld [vmem:[#allocation2 + $0x248] sm:$0xf]
  %v1432 = vld [vmem:[#allocation2 + $0x250] sm:$0xf]
  %v1433 = vld [vmem:[#allocation2 + $0x258] sm:$0xf]
  %v1434 = vld [vmem:[#allocation2 + $0x260] sm:$0xf]
  %v1435 = vld [vmem:[#allocation2 + $0x268] sm:$0xf]
  %v1436 = vld [vmem:[#allocation2 + $0x270] sm:$0xf]
  %v1437 = vld [vmem:[#allocation2 + $0x278] sm:$0xf]
  %v1438 = vld [vmem:[%s2] sm:$0xf]
  %1440 = vset.pattern.permute.xlu0 0
  %1441 = vperm.xlu0 %1440, %v1438
  %v1442 = vpop.permute.xlu0 %1441
  %vm1444 = vcmask 293888
  %v1446 = vsel %vm1444, %v1357, 0
  %vm1448 = vcmask 1043456
  %v1450 = vsel %vm1448, %v1422, 0
  %v1453 = vsel %vm1448, %v1423, 0
  %v1456 = vsel %vm1448, %v1424, 0
  %v1459 = vsel %vm1448, %v1425, 0
  %v1462 = vsel %vm1448, %v1426, 0
  %v1465 = vsel %vm1448, %v1427, 0
  %v1468 = vsel %vm1448, %v1428, 0
  %v1471 = vsel %vm1448, %v1429, 0
  %v1474 = vsel %vm1448, %v1430, 0
  %v1477 = vsel %vm1448, %v1431, 0
  %v1480 = vsel %vm1448, %v1432, 0
  %v1483 = vsel %vm1448, %v1433, 0
  %v1486 = vsel %vm1448, %v1434, 0
  %v1489 = vsel %vm1448, %v1435, 0
  %v1492 = vsel %vm1448, %v1436, 0
  %v1495 = vsel %vm1448, %v1437, 0
  %1497 = vmatprep.subr.mxu0 0.0
  %1498 = vmatpush1.msra.mxu0 0.0
  %1499 = vmatprep.subr.mxu0 0.0
  %1500 = vmatpush1.msra.mxu0 0.0
  %1501 = vmatprep.subr.mxu0 0.0
  %1502 = vmatpush1.msra.mxu0 0.0
  %1503 = vmatprep.subr.mxu0 0.0
  %1504 = vmatpush1.msra.mxu0 0.0
  %1505 = vmatprep.subr.mxu0 0.0
  %1506 = vmatpush1.msra.mxu0 0.0
  %1507 = vmatprep.subr.mxu0 0.0
  %1508 = vmatpush1.msra.mxu0 0.0
  %1509 = vmatprep.subr.mxu0 0.0
  %1510 = vmatpush1.msra.mxu0 0.0
  %1511 = vmatprep.subr.mxu0 0.0
  %1512 = vmatpush1.msra.mxu0 0.0
  %1513 = vmatprep.subr.mxu0 0.0
  %1514 = vmatpush1.msra.mxu0 0.0
  %1515 = vmatprep.subr.mxu0 0.0
  %1516 = vmatpush1.msra.mxu0 0.0
  %1517 = vmatprep.subr.mxu0 0.0
  %1518 = vmatpush1.msra.mxu0 0.0
  %1519 = vmatprep.subr.mxu0 %v1453
  %1520 = vmatpush1.msra.mxu0 %v1450
  %1521 = vmatprep.subr.mxu0 %v1407
  %1522 = vmatpush1.msra.mxu0 %v1406
  %1523 = vmatprep.subr.mxu0 %v1391
  %1524 = vmatpush1.msra.mxu0 %v1390
  %1525 = vmatprep.subr.mxu0 %v1375
  %1526 = vmatpush1.msra.mxu0 %v1374
  %1527 = vmatprep.subr.mxu0 %v1359
  %1528 = vmatpush1.msra.mxu0 %v1358
  %1529 = vmatprep.subr.mxu0 0.0
  %1530 = vmatpush2.msra.mxu0 0.0
  %1531 = vmatprep.subr.mxu0 0.0
  %1532 = vmatpush2.msra.mxu0 0.0
  %1533 = vmatprep.subr.mxu0 0.0
  %1534 = vmatpush2.msra.mxu0 0.0
  %1535 = vmatprep.subr.mxu0 0.0
  %1536 = vmatpush2.msra.mxu0 0.0
  %1537 = vmatprep.subr.mxu0 0.0
  %1538 = vmatpush2.msra.mxu0 0.0
  %1539 = vmatprep.subr.mxu0 0.0
  %1540 = vmatpush2.msra.mxu0 0.0
  %1541 = vmatprep.subr.mxu0 0.0
  %1542 = vmatpush2.msra.mxu0 0.0
  %1543 = vmatprep.subr.mxu0 0.0
  %1544 = vmatpush2.msra.mxu0 0.0
  %1545 = vmatprep.subr.mxu0 0.0
  %1546 = vmatpush2.msra.mxu0 0.0
  %1547 = vmatprep.subr.mxu0 0.0
  %1548 = vmatpush2.msra.mxu0 0.0
  %1549 = vmatprep.subr.mxu0 0.0
  %1550 = vmatpush2.msra.mxu0 0.0
  %1551 = vmatprep.subr.mxu0 0.0
  %1552 = vmatpush2.msra.mxu0 0.0
  %1553 = vmatprep.subr.mxu0 0.0
  %1554 = vmatpush2.msra.mxu0 0.0
  %1555 = vmatprep.subr.mxu0 0.0
  %1556 = vmatpush2.msra.mxu0 0.0
  %1557 = vmatprep.subr.mxu0 0.0
  %1558 = vmatpush2.msra.mxu0 0.0
  %1559 = vmatprep.subr.mxu0 0.0
  %1560 = vmatpush2.msra.mxu0 0.0
  %1561 = vmatprep.mubr.f32.mxu0 0.0
  %1562 = vmatmul.mubr.f32.gmra.mxu0 %v1446
  %v1563 = vpop.f32.mrf.mxu0
  %v1564 = vadd.f32 %v1442, %v1563
  %v1565 = vpop.f32.mrf.mxu0
  %v1566 = vadd.f32 %v1442, %v1565
  %1567 = vdwg.mxu0
  %1568 = vmatprep.subr.mxu0 0.0
  %1569 = vmatpush1.msra.mxu0 0.0
  %1570 = vmatprep.subr.mxu0 0.0
  %1571 = vmatpush1.msra.mxu0 0.0
  %1572 = vmatprep.subr.mxu0 0.0
  %1573 = vmatpush1.msra.mxu0 0.0
  %1574 = vmatprep.subr.mxu0 0.0
  %1575 = vmatpush1.msra.mxu0 0.0
  %1576 = vmatprep.subr.mxu0 0.0
  %1577 = vmatpush1.msra.mxu0 0.0
  %1578 = vmatprep.subr.mxu0 0.0
  %1579 = vmatpush1.msra.mxu0 0.0
  %1580 = vmatprep.subr.mxu0 0.0
  %1581 = vmatpush1.msra.mxu0 0.0
  %1582 = vmatprep.subr.mxu0 0.0
  %1583 = vmatpush1.msra.mxu0 0.0
  %1584 = vmatprep.subr.mxu0 0.0
  %1585 = vmatpush1.msra.mxu0 0.0
  %1586 = vmatprep.subr.mxu0 0.0
  %1587 = vmatpush1.msra.mxu0 0.0
  %1588 = vmatprep.subr.mxu0 0.0
  %1589 = vmatpush1.msra.mxu0 0.0
  %1590 = vmatprep.subr.mxu0 %v1459
  %1591 = vmatpush1.msra.mxu0 %v1456
  %1592 = vmatprep.subr.mxu0 %v1409
  %1593 = vmatpush1.msra.mxu0 %v1408
  %1594 = vmatprep.subr.mxu0 %v1393
  %1595 = vmatpush1.msra.mxu0 %v1392
  %1596 = vmatprep.subr.mxu0 %v1377
  %1597 = vmatpush1.msra.mxu0 %v1376
  %1598 = vmatprep.subr.mxu0 %v1361
  %1599 = vmatpush1.msra.mxu0 %v1360
  %1600 = vmatprep.subr.mxu0 0.0
  %1601 = vmatpush2.msra.mxu0 0.0
  %1602 = vmatprep.subr.mxu0 0.0
  %1603 = vmatpush2.msra.mxu0 0.0
  %1604 = vmatprep.subr.mxu0 0.0
  %1605 = vmatpush2.msra.mxu0 0.0
  %1606 = vmatprep.subr.mxu0 0.0
  %1607 = vmatpush2.msra.mxu0 0.0
  %1608 = vmatprep.subr.mxu0 0.0
  %1609 = vmatpush2.msra.mxu0 0.0
  %1610 = vmatprep.subr.mxu0 0.0
  %1611 = vmatpush2.msra.mxu0 0.0
  %1612 = vmatprep.subr.mxu0 0.0
  %1613 = vmatpush2.msra.mxu0 0.0
  %1614 = vmatprep.subr.mxu0 0.0
  %1615 = vmatpush2.msra.mxu0 0.0
  %1616 = vmatprep.subr.mxu0 0.0
  %1617 = vmatpush2.msra.mxu0 0.0
  %1618 = vmatprep.subr.mxu0 0.0
  %1619 = vmatpush2.msra.mxu0 0.0
  %1620 = vmatprep.subr.mxu0 0.0
  %1621 = vmatpush2.msra.mxu0 0.0
  %1622 = vmatprep.subr.mxu0 0.0
  %1623 = vmatpush2.msra.mxu0 0.0
  %1624 = vmatprep.subr.mxu0 0.0
  %1625 = vmatpush2.msra.mxu0 0.0
  %1626 = vmatprep.subr.mxu0 0.0
  %1627 = vmatpush2.msra.mxu0 0.0
  %1628 = vmatprep.subr.mxu0 0.0
  %1629 = vmatpush2.msra.mxu0 0.0
  %1630 = vmatprep.subr.mxu0 0.0
  %1631 = vmatpush2.msra.mxu0 0.0
  %1632 = vmatprep.mubr.f32.mxu0 0.0
  %1633 = vmatmul.mubr.f32.gmra.mxu0 %v1446
  %v1634 = vpop.f32.mrf.mxu0
  %v1635 = vadd.f32 %v1442, %v1634
  %v1636 = vpop.f32.mrf.mxu0
  %v1637 = vadd.f32 %v1442, %v1636
  %1638 = vdwg.mxu0
  %1639 = vmatprep.subr.mxu0 0.0
  %1640 = vmatpush1.msra.mxu0 0.0
  %1641 = vmatprep.subr.mxu0 0.0
  %1642 = vmatpush1.msra.mxu0 0.0
  %1643 = vmatprep.subr.mxu0 0.0
  %1644 = vmatpush1.msra.mxu0 0.0
  %1645 = vmatprep.subr.mxu0 0.0
  %1646 = vmatpush1.msra.mxu0 0.0
  %1647 = vmatprep.subr.mxu0 0.0
  %1648 = vmatpush1.msra.mxu0 0.0
  %1649 = vmatprep.subr.mxu0 0.0
  %1650 = vmatpush1.msra.mxu0 0.0
  %1651 = vmatprep.subr.mxu0 0.0
  %1652 = vmatpush1.msra.mxu0 0.0
  %1653 = vmatprep.subr.mxu0 0.0
  %1654 = vmatpush1.msra.mxu0 0.0
  %1655 = vmatprep.subr.mxu0 0.0
  %1656 = vmatpush1.msra.mxu0 0.0
  %1657 = vmatprep.subr.mxu0 0.0
  %1658 = vmatpush1.msra.mxu0 0.0
  %1659 = vmatprep.subr.mxu0 0.0
  %1660 = vmatpush1.msra.mxu0 0.0
  %1661 = vmatprep.subr.mxu0 %v1465
  %1662 = vmatpush1.msra.mxu0 %v1462
  %1663 = vmatprep.subr.mxu0 %v1411
  %1664 = vmatpush1.msra.mxu0 %v1410
  %1665 = vmatprep.subr.mxu0 %v1395
  %1666 = vmatpush1.msra.mxu0 %v1394
  %1667 = vmatprep.subr.mxu0 %v1379
  %1668 = vmatpush1.msra.mxu0 %v1378
  %1669 = vmatprep.subr.mxu0 %v1363
  %1670 = vmatpush1.msra.mxu0 %v1362
  %1671 = vmatprep.subr.mxu0 0.0
  %1672 = vmatpush2.msra.mxu0 0.0
  %1673 = vmatprep.subr.mxu0 0.0
  %1674 = vmatpush2.msra.mxu0 0.0
  %1675 = vmatprep.subr.mxu0 0.0
  %1676 = vmatpush2.msra.mxu0 0.0
  %1677 = vmatprep.subr.mxu0 0.0
  %1678 = vmatpush2.msra.mxu0 0.0
  %1679 = vmatprep.subr.mxu0 0.0
  %1680 = vmatpush2.msra.mxu0 0.0
  %1681 = vmatprep.subr.mxu0 0.0
  %1682 = vmatpush2.msra.mxu0 0.0
  %1683 = vmatprep.subr.mxu0 0.0
  %1684 = vmatpush2.msra.mxu0 0.0
  %1685 = vmatprep.subr.mxu0 0.0
  %1686 = vmatpush2.msra.mxu0 0.0
  %1687 = vmatprep.subr.mxu0 0.0
  %1688 = vmatpush2.msra.mxu0 0.0
  %1689 = vmatprep.subr.mxu0 0.0
  %1690 = vmatpush2.msra.mxu0 0.0
  %1691 = vmatprep.subr.mxu0 0.0
  %1692 = vmatpush2.msra.mxu0 0.0
  %1693 = vmatprep.subr.mxu0 0.0
  %1694 = vmatpush2.msra.mxu0 0.0
  %1695 = vmatprep.subr.mxu0 0.0
  %1696 = vmatpush2.msra.mxu0 0.0
  %1697 = vmatprep.subr.mxu0 0.0
  %1698 = vmatpush2.msra.mxu0 0.0
  %1699 = vmatprep.subr.mxu0 0.0
  %1700 = vmatpush2.msra.mxu0 0.0
  %1701 = vmatprep.subr.mxu0 0.0
  %1702 = vmatpush2.msra.mxu0 0.0
  %1703 = vmatprep.mubr.f32.mxu0 0.0
  %1704 = vmatmul.mubr.f32.gmra.mxu0 %v1446
  %v1705 = vpop.f32.mrf.mxu0
  %v1706 = vadd.f32 %v1442, %v1705
  %v1707 = vpop.f32.mrf.mxu0
  %v1708 = vadd.f32 %v1442, %v1707
  %1709 = vdwg.mxu0
  %1710 = vmatprep.subr.mxu0 0.0
  %1711 = vmatpush1.msra.mxu0 0.0
  %1712 = vmatprep.subr.mxu0 0.0
  %1713 = vmatpush1.msra.mxu0 0.0
  %1714 = vmatprep.subr.mxu0 0.0
  %1715 = vmatpush1.msra.mxu0 0.0
  %1716 = vmatprep.subr.mxu0 0.0
  %1717 = vmatpush1.msra.mxu0 0.0
  %1718 = vmatprep.subr.mxu0 0.0
  %1719 = vmatpush1.msra.mxu0 0.0
  %1720 = vmatprep.subr.mxu0 0.0
  %1721 = vmatpush1.msra.mxu0 0.0
  %1722 = vmatprep.subr.mxu0 0.0
  %1723 = vmatpush1.msra.mxu0 0.0
  %1724 = vmatprep.subr.mxu0 0.0
  %1725 = vmatpush1.msra.mxu0 0.0
  %1726 = vmatprep.subr.mxu0 0.0
  %1727 = vmatpush1.msra.mxu0 0.0
  %1728 = vmatprep.subr.mxu0 0.0
  %1729 = vmatpush1.msra.mxu0 0.0
  %1730 = vmatprep.subr.mxu0 0.0
  %1731 = vmatpush1.msra.mxu0 0.0
  %1732 = vmatprep.subr.mxu0 %v1471
  %1733 = vmatpush1.msra.mxu0 %v1468
  %1734 = vmatprep.subr.mxu0 %v1413
  %1735 = vmatpush1.msra.mxu0 %v1412
  %1736 = vmatprep.subr.mxu0 %v1397
  %1737 = vmatpush1.msra.mxu0 %v1396
  %1738 = vmatprep.subr.mxu0 %v1381
  %1739 = vmatpush1.msra.mxu0 %v1380
  %1740 = vmatprep.subr.mxu0 %v1365
  %1741 = vmatpush1.msra.mxu0 %v1364
  %1742 = vmatprep.subr.mxu0 0.0
  %1743 = vmatpush2.msra.mxu0 0.0
  %1744 = vmatprep.subr.mxu0 0.0
  %1745 = vmatpush2.msra.mxu0 0.0
  %1746 = vmatprep.subr.mxu0 0.0
  %1747 = vmatpush2.msra.mxu0 0.0
  %1748 = vmatprep.subr.mxu0 0.0
  %1749 = vmatpush2.msra.mxu0 0.0
  %1750 = vmatprep.subr.mxu0 0.0
  %1751 = vmatpush2.msra.mxu0 0.0
  %1752 = vmatprep.subr.mxu0 0.0
  %1753 = vmatpush2.msra.mxu0 0.0
  %1754 = vmatprep.subr.mxu0 0.0
  %1755 = vmatpush2.msra.mxu0 0.0
  %1756 = vmatprep.subr.mxu0 0.0
  %1757 = vmatpush2.msra.mxu0 0.0
  %1758 = vmatprep.subr.mxu0 0.0
  %1759 = vmatpush2.msra.mxu0 0.0
  %1760 = vmatprep.subr.mxu0 0.0
  %1761 = vmatpush2.msra.mxu0 0.0
  %1762 = vmatprep.subr.mxu0 0.0
  %1763 = vmatpush2.msra.mxu0 0.0
  %1764 = vmatprep.subr.mxu0 0.0
  %1765 = vmatpush2.msra.mxu0 0.0
  %1766 = vmatprep.subr.mxu0 0.0
  %1767 = vmatpush2.msra.mxu0 0.0
  %1768 = vmatprep.subr.mxu0 0.0
  %1769 = vmatpush2.msra.mxu0 0.0
  %1770 = vmatprep.subr.mxu0 0.0
  %1771 = vmatpush2.msra.mxu0 0.0
  %1772 = vmatprep.subr.mxu0 0.0
  %1773 = vmatpush2.msra.mxu0 0.0
  %1774 = vmatprep.mubr.f32.mxu0 0.0
  %1775 = vmatmul.mubr.f32.gmra.mxu0 %v1446
  %v1776 = vpop.f32.mrf.mxu0
  %v1777 = vadd.f32 %v1442, %v1776
  %v1778 = vpop.f32.mrf.mxu0
  %v1779 = vadd.f32 %v1442, %v1778
  %1780 = vdwg.mxu0
  %1781 = vmatprep.subr.mxu0 0.0
  %1782 = vmatpush1.msra.mxu0 0.0
  %1783 = vmatprep.subr.mxu0 0.0
  %1784 = vmatpush1.msra.mxu0 0.0
  %1785 = vmatprep.subr.mxu0 0.0
  %1786 = vmatpush1.msra.mxu0 0.0
  %1787 = vmatprep.subr.mxu0 0.0
  %1788 = vmatpush1.msra.mxu0 0.0
  %1789 = vmatprep.subr.mxu0 0.0
  %1790 = vmatpush1.msra.mxu0 0.0
  %1791 = vmatprep.subr.mxu0 0.0
  %1792 = vmatpush1.msra.mxu0 0.0
  %1793 = vmatprep.subr.mxu0 0.0
  %1794 = vmatpush1.msra.mxu0 0.0
  %1795 = vmatprep.subr.mxu0 0.0
  %1796 = vmatpush1.msra.mxu0 0.0
  %1797 = vmatprep.subr.mxu0 0.0
  %1798 = vmatpush1.msra.mxu0 0.0
  %1799 = vmatprep.subr.mxu0 0.0
  %1800 = vmatpush1.msra.mxu0 0.0
  %1801 = vmatprep.subr.mxu0 0.0
  %1802 = vmatpush1.msra.mxu0 0.0
  %1803 = vmatprep.subr.mxu0 %v1477
  %1804 = vmatpush1.msra.mxu0 %v1474
  %1805 = vmatprep.subr.mxu0 %v1415
  %1806 = vmatpush1.msra.mxu0 %v1414
  %1807 = vmatprep.subr.mxu0 %v1399
  %1808 = vmatpush1.msra.mxu0 %v1398
  %1809 = vmatprep.subr.mxu0 %v1383
  %1810 = vmatpush1.msra.mxu0 %v1382
  %1811 = vmatprep.subr.mxu0 %v1367
  %1812 = vmatpush1.msra.mxu0 %v1366
  %1813 = vmatprep.subr.mxu0 0.0
  %1814 = vmatpush2.msra.mxu0 0.0
  %1815 = vmatprep.subr.mxu0 0.0
  %1816 = vmatpush2.msra.mxu0 0.0
  %1817 = vmatprep.subr.mxu0 0.0
  %1818 = vmatpush2.msra.mxu0 0.0
  %1819 = vmatprep.subr.mxu0 0.0
  %1820 = vmatpush2.msra.mxu0 0.0
  %1821 = vmatprep.subr.mxu0 0.0
  %1822 = vmatpush2.msra.mxu0 0.0
  %1823 = vmatprep.subr.mxu0 0.0
  %1824 = vmatpush2.msra.mxu0 0.0
  %1825 = vmatprep.subr.mxu0 0.0
  %1826 = vmatpush2.msra.mxu0 0.0
  %1827 = vmatprep.subr.mxu0 0.0
  %1828 = vmatpush2.msra.mxu0 0.0
  %1829 = vmatprep.subr.mxu0 0.0
  %1830 = vmatpush2.msra.mxu0 0.0
  %1831 = vmatprep.subr.mxu0 0.0
  %1832 = vmatpush2.msra.mxu0 0.0
  %1833 = vmatprep.subr.mxu0 0.0
  %1834 = vmatpush2.msra.mxu0 0.0
  %1835 = vmatprep.subr.mxu0 0.0
  %1836 = vmatpush2.msra.mxu0 0.0
  %1837 = vmatprep.subr.mxu0 0.0
  %1838 = vmatpush2.msra.mxu0 0.0
  %1839 = vmatprep.subr.mxu0 0.0
  %1840 = vmatpush2.msra.mxu0 0.0
  %1841 = vmatprep.subr.mxu0 0.0
  %1842 = vmatpush2.msra.mxu0 0.0
  %1843 = vmatprep.subr.mxu0 0.0
  %1844 = vmatpush2.msra.mxu0 0.0
  %1845 = vmatprep.mubr.f32.mxu0 0.0
  %1846 = vmatmul.mubr.f32.gmra.mxu0 %v1446
  %v1847 = vpop.f32.mrf.mxu0
  %v1848 = vadd.f32 %v1442, %v1847
  %v1849 = vpop.f32.mrf.mxu0
  %v1850 = vadd.f32 %v1442, %v1849
  %1851 = vdwg.mxu0
  %1852 = vmatprep.subr.mxu0 0.0
  %1853 = vmatpush1.msra.mxu0 0.0
  %1854 = vmatprep.subr.mxu0 0.0
  %1855 = vmatpush1.msra.mxu0 0.0
  %1856 = vmatprep.subr.mxu0 0.0
  %1857 = vmatpush1.msra.mxu0 0.0
  %1858 = vmatprep.subr.mxu0 0.0
  %1859 = vmatpush1.msra.mxu0 0.0
  %1860 = vmatprep.subr.mxu0 0.0
  %1861 = vmatpush1.msra.mxu0 0.0
  %1862 = vmatprep.subr.mxu0 0.0
  %1863 = vmatpush1.msra.mxu0 0.0
  %1864 = vmatprep.subr.mxu0 0.0
  %1865 = vmatpush1.msra.mxu0 0.0
  %1866 = vmatprep.subr.mxu0 0.0
  %1867 = vmatpush1.msra.mxu0 0.0
  %1868 = vmatprep.subr.mxu0 0.0
  %1869 = vmatpush1.msra.mxu0 0.0
  %1870 = vmatprep.subr.mxu0 0.0
  %1871 = vmatpush1.msra.mxu0 0.0
  %1872 = vmatprep.subr.mxu0 0.0
  %1873 = vmatpush1.msra.mxu0 0.0
  %1874 = vmatprep.subr.mxu0 %v1483
  %1875 = vmatpush1.msra.mxu0 %v1480
  %1876 = vmatprep.subr.mxu0 %v1417
  %1877 = vmatpush1.msra.mxu0 %v1416
  %1878 = vmatprep.subr.mxu0 %v1401
  %1879 = vmatpush1.msra.mxu0 %v1400
  %1880 = vmatprep.subr.mxu0 %v1385
  %1881 = vmatpush1.msra.mxu0 %v1384
  %1882 = vmatprep.subr.mxu0 %v1369
  %1883 = vmatpush1.msra.mxu0 %v1368
  %1884 = vmatprep.subr.mxu0 0.0
  %1885 = vmatpush2.msra.mxu0 0.0
  %1886 = vmatprep.subr.mxu0 0.0
  %1887 = vmatpush2.msra.mxu0 0.0
  %1888 = vmatprep.subr.mxu0 0.0
  %1889 = vmatpush2.msra.mxu0 0.0
  %1890 = vmatprep.subr.mxu0 0.0
  %1891 = vmatpush2.msra.mxu0 0.0
  %1892 = vmatprep.subr.mxu0 0.0
  %1893 = vmatpush2.msra.mxu0 0.0
  %1894 = vmatprep.subr.mxu0 0.0
  %1895 = vmatpush2.msra.mxu0 0.0
  %1896 = vmatprep.subr.mxu0 0.0
  %1897 = vmatpush2.msra.mxu0 0.0
  %1898 = vmatprep.subr.mxu0 0.0
  %1899 = vmatpush2.msra.mxu0 0.0
  %1900 = vmatprep.subr.mxu0 0.0
  %1901 = vmatpush2.msra.mxu0 0.0
  %1902 = vmatprep.subr.mxu0 0.0
  %1903 = vmatpush2.msra.mxu0 0.0
  %1904 = vmatprep.subr.mxu0 0.0
  %1905 = vmatpush2.msra.mxu0 0.0
  %1906 = vmatprep.subr.mxu0 0.0
  %1907 = vmatpush2.msra.mxu0 0.0
  %1908 = vmatprep.subr.mxu0 0.0
  %1909 = vmatpush2.msra.mxu0 0.0
  %1910 = vmatprep.subr.mxu0 0.0
  %1911 = vmatpush2.msra.mxu0 0.0
  %1912 = vmatprep.subr.mxu0 0.0
  %1913 = vmatpush2.msra.mxu0 0.0
  %1914 = vmatprep.subr.mxu0 0.0
  %1915 = vmatpush2.msra.mxu0 0.0
  %1916 = vmatprep.mubr.f32.mxu0 0.0
  %1917 = vmatmul.mubr.f32.gmra.mxu0 %v1446
  %v1918 = vpop.f32.mrf.mxu0
  %v1919 = vadd.f32 %v1442, %v1918
  %v1920 = vpop.f32.mrf.mxu0
  %v1921 = vadd.f32 %v1442, %v1920
  %1922 = vdwg.mxu0
  %1923 = vmatprep.subr.mxu0 0.0
  %1924 = vmatpush1.msra.mxu0 0.0
  %1925 = vmatprep.subr.mxu0 0.0
  %1926 = vmatpush1.msra.mxu0 0.0
  %1927 = vmatprep.subr.mxu0 0.0
  %1928 = vmatpush1.msra.mxu0 0.0
  %1929 = vmatprep.subr.mxu0 0.0
  %1930 = vmatpush1.msra.mxu0 0.0
  %1931 = vmatprep.subr.mxu0 0.0
  %1932 = vmatpush1.msra.mxu0 0.0
  %1933 = vmatprep.subr.mxu0 0.0
  %1934 = vmatpush1.msra.mxu0 0.0
  %1935 = vmatprep.subr.mxu0 0.0
  %1936 = vmatpush1.msra.mxu0 0.0
  %1937 = vmatprep.subr.mxu0 0.0
  %1938 = vmatpush1.msra.mxu0 0.0
  %1939 = vmatprep.subr.mxu0 0.0
  %1940 = vmatpush1.msra.mxu0 0.0
  %1941 = vmatprep.subr.mxu0 0.0
  %1942 = vmatpush1.msra.mxu0 0.0
  %1943 = vmatprep.subr.mxu0 0.0
  %1944 = vmatpush1.msra.mxu0 0.0
  %1945 = vmatprep.subr.mxu0 %v1489
  %1946 = vmatpush1.msra.mxu0 %v1486
  %1947 = vmatprep.subr.mxu0 %v1419
  %1948 = vmatpush1.msra.mxu0 %v1418
  %1949 = vmatprep.subr.mxu0 %v1403
  %1950 = vmatpush1.msra.mxu0 %v1402
  %1951 = vmatprep.subr.mxu0 %v1387
  %1952 = vmatpush1.msra.mxu0 %v1386
  %1953 = vmatprep.subr.mxu0 %v1371
  %1954 = vmatpush1.msra.mxu0 %v1370
  %1955 = vmatprep.subr.mxu0 0.0
  %1956 = vmatpush2.msra.mxu0 0.0
  %1957 = vmatprep.subr.mxu0 0.0
  %1958 = vmatpush2.msra.mxu0 0.0
  %1959 = vmatprep.subr.mxu0 0.0
  %1960 = vmatpush2.msra.mxu0 0.0
  %1961 = vmatprep.subr.mxu0 0.0
  %1962 = vmatpush2.msra.mxu0 0.0
  %1963 = vmatprep.subr.mxu0 0.0
  %1964 = vmatpush2.msra.mxu0 0.0
  %1965 = vmatprep.subr.mxu0 0.0
  %1966 = vmatpush2.msra.mxu0 0.0
  %1967 = vmatprep.subr.mxu0 0.0
  %1968 = vmatpush2.msra.mxu0 0.0
  %1969 = vmatprep.subr.mxu0 0.0
  %1970 = vmatpush2.msra.mxu0 0.0
  %1971 = vmatprep.subr.mxu0 0.0
  %1972 = vmatpush2.msra.mxu0 0.0
  %1973 = vmatprep.subr.mxu0 0.0
  %1974 = vmatpush2.msra.mxu0 0.0
  %1975 = vmatprep.subr.mxu0 0.0
  %1976 = vmatpush2.msra.mxu0 0.0
  %1977 = vmatprep.subr.mxu0 0.0
  %1978 = vmatpush2.msra.mxu0 0.0
  %1979 = vmatprep.subr.mxu0 0.0
  %1980 = vmatpush2.msra.mxu0 0.0
  %1981 = vmatprep.subr.mxu0 0.0
  %1982 = vmatpush2.msra.mxu0 0.0
  %1983 = vmatprep.subr.mxu0 0.0
  %1984 = vmatpush2.msra.mxu0 0.0
  %1985 = vmatprep.subr.mxu0 0.0
  %1986 = vmatpush2.msra.mxu0 0.0
  %1987 = vmatprep.mubr.f32.mxu0 0.0
  %1988 = vmatmul.mubr.f32.gmra.mxu0 %v1446
  %v1989 = vpop.f32.mrf.mxu0
  %v1990 = vadd.f32 %v1442, %v1989
  %v1991 = vpop.f32.mrf.mxu0
  %v1992 = vadd.f32 %v1442, %v1991
  %1993 = vdwg.mxu0
  %1994 = vmatprep.subr.mxu0 0.0
  %1995 = vmatpush1.msra.mxu0 0.0
  %1996 = vmatprep.subr.mxu0 0.0
  %1997 = vmatpush1.msra.mxu0 0.0
  %1998 = vmatprep.subr.mxu0 0.0
  %1999 = vmatpush1.msra.mxu0 0.0
  %2000 = vmatprep.subr.mxu0 0.0
  %2001 = vmatpush1.msra.mxu0 0.0
  %2002 = vmatprep.subr.mxu0 0.0
  %2003 = vmatpush1.msra.mxu0 0.0
  %2004 = vmatprep.subr.mxu0 0.0
  %2005 = vmatpush1.msra.mxu0 0.0
  %2006 = vmatprep.subr.mxu0 0.0
  %2007 = vmatpush1.msra.mxu0 0.0
  %2008 = vmatprep.subr.mxu0 0.0
  %2009 = vmatpush1.msra.mxu0 0.0
  %2010 = vmatprep.subr.mxu0 0.0
  %2011 = vmatpush1.msra.mxu0 0.0
  %2012 = vmatprep.subr.mxu0 0.0
  %2013 = vmatpush1.msra.mxu0 0.0
  %2014 = vmatprep.subr.mxu0 0.0
  %2015 = vmatpush1.msra.mxu0 0.0
  %2016 = vmatprep.subr.mxu0 %v1495
  %2017 = vmatpush1.msra.mxu0 %v1492
  %2018 = vmatprep.subr.mxu0 %v1421
  %2019 = vmatpush1.msra.mxu0 %v1420
  %2020 = vmatprep.subr.mxu0 %v1405
  %2021 = vmatpush1.msra.mxu0 %v1404
  %2022 = vmatprep.subr.mxu0 %v1389
  %2023 = vmatpush1.msra.mxu0 %v1388
  %2024 = vmatprep.subr.mxu0 %v1373
  %2025 = vmatpush1.msra.mxu0 %v1372
  %2026 = vmatprep.subr.mxu0 0.0
  %2027 = vmatpush2.msra.mxu0 0.0
  %2028 = vmatprep.subr.mxu0 0.0
  %2029 = vmatpush2.msra.mxu0 0.0
  %2030 = vmatprep.subr.mxu0 0.0
  %2031 = vmatpush2.msra.mxu0 0.0
  %2032 = vmatprep.subr.mxu0 0.0
  %2033 = vmatpush2.msra.mxu0 0.0
  %2034 = vmatprep.subr.mxu0 0.0
  %2035 = vmatpush2.msra.mxu0 0.0
  %2036 = vmatprep.subr.mxu0 0.0
  %2037 = vmatpush2.msra.mxu0 0.0
  %2038 = vmatprep.subr.mxu0 0.0
  %2039 = vmatpush2.msra.mxu0 0.0
  %2040 = vmatprep.subr.mxu0 0.0
  %2041 = vmatpush2.msra.mxu0 0.0
  %2042 = vmatprep.subr.mxu0 0.0
  %2043 = vmatpush2.msra.mxu0 0.0
  %2044 = vmatprep.subr.mxu0 0.0
  %2045 = vmatpush2.msra.mxu0 0.0
  %2046 = vmatprep.subr.mxu0 0.0
  %2047 = vmatpush2.msra.mxu0 0.0
  %2048 = vmatprep.subr.mxu0 0.0
  %2049 = vmatpush2.msra.mxu0 0.0
  %2050 = vmatprep.subr.mxu0 0.0
  %2051 = vmatpush2.msra.mxu0 0.0
  %2052 = vmatprep.subr.mxu0 0.0
  %2053 = vmatpush2.msra.mxu0 0.0
  %2054 = vmatprep.subr.mxu0 0.0
  %2055 = vmatpush2.msra.mxu0 0.0
  %2056 = vmatprep.subr.mxu0 0.0
  %2057 = vmatpush2.msra.mxu0 0.0
  %2058 = vmatprep.mubr.f32.mxu0 0.0
  %2059 = vmatmul.mubr.f32.gmra.mxu0 %v1446
  %v2060 = vpop.f32.mrf.mxu0
  %v2061 = vadd.f32 %v1442, %v2060
  %v2062 = vpop.f32.mrf.mxu0
  %v2063 = vadd.f32 %v1442, %v2062
  %2064 = vdwg.mxu0
  %v2065 = vmul.f32 %v1564, 0.5
  %v2066 = vmul.f32 %v1566, 0.5
  %v2067 = vmul.f32 %v1635, 0.5
  %v2068 = vmul.f32 %v1637, 0.5
  %v2069 = vmul.f32 %v1706, 0.5
  %v2070 = vmul.f32 %v1708, 0.5
  %v2071 = vmul.f32 %v1777, 0.5
  %v2072 = vmul.f32 %v1779, 0.5
  %v2073 = vmul.f32 %v1848, 0.5
  %v2074 = vmul.f32 %v1850, 0.5
  %v2075 = vmul.f32 %v1919, 0.5
  %v2076 = vmul.f32 %v1921, 0.5
  %v2077 = vmul.f32 %v1990, 0.5
  %v2078 = vmul.f32 %v1992, 0.5
  %v2079 = vmul.f32 %v2061, 0.5
  %v2080 = vmul.f32 %v2063, 0.5
  %v2081 = vmul.f32 %v1564, 0.70710677
  %v2082 = vmul.f32 %v1566, 0.70710677
  %v2083 = vmul.f32 %v1635, 0.70710677
  %v2084 = vmul.f32 %v1637, 0.70710677
  %v2085 = vmul.f32 %v1706, 0.70710677
  %v2086 = vmul.f32 %v1708, 0.70710677
  %v2087 = vmul.f32 %v1777, 0.70710677
  %v2088 = vmul.f32 %v1779, 0.70710677
  %v2089 = vmul.f32 %v1848, 0.70710677
  %v2090 = vmul.f32 %v1850, 0.70710677
  %v2091 = vmul.f32 %v1919, 0.70710677
  %v2092 = vmul.f32 %v1921, 0.70710677
  %v2093 = vmul.f32 %v1990, 0.70710677
  %v2094 = vmul.f32 %v1992, 0.70710677
  %v2095 = vmul.f32 %v2061, 0.70710677
  %v2096 = vmul.f32 %v2063, 0.70710677
  %v2097 = vand.u32 2147483647, %v2081
  %v2098 = vand.u32 2147483647, %v2082
  %v2099 = vand.u32 2147483647, %v2083
  %v2100 = vand.u32 2147483647, %v2084
  %v2101 = vand.u32 2147483647, %v2085
  %v2102 = vand.u32 2147483647, %v2086
  %v2103 = vand.u32 2147483647, %v2087
  %v2104 = vand.u32 2147483647, %v2088
  %v2105 = vand.u32 2147483647, %v2089
  %v2106 = vand.u32 2147483647, %v2090
  %v2107 = vand.u32 2147483647, %v2091
  %v2108 = vand.u32 2147483647, %v2092
  %v2109 = vand.u32 2147483647, %v2093
  %v2110 = vand.u32 2147483647, %v2094
  %v2111 = vand.u32 2147483647, %v2095
  %v2112 = vand.u32 2147483647, %v2096
  %v2113 = vmul.f32 %v2097, 0.3275911
  %v2114 = vmul.f32 %v2098, 0.3275911
  %v2115 = vmul.f32 %v2099, 0.3275911
  %v2116 = vmul.f32 %v2100, 0.3275911
  %v2117 = vmul.f32 %v2101, 0.3275911
  %v2118 = vmul.f32 %v2102, 0.3275911
  %v2119 = vmul.f32 %v2103, 0.3275911
  %v2120 = vmul.f32 %v2104, 0.3275911
  %v2121 = vmul.f32 %v2105, 0.3275911
  %v2122 = vmul.f32 %v2106, 0.3275911
  %v2123 = vmul.f32 %v2107, 0.3275911
  %v2124 = vmul.f32 %v2108, 0.3275911
  %v2125 = vmul.f32 %v2109, 0.3275911
  %v2126 = vmul.f32 %v2110, 0.3275911
  %v2127 = vmul.f32 %v2111, 0.3275911
  %v2128 = vmul.f32 %v2112, 0.3275911
  %v2129 = vadd.f32 %v2113, 1.0
  %v2130 = vadd.f32 %v2114, 1.0
  %v2131 = vadd.f32 %v2115, 1.0
  %v2132 = vadd.f32 %v2116, 1.0
  %v2133 = vadd.f32 %v2117, 1.0
  %v2134 = vadd.f32 %v2118, 1.0
  %v2135 = vadd.f32 %v2119, 1.0
  %v2136 = vadd.f32 %v2120, 1.0
  %v2137 = vadd.f32 %v2121, 1.0
  %v2138 = vadd.f32 %v2122, 1.0
  %v2139 = vadd.f32 %v2123, 1.0
  %v2140 = vadd.f32 %v2124, 1.0
  %v2141 = vadd.f32 %v2125, 1.0
  %v2142 = vadd.f32 %v2126, 1.0
  %v2143 = vadd.f32 %v2127, 1.0
  %v2144 = vadd.f32 %v2128, 1.0
  %v2145 = vrcp.pop %v2129
  %v2146 = vrcp.pop %v2130
  %v2147 = vrcp.pop %v2131
  %v2148 = vrcp.pop %v2132
  %v2149 = vrcp.pop %v2133
  %v2150 = vrcp.pop %v2134
  %v2151 = vrcp.pop %v2135
  %v2152 = vrcp.pop %v2136
  %v2153 = vrcp.pop %v2137
  %v2154 = vrcp.pop %v2138
  %v2155 = vrcp.pop %v2139
  %v2156 = vrcp.pop %v2140
  %v2157 = vrcp.pop %v2141
  %v2158 = vrcp.pop %v2142
  %v2159 = vrcp.pop %v2143
  %v2160 = vrcp.pop %v2144
  %v2161 = vmul.f32 %v2129, %v2145
  %v2162 = vmul.f32 %v2130, %v2146
  %v2163 = vmul.f32 %v2131, %v2147
  %v2164 = vmul.f32 %v2132, %v2148
  %v2165 = vmul.f32 %v2133, %v2149
  %v2166 = vmul.f32 %v2134, %v2150
  %v2167 = vmul.f32 %v2135, %v2151
  %v2168 = vmul.f32 %v2136, %v2152
  %v2169 = vmul.f32 %v2137, %v2153
  %v2170 = vmul.f32 %v2138, %v2154
  %v2171 = vmul.f32 %v2139, %v2155
  %v2172 = vmul.f32 %v2140, %v2156
  %v2173 = vmul.f32 %v2141, %v2157
  %v2174 = vmul.f32 %v2142, %v2158
  %v2175 = vmul.f32 %v2143, %v2159
  %v2176 = vmul.f32 %v2144, %v2160
  %v2177 = vsub.f32 2.0, %v2161
  %v2178 = vsub.f32 2.0, %v2162
  %v2179 = vsub.f32 2.0, %v2163
  %v2180 = vsub.f32 2.0, %v2164
  %v2181 = vsub.f32 2.0, %v2165
  %v2182 = vsub.f32 2.0, %v2166
  %v2183 = vsub.f32 2.0, %v2167
  %v2184 = vsub.f32 2.0, %v2168
  %v2185 = vsub.f32 2.0, %v2169
  %v2186 = vsub.f32 2.0, %v2170
  %v2187 = vsub.f32 2.0, %v2171
  %v2188 = vsub.f32 2.0, %v2172
  %v2189 = vsub.f32 2.0, %v2173
  %v2190 = vsub.f32 2.0, %v2174
  %v2191 = vsub.f32 2.0, %v2175
  %v2192 = vsub.f32 2.0, %v2176
  %v2193 = vmul.f32 %v2145, %v2177
  %v2194 = vmul.f32 %v2146, %v2178
  %v2195 = vmul.f32 %v2147, %v2179
  %v2196 = vmul.f32 %v2148, %v2180
  %v2197 = vmul.f32 %v2149, %v2181
  %v2198 = vmul.f32 %v2150, %v2182
  %v2199 = vmul.f32 %v2151, %v2183
  %v2200 = vmul.f32 %v2152, %v2184
  %v2201 = vmul.f32 %v2153, %v2185
  %v2202 = vmul.f32 %v2154, %v2186
  %v2203 = vmul.f32 %v2155, %v2187
  %v2204 = vmul.f32 %v2156, %v2188
  %v2205 = vmul.f32 %v2157, %v2189
  %v2206 = vmul.f32 %v2158, %v2190
  %v2207 = vmul.f32 %v2159, %v2191
  %v2208 = vmul.f32 %v2160, %v2192
  %v2209 = vmul.f32 %v2193, 1.0614054
  %v2210 = vmul.f32 %v2194, 1.0614054
  %v2211 = vmul.f32 %v2195, 1.0614054
  %v2212 = vmul.f32 %v2196, 1.0614054
  %v2213 = vmul.f32 %v2197, 1.0614054
  %v2214 = vmul.f32 %v2198, 1.0614054
  %v2215 = vmul.f32 %v2199, 1.0614054
  %v2216 = vmul.f32 %v2200, 1.0614054
  %v2217 = vmul.f32 %v2201, 1.0614054
  %v2218 = vmul.f32 %v2202, 1.0614054
  %v2219 = vmul.f32 %v2203, 1.0614054
  %v2220 = vmul.f32 %v2204, 1.0614054
  %v2221 = vmul.f32 %v2205, 1.0614054
  %v2222 = vmul.f32 %v2206, 1.0614054
  %v2223 = vmul.f32 %v2207, 1.0614054
  %v2224 = vmul.f32 %v2208, 1.0614054
  %v2225 = vadd.f32 %v2209, -1.4531521
  %v2226 = vadd.f32 %v2210, -1.4531521
  %v2227 = vadd.f32 %v2211, -1.4531521
  %v2228 = vadd.f32 %v2212, -1.4531521
  %v2229 = vadd.f32 %v2213, -1.4531521
  %v2230 = vadd.f32 %v2214, -1.4531521
  %v2231 = vadd.f32 %v2215, -1.4531521
  %v2232 = vadd.f32 %v2216, -1.4531521
  %v2233 = vadd.f32 %v2217, -1.4531521
  %v2234 = vadd.f32 %v2218, -1.4531521
  %v2235 = vadd.f32 %v2219, -1.4531521
  %v2236 = vadd.f32 %v2220, -1.4531521
  %v2237 = vadd.f32 %v2221, -1.4531521
  %v2238 = vadd.f32 %v2222, -1.4531521
  %v2239 = vadd.f32 %v2223, -1.4531521
  %v2240 = vadd.f32 %v2224, -1.4531521
  %v2241 = vmul.f32 %v2193, %v2225
  %v2242 = vmul.f32 %v2194, %v2226
  %v2243 = vmul.f32 %v2195, %v2227
  %v2244 = vmul.f32 %v2196, %v2228
  %v2245 = vmul.f32 %v2197, %v2229
  %v2246 = vmul.f32 %v2198, %v2230
  %v2247 = vmul.f32 %v2199, %v2231
  %v2248 = vmul.f32 %v2200, %v2232
  %v2249 = vmul.f32 %v2201, %v2233
  %v2250 = vmul.f32 %v2202, %v2234
  %v2251 = vmul.f32 %v2203, %v2235
  %v2252 = vmul.f32 %v2204, %v2236
  %v2253 = vmul.f32 %v2205, %v2237
  %v2254 = vmul.f32 %v2206, %v2238
  %v2255 = vmul.f32 %v2207, %v2239
  %v2256 = vmul.f32 %v2208, %v2240
  %v2257 = vadd.f32 %v2241, 1.4214138
  %v2258 = vadd.f32 %v2242, 1.4214138
  %v2259 = vadd.f32 %v2243, 1.4214138
  %v2260 = vadd.f32 %v2244, 1.4214138
  %v2261 = vadd.f32 %v2245, 1.4214138
  %v2262 = vadd.f32 %v2246, 1.4214138
  %v2263 = vadd.f32 %v2247, 1.4214138
  %v2264 = vadd.f32 %v2248, 1.4214138
  %v2265 = vadd.f32 %v2249, 1.4214138
  %v2266 = vadd.f32 %v2250, 1.4214138
  %v2267 = vadd.f32 %v2251, 1.4214138
  %v2268 = vadd.f32 %v2252, 1.4214138
  %v2269 = vadd.f32 %v2253, 1.4214138
  %v2270 = vadd.f32 %v2254, 1.4214138
  %v2271 = vadd.f32 %v2255, 1.4214138
  %v2272 = vadd.f32 %v2256, 1.4214138
  %v2273 = vmul.f32 %v2193, %v2257
  %v2274 = vmul.f32 %v2194, %v2258
  %v2275 = vmul.f32 %v2195, %v2259
  %v2276 = vmul.f32 %v2196, %v2260
  %v2277 = vmul.f32 %v2197, %v2261
  %v2278 = vmul.f32 %v2198, %v2262
  %v2279 = vmul.f32 %v2199, %v2263
  %v2280 = vmul.f32 %v2200, %v2264
  %v2281 = vmul.f32 %v2201, %v2265
  %v2282 = vmul.f32 %v2202, %v2266
  %v2283 = vmul.f32 %v2203, %v2267
  %v2284 = vmul.f32 %v2204, %v2268
  %v2285 = vmul.f32 %v2205, %v2269
  %v2286 = vmul.f32 %v2206, %v2270
  %v2287 = vmul.f32 %v2207, %v2271
  %v2288 = vmul.f32 %v2208, %v2272
  %v2289 = vadd.f32 %v2273, -0.28449672
  %v2290 = vadd.f32 %v2274, -0.28449672
  %v2291 = vadd.f32 %v2275, -0.28449672
  %v2292 = vadd.f32 %v2276, -0.28449672
  %v2293 = vadd.f32 %v2277, -0.28449672
  %v2294 = vadd.f32 %v2278, -0.28449672
  %v2295 = vadd.f32 %v2279, -0.28449672
  %v2296 = vadd.f32 %v2280, -0.28449672
  %v2297 = vadd.f32 %v2281, -0.28449672
  %v2298 = vadd.f32 %v2282, -0.28449672
  %v2299 = vadd.f32 %v2283, -0.28449672
  %v2300 = vadd.f32 %v2284, -0.28449672
  %v2301 = vadd.f32 %v2285, -0.28449672
  %v2302 = vadd.f32 %v2286, -0.28449672
  %v2303 = vadd.f32 %v2287, -0.28449672
  %v2304 = vadd.f32 %v2288, -0.28449672
  %v2305 = vmul.f32 %v2193, %v2289
  %v2306 = vmul.f32 %v2194, %v2290
  %v2307 = vmul.f32 %v2195, %v2291
  %v2308 = vmul.f32 %v2196, %v2292
  %v2309 = vmul.f32 %v2197, %v2293
  %v2310 = vmul.f32 %v2198, %v2294
  %v2311 = vmul.f32 %v2199, %v2295
  %v2312 = vmul.f32 %v2200, %v2296
  %v2313 = vmul.f32 %v2201, %v2297
  %v2314 = vmul.f32 %v2202, %v2298
  %v2315 = vmul.f32 %v2203, %v2299
  %v2316 = vmul.f32 %v2204, %v2300
  %v2317 = vmul.f32 %v2205, %v2301
  %v2318 = vmul.f32 %v2206, %v2302
  %v2319 = vmul.f32 %v2207, %v2303
  %v2320 = vmul.f32 %v2208, %v2304
  %v2321 = vadd.f32 %v2305, 0.2548296
  %v2322 = vadd.f32 %v2306, 0.2548296
  %v2323 = vadd.f32 %v2307, 0.2548296
  %v2324 = vadd.f32 %v2308, 0.2548296
  %v2325 = vadd.f32 %v2309, 0.2548296
  %v2326 = vadd.f32 %v2310, 0.2548296
  %v2327 = vadd.f32 %v2311, 0.2548296
  %v2328 = vadd.f32 %v2312, 0.2548296
  %v2329 = vadd.f32 %v2313, 0.2548296
  %v2330 = vadd.f32 %v2314, 0.2548296
  %v2331 = vadd.f32 %v2315, 0.2548296
  %v2332 = vadd.f32 %v2316, 0.2548296
  %v2333 = vadd.f32 %v2317, 0.2548296
  %v2334 = vadd.f32 %v2318, 0.2548296
  %v2335 = vadd.f32 %v2319, 0.2548296
  %v2336 = vadd.f32 %v2320, 0.2548296
  %v2337 = vmul.f32 %v2193, %v2321
  %v2338 = vmul.f32 %v2194, %v2322
  %v2339 = vmul.f32 %v2195, %v2323
  %v2340 = vmul.f32 %v2196, %v2324
  %v2341 = vmul.f32 %v2197, %v2325
  %v2342 = vmul.f32 %v2198, %v2326
  %v2343 = vmul.f32 %v2199, %v2327
  %v2344 = vmul.f32 %v2200, %v2328
  %v2345 = vmul.f32 %v2201, %v2329
  %v2346 = vmul.f32 %v2202, %v2330
  %v2347 = vmul.f32 %v2203, %v2331
  %v2348 = vmul.f32 %v2204, %v2332
  %v2349 = vmul.f32 %v2205, %v2333
  %v2350 = vmul.f32 %v2206, %v2334
  %v2351 = vmul.f32 %v2207, %v2335
  %v2352 = vmul.f32 %v2208, %v2336
  %v2353 = vsub.f32 0.0, %v2097
  %v2354 = vsub.f32 0.0, %v2098
  %v2355 = vsub.f32 0.0, %v2099
  %v2356 = vsub.f32 0.0, %v2100
  %v2357 = vsub.f32 0.0, %v2101
  %v2358 = vsub.f32 0.0, %v2102
  %v2359 = vsub.f32 0.0, %v2103
  %v2360 = vsub.f32 0.0, %v2104
  %v2361 = vsub.f32 0.0, %v2105
  %v2362 = vsub.f32 0.0, %v2106
  %v2363 = vsub.f32 0.0, %v2107
  %v2364 = vsub.f32 0.0, %v2108
  %v2365 = vsub.f32 0.0, %v2109
  %v2366 = vsub.f32 0.0, %v2110
  %v2367 = vsub.f32 0.0, %v2111
  %v2368 = vsub.f32 0.0, %v2112
  %v2369 = vmul.f32 %v2353, %v2097
  %v2370 = vmul.f32 %v2354, %v2098
  %v2371 = vmul.f32 %v2355, %v2099
  %v2372 = vmul.f32 %v2356, %v2100
  %v2373 = vmul.f32 %v2357, %v2101
  %v2374 = vmul.f32 %v2358, %v2102
  %v2375 = vmul.f32 %v2359, %v2103
  %v2376 = vmul.f32 %v2360, %v2104
  %v2377 = vmul.f32 %v2361, %v2105
  %v2378 = vmul.f32 %v2362, %v2106
  %v2379 = vmul.f32 %v2363, %v2107
  %v2380 = vmul.f32 %v2364, %v2108
  %v2381 = vmul.f32 %v2365, %v2109
  %v2382 = vmul.f32 %v2366, %v2110
  %v2383 = vmul.f32 %v2367, %v2111
  %v2384 = vmul.f32 %v2368, %v2112
  %v2385 = vmul.f32 %v2369, 1.442695
  %v2386 = vpow.pop %v2385
  %v2387 = vmul.f32 %v2370, 1.442695
  %v2388 = vpow.pop %v2387
  %v2389 = vmul.f32 %v2371, 1.442695
  %v2390 = vpow.pop %v2389
  %v2391 = vmul.f32 %v2372, 1.442695
  %v2392 = vpow.pop %v2391
  %v2393 = vmul.f32 %v2373, 1.442695
  %v2394 = vpow.pop %v2393
  %v2395 = vmul.f32 %v2374, 1.442695
  %v2396 = vpow.pop %v2395
  %v2397 = vmul.f32 %v2375, 1.442695
  %v2398 = vpow.pop %v2397
  %v2399 = vmul.f32 %v2376, 1.442695
  %v2400 = vpow.pop %v2399
  %v2401 = vmul.f32 %v2377, 1.442695
  %v2402 = vpow.pop %v2401
  %v2403 = vmul.f32 %v2378, 1.442695
  %v2404 = vpow.pop %v2403
  %v2405 = vmul.f32 %v2379, 1.442695
  %v2406 = vpow.pop %v2405
  %v2407 = vmul.f32 %v2380, 1.442695
  %v2408 = vpow.pop %v2407
  %v2409 = vmul.f32 %v2381, 1.442695
  %v2410 = vpow.pop %v2409
  %v2411 = vmul.f32 %v2382, 1.442695
  %v2412 = vpow.pop %v2411
  %v2413 = vmul.f32 %v2383, 1.442695
  %v2414 = vpow.pop %v2413
  %v2415 = vmul.f32 %v2384, 1.442695
  %v2416 = vpow.pop %v2415
  %v2417 = vmul.f32 %v2337, %v2386
  %v2418 = vmul.f32 %v2338, %v2388
  %v2419 = vmul.f32 %v2339, %v2390
  %v2420 = vmul.f32 %v2340, %v2392
  %v2421 = vmul.f32 %v2341, %v2394
  %v2422 = vmul.f32 %v2342, %v2396
  %v2423 = vmul.f32 %v2343, %v2398
  %v2424 = vmul.f32 %v2344, %v2400
  %v2425 = vmul.f32 %v2345, %v2402
  %v2426 = vmul.f32 %v2346, %v2404
  %v2427 = vmul.f32 %v2347, %v2406
  %v2428 = vmul.f32 %v2348, %v2408
  %v2429 = vmul.f32 %v2349, %v2410
  %v2430 = vmul.f32 %v2350, %v2412
  %v2431 = vmul.f32 %v2351, %v2414
  %v2432 = vmul.f32 %v2352, %v2416
  %v2433 = vsub.f32 1.0, %v2417
  %v2434 = vsub.f32 1.0, %v2418
  %v2435 = vsub.f32 1.0, %v2419
  %v2436 = vsub.f32 1.0, %v2420
  %v2437 = vsub.f32 1.0, %v2421
  %v2438 = vsub.f32 1.0, %v2422
  %v2439 = vsub.f32 1.0, %v2423
  %v2440 = vsub.f32 1.0, %v2424
  %v2441 = vsub.f32 1.0, %v2425
  %v2442 = vsub.f32 1.0, %v2426
  %v2443 = vsub.f32 1.0, %v2427
  %v2444 = vsub.f32 1.0, %v2428
  %v2445 = vsub.f32 1.0, %v2429
  %v2446 = vsub.f32 1.0, %v2430
  %v2447 = vsub.f32 1.0, %v2431
  %v2448 = vsub.f32 1.0, %v2432
  %vm2449 = vcmp.lt.f32.partialorder %v2081, 0.0
  %vm2450 = vcmp.lt.f32.partialorder %v2082, 0.0
  %vm2451 = vcmp.lt.f32.partialorder %v2083, 0.0
  %vm2452 = vcmp.lt.f32.partialorder %v2084, 0.0
  %vm2453 = vcmp.lt.f32.partialorder %v2085, 0.0
  %vm2454 = vcmp.lt.f32.partialorder %v2086, 0.0
  %vm2455 = vcmp.lt.f32.partialorder %v2087, 0.0
  %vm2456 = vcmp.lt.f32.partialorder %v2088, 0.0
  %vm2457 = vcmp.lt.f32.partialorder %v2089, 0.0
  %vm2458 = vcmp.lt.f32.partialorder %v2090, 0.0
  %vm2459 = vcmp.lt.f32.partialorder %v2091, 0.0
  %vm2460 = vcmp.lt.f32.partialorder %v2092, 0.0
  %vm2461 = vcmp.lt.f32.partialorder %v2093, 0.0
  %vm2462 = vcmp.lt.f32.partialorder %v2094, 0.0
  %vm2463 = vcmp.lt.f32.partialorder %v2095, 0.0
  %vm2464 = vcmp.lt.f32.partialorder %v2096, 0.0
  %v2465 = vsub.f32 0.0, %v2433
  %v2466 = vsub.f32 0.0, %v2434
  %v2467 = vsub.f32 0.0, %v2435
  %v2468 = vsub.f32 0.0, %v2436
  %v2469 = vsub.f32 0.0, %v2437
  %v2470 = vsub.f32 0.0, %v2438
  %v2471 = vsub.f32 0.0, %v2439
  %v2472 = vsub.f32 0.0, %v2440
  %v2473 = vsub.f32 0.0, %v2441
  %v2474 = vsub.f32 0.0, %v2442
  %v2475 = vsub.f32 0.0, %v2443
  %v2476 = vsub.f32 0.0, %v2444
  %v2477 = vsub.f32 0.0, %v2445
  %v2478 = vsub.f32 0.0, %v2446
  %v2479 = vsub.f32 0.0, %v2447
  %v2480 = vsub.f32 0.0, %v2448
  %v2481 = vsel %vm2449, %v2465, %v2433
  %v2482 = vsel %vm2450, %v2466, %v2434
  %v2483 = vsel %vm2451, %v2467, %v2435
  %v2484 = vsel %vm2452, %v2468, %v2436
  %v2485 = vsel %vm2453, %v2469, %v2437
  %v2486 = vsel %vm2454, %v2470, %v2438
  %v2487 = vsel %vm2455, %v2471, %v2439
  %v2488 = vsel %vm2456, %v2472, %v2440
  %v2489 = vsel %vm2457, %v2473, %v2441
  %v2490 = vsel %vm2458, %v2474, %v2442
  %v2491 = vsel %vm2459, %v2475, %v2443
  %v2492 = vsel %vm2460, %v2476, %v2444
  %v2493 = vsel %vm2461, %v2477, %v2445
  %v2494 = vsel %vm2462, %v2478, %v2446
  %v2495 = vsel %vm2463, %v2479, %v2447
  %v2496 = vsel %vm2464, %v2480, %v2448
  %v2497 = vadd.f32 %v2481, 1.0
  %v2498 = vadd.f32 %v2482, 1.0
  %v2499 = vadd.f32 %v2483, 1.0
  %v2500 = vadd.f32 %v2484, 1.0
  %v2501 = vadd.f32 %v2485, 1.0
  %v2502 = vadd.f32 %v2486, 1.0
  %v2503 = vadd.f32 %v2487, 1.0
  %v2504 = vadd.f32 %v2488, 1.0
  %v2505 = vadd.f32 %v2489, 1.0
  %v2506 = vadd.f32 %v2490, 1.0
  %v2507 = vadd.f32 %v2491, 1.0
  %v2508 = vadd.f32 %v2492, 1.0
  %v2509 = vadd.f32 %v2493, 1.0
  %v2510 = vadd.f32 %v2494, 1.0
  %v2511 = vadd.f32 %v2495, 1.0
  %v2512 = vadd.f32 %v2496, 1.0
  %v2513 = vmul.f32 %v2065, %v2497
  %v2514 = vmul.f32 %v2066, %v2498
  %v2515 = vmul.f32 %v2067, %v2499
  %v2516 = vmul.f32 %v2068, %v2500
  %v2517 = vmul.f32 %v2069, %v2501
  %v2518 = vmul.f32 %v2070, %v2502
  %v2519 = vmul.f32 %v2071, %v2503
  %v2520 = vmul.f32 %v2072, %v2504
  %v2521 = vmul.f32 %v2073, %v2505
  %v2522 = vmul.f32 %v2074, %v2506
  %v2523 = vmul.f32 %v2075, %v2507
  %v2524 = vmul.f32 %v2076, %v2508
  %v2525 = vmul.f32 %v2077, %v2509
  %v2526 = vmul.f32 %v2078, %v2510
  %v2527 = vmul.f32 %v2079, %v2511
  %v2528 = vmul.f32 %v2080, %v2512
  %2529 = vrot.lane.b32.xlu0 %v2513, 33
  %v2530 = vpop.permute.xlu0 %2529
  %2531 = vrot.lane.b32.xlu0 %v2514, 33
  %v2532 = vpop.permute.xlu0 %2531
  %2533 = vrot.lane.b32.xlu0 %v2515, 33
  %v2534 = vpop.permute.xlu0 %2533
  %2535 = vrot.lane.b32.xlu0 %v2516, 33
  %v2536 = vpop.permute.xlu0 %2535
  %2537 = vrot.lane.b32.xlu0 %v2517, 33
  %v2538 = vpop.permute.xlu0 %2537
  %2539 = vrot.lane.b32.xlu0 %v2518, 33
  %v2540 = vpop.permute.xlu0 %2539
  %2541 = vrot.lane.b32.xlu0 %v2519, 33
  %v2542 = vpop.permute.xlu0 %2541
  %2543 = vrot.lane.b32.xlu0 %v2520, 33
  %v2544 = vpop.permute.xlu0 %2543
  %2545 = vrot.lane.b32.xlu0 %v2521, 33
  %v2546 = vpop.permute.xlu0 %2545
  %2547 = vrot.lane.b32.xlu0 %v2522, 33
  %v2548 = vpop.permute.xlu0 %2547
  %2549 = vrot.lane.b32.xlu0 %v2523, 33
  %v2550 = vpop.permute.xlu0 %2549
  %2551 = vrot.lane.b32.xlu0 %v2524, 33
  %v2552 = vpop.permute.xlu0 %2551
  %2553 = vrot.lane.b32.xlu0 %v2525, 33
  %v2554 = vpop.permute.xlu0 %2553
  %2555 = vrot.lane.b32.xlu0 %v2526, 33
  %v2556 = vpop.permute.xlu0 %2555
  %2557 = vrot.lane.b32.xlu0 %v2527, 33
  %v2558 = vpop.permute.xlu0 %2557
  %2559 = vrot.lane.b32.xlu0 %v2528, 33
  %v2560 = vpop.permute.xlu0 %2559
  %v2561 = vsel %vm277, %v2558, %v2560
  %v2562 = vsel %vm277, %v2556, %v2558
  %v2563 = vsel %vm277, %v2554, %v2556
  %v2564 = vsel %vm277, %v2552, %v2554
  %v2565 = vsel %vm277, %v2550, %v2552
  %v2566 = vsel %vm277, %v2548, %v2550
  %v2567 = vsel %vm277, %v2546, %v2548
  %v2568 = vsel %vm277, %v2544, %v2546
  %v2569 = vsel %vm277, %v2542, %v2544
  %v2570 = vsel %vm277, %v2540, %v2542
  %v2571 = vsel %vm277, %v2538, %v2540
  %v2572 = vsel %vm277, %v2536, %v2538
  %v2573 = vsel %vm277, %v2534, %v2536
  %v2574 = vsel %vm277, %v2532, %v2534
  %v2575 = vsel %vm277, %v2530, %v2532
  %v2576 = vsel %vm277, %v2560, %v2530
  %v2577 = vsel %vm310, %v2576, 0.0
  %v2578 = vsel %vm311, %v2575, 0.0
  %v2579 = vsel %vm312, %v2574, 0.0
  %v2580 = vsel %vm313, %v2573, 0.0
  %v2581 = vsel %vm314, %v2572, 0.0
  %v2582 = vsel %vm315, %v2571, 0.0
  %v2583 = vsel %vm316, %v2570, 0.0
  %v2584 = vsel %vm317, %v2569, 0.0
  %v2585 = vsel %vm318, %v2568, 0.0
  %v2586 = vsel %vm319, %v2567, 0.0
  %v2587 = vsel %vm320, %v2566, 0.0
  %v2588 = vsel %vm321, %v2565, 0.0
  %v2589 = vsel %vm322, %v2564, 0.0
  %v2590 = vsel %vm323, %v2563, 0.0
  %v2591 = vsel %vm324, %v2562, 0.0
  %v2592 = vsel %vm325, %v2561, 0.0
  %2593 = vst [vmem:[#allocation2] sm:$0xf] %v2577
  %2594 = vst [vmem:[#allocation2 + $0x8] sm:$0xf] %v2578
  %2595 = vst [vmem:[#allocation2 + $0x10] sm:$0xf] %v2579
  %2596 = vst [vmem:[#allocation2 + $0x18] sm:$0xf] %v2580
  %2597 = vst [vmem:[#allocation2 + $0x20] sm:$0xf] %v2581
  %2598 = vst [vmem:[#allocation2 + $0x28] sm:$0xf] %v2582
  %2599 = vst [vmem:[#allocation2 + $0x30] sm:$0xf] %v2583
  %2600 = vst [vmem:[#allocation2 + $0x38] sm:$0xf] %v2584
  %2601 = vst [vmem:[#allocation2 + $0x40] sm:$0xf] %v2585
  %2602 = vst [vmem:[#allocation2 + $0x48] sm:$0xf] %v2586
  %2603 = vst [vmem:[#allocation2 + $0x50] sm:$0xf] %v2587
  %2604 = vst [vmem:[#allocation2 + $0x58] sm:$0xf] %v2588
  %2605 = vst [vmem:[#allocation2 + $0x60] sm:$0xf] %v2589
  %2606 = vst [vmem:[#allocation2 + $0x68] sm:$0xf] %v2590
  %2607 = vst [vmem:[#allocation2 + $0x70] sm:$0xf] %v2591
  %2608 = vst [vmem:[#allocation2 + $0x78] sm:$0xf] %v2592
  %2609 = vrot.lane.b32.xlu0 %v2513, 32
  %v2610 = vpop.permute.xlu0 %2609
  %2611 = vrot.lane.b32.xlu0 %v2514, 32
  %v2612 = vpop.permute.xlu0 %2611
  %2613 = vrot.lane.b32.xlu0 %v2515, 32
  %v2614 = vpop.permute.xlu0 %2613
  %2615 = vrot.lane.b32.xlu0 %v2516, 32
  %v2616 = vpop.permute.xlu0 %2615
  %2617 = vrot.lane.b32.xlu0 %v2517, 32
  %v2618 = vpop.permute.xlu0 %2617
  %2619 = vrot.lane.b32.xlu0 %v2518, 32
  %v2620 = vpop.permute.xlu0 %2619
  %2621 = vrot.lane.b32.xlu0 %v2519, 32
  %v2622 = vpop.permute.xlu0 %2621
  %2623 = vrot.lane.b32.xlu0 %v2520, 32
  %v2624 = vpop.permute.xlu0 %2623
  %2625 = vrot.lane.b32.xlu0 %v2521, 32
  %v2626 = vpop.permute.xlu0 %2625
  %2627 = vrot.lane.b32.xlu0 %v2522, 32
  %v2628 = vpop.permute.xlu0 %2627
  %2629 = vrot.lane.b32.xlu0 %v2523, 32
  %v2630 = vpop.permute.xlu0 %2629
  %2631 = vrot.lane.b32.xlu0 %v2524, 32
  %v2632 = vpop.permute.xlu0 %2631
  %2633 = vrot.lane.b32.xlu0 %v2525, 32
  %v2634 = vpop.permute.xlu0 %2633
  %2635 = vrot.lane.b32.xlu0 %v2526, 32
  %v2636 = vpop.permute.xlu0 %2635
  %2637 = vrot.lane.b32.xlu0 %v2527, 32
  %v2638 = vpop.permute.xlu0 %2637
  %2639 = vrot.lane.b32.xlu0 %v2528, 32
  %v2640 = vpop.permute.xlu0 %2639
  %v2641 = vsel %vm390, %v2638, %v2640
  %v2642 = vsel %vm390, %v2636, %v2638
  %v2643 = vsel %vm390, %v2634, %v2636
  %v2644 = vsel %vm390, %v2632, %v2634
  %v2645 = vsel %vm390, %v2630, %v2632
  %v2646 = vsel %vm390, %v2628, %v2630
  %v2647 = vsel %vm390, %v2626, %v2628
  %v2648 = vsel %vm390, %v2624, %v2626
  %v2649 = vsel %vm390, %v2622, %v2624
  %v2650 = vsel %vm390, %v2620, %v2622
  %v2651 = vsel %vm390, %v2618, %v2620
  %v2652 = vsel %vm390, %v2616, %v2618
  %v2653 = vsel %vm390, %v2614, %v2616
  %v2654 = vsel %vm390, %v2612, %v2614
  %v2655 = vsel %vm390, %v2610, %v2612
  %v2656 = vsel %vm390, %v2640, %v2610
  %v2657 = vsel %vm423, %v2656, 0.0
  %v2658 = vsel %vm424, %v2655, 0.0
  %v2659 = vsel %vm425, %v2654, 0.0
  %v2660 = vsel %vm426, %v2653, 0.0
  %v2661 = vsel %vm427, %v2652, 0.0
  %v2662 = vsel %vm428, %v2651, 0.0
  %v2663 = vsel %vm429, %v2650, 0.0
  %v2664 = vsel %vm430, %v2649, 0.0
  %v2665 = vsel %vm431, %v2648, 0.0
  %v2666 = vsel %vm432, %v2647, 0.0
  %v2667 = vsel %vm433, %v2646, 0.0
  %v2668 = vsel %vm434, %v2645, 0.0
  %v2669 = vsel %vm435, %v2644, 0.0
  %v2670 = vsel %vm436, %v2643, 0.0
  %v2671 = vsel %vm437, %v2642, 0.0
  %v2672 = vsel %vm438, %v2641, 0.0
  %v2689 = vrot.slane %v2657, 4
  %v2690 = vrot.slane %v2658, 4
  %v2691 = vrot.slane %v2659, 4
  %v2692 = vrot.slane %v2660, 4
  %v2693 = vrot.slane %v2661, 4
  %v2694 = vrot.slane %v2662, 4
  %v2695 = vrot.slane %v2663, 4
  %v2696 = vrot.slane %v2664, 4
  %v2697 = vrot.slane %v2665, 4
  %v2698 = vrot.slane %v2666, 4
  %v2699 = vrot.slane %v2667, 4
  %v2700 = vrot.slane %v2668, 4
  %v2701 = vrot.slane %v2669, 4
  %v2702 = vrot.slane %v2670, 4
  %v2703 = vrot.slane %v2671, 4
  %v2704 = vrot.slane %v2672, 4
  %2721 = vst [vmem:[#allocation2] sm:$0xf0] %v2689
  %2722 = vst [vmem:[#allocation2 + $0x8] sm:$0xf0] %v2690
  %2723 = vst [vmem:[#allocation2 + $0x10] sm:$0xf0] %v2691
  %2724 = vst [vmem:[#allocation2 + $0x18] sm:$0xf0] %v2692
  %2725 = vst [vmem:[#allocation2 + $0x20] sm:$0xf0] %v2693
  %2726 = vst [vmem:[#allocation2 + $0x28] sm:$0xf0] %v2694
  %2727 = vst [vmem:[#allocation2 + $0x30] sm:$0xf0] %v2695
  %2728 = vst [vmem:[#allocation2 + $0x38] sm:$0xf0] %v2696
  %2729 = vst [vmem:[#allocation2 + $0x40] sm:$0xf0] %v2697
  %2730 = vst [vmem:[#allocation2 + $0x48] sm:$0xf0] %v2698
  %2731 = vst [vmem:[#allocation2 + $0x50] sm:$0xf0] %v2699
  %2732 = vst [vmem:[#allocation2 + $0x58] sm:$0xf0] %v2700
  %2733 = vst [vmem:[#allocation2 + $0x60] sm:$0xf0] %v2701
  %2734 = vst [vmem:[#allocation2 + $0x68] sm:$0xf0] %v2702
  %2735 = vst [vmem:[#allocation2 + $0x70] sm:$0xf0] %v2703
  %2736 = vst [vmem:[#allocation2 + $0x78] sm:$0xf0] %v2704
  %2737 = vrot.lane.b32.xlu0 %v2513, 31
  %v2738 = vpop.permute.xlu0 %2737
  %2739 = vrot.lane.b32.xlu0 %v2514, 31
  %v2740 = vpop.permute.xlu0 %2739
  %2741 = vrot.lane.b32.xlu0 %v2515, 31
  %v2742 = vpop.permute.xlu0 %2741
  %2743 = vrot.lane.b32.xlu0 %v2516, 31
  %v2744 = vpop.permute.xlu0 %2743
  %2745 = vrot.lane.b32.xlu0 %v2517, 31
  %v2746 = vpop.permute.xlu0 %2745
  %2747 = vrot.lane.b32.xlu0 %v2518, 31
  %v2748 = vpop.permute.xlu0 %2747
  %2749 = vrot.lane.b32.xlu0 %v2519, 31
  %v2750 = vpop.permute.xlu0 %2749
  %2751 = vrot.lane.b32.xlu0 %v2520, 31
  %v2752 = vpop.permute.xlu0 %2751
  %2753 = vrot.lane.b32.xlu0 %v2521, 31
  %v2754 = vpop.permute.xlu0 %2753
  %2755 = vrot.lane.b32.xlu0 %v2522, 31
  %v2756 = vpop.permute.xlu0 %2755
  %2757 = vrot.lane.b32.xlu0 %v2523, 31
  %v2758 = vpop.permute.xlu0 %2757
  %2759 = vrot.lane.b32.xlu0 %v2524, 31
  %v2760 = vpop.permute.xlu0 %2759
  %2761 = vrot.lane.b32.xlu0 %v2525, 31
  %v2762 = vpop.permute.xlu0 %2761
  %2763 = vrot.lane.b32.xlu0 %v2526, 31
  %v2764 = vpop.permute.xlu0 %2763
  %2765 = vrot.lane.b32.xlu0 %v2527, 31
  %v2766 = vpop.permute.xlu0 %2765
  %2767 = vrot.lane.b32.xlu0 %v2528, 31
  %v2768 = vpop.permute.xlu0 %2767
  %v2769 = vsel %vm551, %v2766, %v2768
  %v2770 = vsel %vm551, %v2764, %v2766
  %v2771 = vsel %vm551, %v2762, %v2764
  %v2772 = vsel %vm551, %v2760, %v2762
  %v2773 = vsel %vm551, %v2758, %v2760
  %v2774 = vsel %vm551, %v2756, %v2758
  %v2775 = vsel %vm551, %v2754, %v2756
  %v2776 = vsel %vm551, %v2752, %v2754
  %v2777 = vsel %vm551, %v2750, %v2752
  %v2778 = vsel %vm551, %v2748, %v2750
  %v2779 = vsel %vm551, %v2746, %v2748
  %v2780 = vsel %vm551, %v2744, %v2746
  %v2781 = vsel %vm551, %v2742, %v2744
  %v2782 = vsel %vm551, %v2740, %v2742
  %v2783 = vsel %vm551, %v2738, %v2740
  %v2784 = vsel %vm551, %v2768, %v2738
  %v2785 = vsel %vm584, %v2784, 0.0
  %v2786 = vsel %vm585, %v2783, 0.0
  %v2787 = vsel %vm586, %v2782, 0.0
  %v2788 = vsel %vm587, %v2781, 0.0
  %v2789 = vsel %vm588, %v2780, 0.0
  %v2790 = vsel %vm589, %v2779, 0.0
  %v2791 = vsel %vm590, %v2778, 0.0
  %v2792 = vsel %vm591, %v2777, 0.0
  %v2793 = vsel %vm592, %v2776, 0.0
  %v2794 = vsel %vm593, %v2775, 0.0
  %v2795 = vsel %vm594, %v2774, 0.0
  %v2796 = vsel %vm595, %v2773, 0.0
  %v2797 = vsel %vm596, %v2772, 0.0
  %v2798 = vsel %vm597, %v2771, 0.0
  %v2799 = vsel %vm598, %v2770, 0.0
  %v2800 = vsel %vm599, %v2769, 0.0
  %2801 = vst [vmem:[#allocation2 + $0x80] sm:$0xf] %v2785
  %2802 = vst [vmem:[#allocation2 + $0x88] sm:$0xf] %v2786
  %2803 = vst [vmem:[#allocation2 + $0x90] sm:$0xf] %v2787
  %2804 = vst [vmem:[#allocation2 + $0x98] sm:$0xf] %v2788
  %2805 = vst [vmem:[#allocation2 + $0xa0] sm:$0xf] %v2789
  %2806 = vst [vmem:[#allocation2 + $0xa8] sm:$0xf] %v2790
  %2807 = vst [vmem:[#allocation2 + $0xb0] sm:$0xf] %v2791
  %2808 = vst [vmem:[#allocation2 + $0xb8] sm:$0xf] %v2792
  %2809 = vst [vmem:[#allocation2 + $0xc0] sm:$0xf] %v2793
  %2810 = vst [vmem:[#allocation2 + $0xc8] sm:$0xf] %v2794
  %2811 = vst [vmem:[#allocation2 + $0xd0] sm:$0xf] %v2795
  %2812 = vst [vmem:[#allocation2 + $0xd8] sm:$0xf] %v2796
  %2813 = vst [vmem:[#allocation2 + $0xe0] sm:$0xf] %v2797
  %2814 = vst [vmem:[#allocation2 + $0xe8] sm:$0xf] %v2798
  %2815 = vst [vmem:[#allocation2 + $0xf0] sm:$0xf] %v2799
  %2816 = vst [vmem:[#allocation2 + $0xf8] sm:$0xf] %v2800
  %2817 = vrot.lane.b32.xlu0 %v2513, 1
  %v2818 = vpop.permute.xlu0 %2817
  %2819 = vrot.lane.b32.xlu0 %v2514, 1
  %v2820 = vpop.permute.xlu0 %2819
  %2821 = vrot.lane.b32.xlu0 %v2515, 1
  %v2822 = vpop.permute.xlu0 %2821
  %2823 = vrot.lane.b32.xlu0 %v2516, 1
  %v2824 = vpop.permute.xlu0 %2823
  %2825 = vrot.lane.b32.xlu0 %v2517, 1
  %v2826 = vpop.permute.xlu0 %2825
  %2827 = vrot.lane.b32.xlu0 %v2518, 1
  %v2828 = vpop.permute.xlu0 %2827
  %2829 = vrot.lane.b32.xlu0 %v2519, 1
  %v2830 = vpop.permute.xlu0 %2829
  %2831 = vrot.lane.b32.xlu0 %v2520, 1
  %v2832 = vpop.permute.xlu0 %2831
  %2833 = vrot.lane.b32.xlu0 %v2521, 1
  %v2834 = vpop.permute.xlu0 %2833
  %2835 = vrot.lane.b32.xlu0 %v2522, 1
  %v2836 = vpop.permute.xlu0 %2835
  %2837 = vrot.lane.b32.xlu0 %v2523, 1
  %v2838 = vpop.permute.xlu0 %2837
  %2839 = vrot.lane.b32.xlu0 %v2524, 1
  %v2840 = vpop.permute.xlu0 %2839
  %2841 = vrot.lane.b32.xlu0 %v2525, 1
  %v2842 = vpop.permute.xlu0 %2841
  %2843 = vrot.lane.b32.xlu0 %v2526, 1
  %v2844 = vpop.permute.xlu0 %2843
  %2845 = vrot.lane.b32.xlu0 %v2527, 1
  %v2846 = vpop.permute.xlu0 %2845
  %2847 = vrot.lane.b32.xlu0 %v2528, 1
  %v2848 = vpop.permute.xlu0 %2847
  %v2849 = vsel %vm664, %v2846, %v2848
  %v2850 = vsel %vm664, %v2844, %v2846
  %v2851 = vsel %vm664, %v2842, %v2844
  %v2852 = vsel %vm664, %v2840, %v2842
  %v2853 = vsel %vm664, %v2838, %v2840
  %v2854 = vsel %vm664, %v2836, %v2838
  %v2855 = vsel %vm664, %v2834, %v2836
  %v2856 = vsel %vm664, %v2832, %v2834
  %v2857 = vsel %vm664, %v2830, %v2832
  %v2858 = vsel %vm664, %v2828, %v2830
  %v2859 = vsel %vm664, %v2826, %v2828
  %v2860 = vsel %vm664, %v2824, %v2826
  %v2861 = vsel %vm664, %v2822, %v2824
  %v2862 = vsel %vm664, %v2820, %v2822
  %v2863 = vsel %vm664, %v2818, %v2820
  %v2864 = vsel %vm664, %v2848, %v2818
  %v2865 = vsel %vm697, %v2864, 0.0
  %v2866 = vsel %vm698, %v2863, 0.0
  %v2867 = vsel %vm699, %v2862, 0.0
  %v2868 = vsel %vm700, %v2861, 0.0
  %v2869 = vsel %vm701, %v2860, 0.0
  %v2870 = vsel %vm702, %v2859, 0.0
  %v2871 = vsel %vm703, %v2858, 0.0
  %v2872 = vsel %vm704, %v2857, 0.0
  %v2873 = vsel %vm705, %v2856, 0.0
  %v2874 = vsel %vm706, %v2855, 0.0
  %v2875 = vsel %vm707, %v2854, 0.0
  %v2876 = vsel %vm708, %v2853, 0.0
  %v2877 = vsel %vm709, %v2852, 0.0
  %v2878 = vsel %vm710, %v2851, 0.0
  %v2879 = vsel %vm711, %v2850, 0.0
  %v2880 = vsel %vm712, %v2849, 0.0
  %v2897 = vrot.slane %v2865, 4
  %v2898 = vrot.slane %v2866, 4
  %v2899 = vrot.slane %v2867, 4
  %v2900 = vrot.slane %v2868, 4
  %v2901 = vrot.slane %v2869, 4
  %v2902 = vrot.slane %v2870, 4
  %v2903 = vrot.slane %v2871, 4
  %v2904 = vrot.slane %v2872, 4
  %v2905 = vrot.slane %v2873, 4
  %v2906 = vrot.slane %v2874, 4
  %v2907 = vrot.slane %v2875, 4
  %v2908 = vrot.slane %v2876, 4
  %v2909 = vrot.slane %v2877, 4
  %v2910 = vrot.slane %v2878, 4
  %v2911 = vrot.slane %v2879, 4
  %v2912 = vrot.slane %v2880, 4
  %2929 = vst [vmem:[#allocation2 + $0x80] sm:$0xf0] %v2897
  %2930 = vst [vmem:[#allocation2 + $0x88] sm:$0xf0] %v2898
  %2931 = vst [vmem:[#allocation2 + $0x90] sm:$0xf0] %v2899
  %2932 = vst [vmem:[#allocation2 + $0x98] sm:$0xf0] %v2900
  %2933 = vst [vmem:[#allocation2 + $0xa0] sm:$0xf0] %v2901
  %2934 = vst [vmem:[#allocation2 + $0xa8] sm:$0xf0] %v2902
  %2935 = vst [vmem:[#allocation2 + $0xb0] sm:$0xf0] %v2903
  %2936 = vst [vmem:[#allocation2 + $0xb8] sm:$0xf0] %v2904
  %2937 = vst [vmem:[#allocation2 + $0xc0] sm:$0xf0] %v2905
  %2938 = vst [vmem:[#allocation2 + $0xc8] sm:$0xf0] %v2906
  %2939 = vst [vmem:[#allocation2 + $0xd0] sm:$0xf0] %v2907
  %2940 = vst [vmem:[#allocation2 + $0xd8] sm:$0xf0] %v2908
  %2941 = vst [vmem:[#allocation2 + $0xe0] sm:$0xf0] %v2909
  %2942 = vst [vmem:[#allocation2 + $0xe8] sm:$0xf0] %v2910
  %2943 = vst [vmem:[#allocation2 + $0xf0] sm:$0xf0] %v2911
  %2944 = vst [vmem:[#allocation2 + $0xf8] sm:$0xf0] %v2912
  %2945 = vst [vmem:[#allocation2 + $0x100] sm:$0xf] %v2513
  %2946 = vst [vmem:[#allocation2 + $0x108] sm:$0xf] %v2514
  %2947 = vst [vmem:[#allocation2 + $0x110] sm:$0xf] %v2515
  %2948 = vst [vmem:[#allocation2 + $0x118] sm:$0xf] %v2516
  %2949 = vst [vmem:[#allocation2 + $0x120] sm:$0xf] %v2517
  %2950 = vst [vmem:[#allocation2 + $0x128] sm:$0xf] %v2518
  %2951 = vst [vmem:[#allocation2 + $0x130] sm:$0xf] %v2519
  %2952 = vst [vmem:[#allocation2 + $0x138] sm:$0xf] %v2520
  %2953 = vst [vmem:[#allocation2 + $0x140] sm:$0xf] %v2521
  %2954 = vst [vmem:[#allocation2 + $0x148] sm:$0xf] %v2522
  %2955 = vst [vmem:[#allocation2 + $0x150] sm:$0xf] %v2523
  %2956 = vst [vmem:[#allocation2 + $0x158] sm:$0xf] %v2524
  %2957 = vst [vmem:[#allocation2 + $0x160] sm:$0xf] %v2525
  %2958 = vst [vmem:[#allocation2 + $0x168] sm:$0xf] %v2526
  %2959 = vst [vmem:[#allocation2 + $0x170] sm:$0xf] %v2527
  %2960 = vst [vmem:[#allocation2 + $0x178] sm:$0xf] %v2528
  %2961 = vrot.lane.b32.xlu0 %v2513, 127
  %v2962 = vpop.permute.xlu0 %2961
  %2963 = vrot.lane.b32.xlu0 %v2514, 127
  %v2964 = vpop.permute.xlu0 %2963
  %2965 = vrot.lane.b32.xlu0 %v2515, 127
  %v2966 = vpop.permute.xlu0 %2965
  %2967 = vrot.lane.b32.xlu0 %v2516, 127
  %v2968 = vpop.permute.xlu0 %2967
  %2969 = vrot.lane.b32.xlu0 %v2517, 127
  %v2970 = vpop.permute.xlu0 %2969
  %2971 = vrot.lane.b32.xlu0 %v2518, 127
  %v2972 = vpop.permute.xlu0 %2971
  %2973 = vrot.lane.b32.xlu0 %v2519, 127
  %v2974 = vpop.permute.xlu0 %2973
  %2975 = vrot.lane.b32.xlu0 %v2520, 127
  %v2976 = vpop.permute.xlu0 %2975
  %2977 = vrot.lane.b32.xlu0 %v2521, 127
  %v2978 = vpop.permute.xlu0 %2977
  %2979 = vrot.lane.b32.xlu0 %v2522, 127
  %v2980 = vpop.permute.xlu0 %2979
  %2981 = vrot.lane.b32.xlu0 %v2523, 127
  %v2982 = vpop.permute.xlu0 %2981
  %2983 = vrot.lane.b32.xlu0 %v2524, 127
  %v2984 = vpop.permute.xlu0 %2983
  %2985 = vrot.lane.b32.xlu0 %v2525, 127
  %v2986 = vpop.permute.xlu0 %2985
  %2987 = vrot.lane.b32.xlu0 %v2526, 127
  %v2988 = vpop.permute.xlu0 %2987
  %2989 = vrot.lane.b32.xlu0 %v2527, 127
  %v2990 = vpop.permute.xlu0 %2989
  %2991 = vrot.lane.b32.xlu0 %v2528, 127
  %v2992 = vpop.permute.xlu0 %2991
  %v2993 = vsel %vm841, %v2990, %v2992
  %v2994 = vsel %vm841, %v2988, %v2990
  %v2995 = vsel %vm841, %v2986, %v2988
  %v2996 = vsel %vm841, %v2984, %v2986
  %v2997 = vsel %vm841, %v2982, %v2984
  %v2998 = vsel %vm841, %v2980, %v2982
  %v2999 = vsel %vm841, %v2978, %v2980
  %v3000 = vsel %vm841, %v2976, %v2978
  %v3001 = vsel %vm841, %v2974, %v2976
  %v3002 = vsel %vm841, %v2972, %v2974
  %v3003 = vsel %vm841, %v2970, %v2972
  %v3004 = vsel %vm841, %v2968, %v2970
  %v3005 = vsel %vm841, %v2966, %v2968
  %v3006 = vsel %vm841, %v2964, %v2966
  %v3007 = vsel %vm841, %v2962, %v2964
  %v3008 = vsel %vm841, %v2992, %v2962
  %v3009 = vsel %vm874, %v3007, 0.0
  %v3010 = vsel %vm875, %v3006, 0.0
  %v3011 = vsel %vm876, %v3005, 0.0
  %v3012 = vsel %vm877, %v3004, 0.0
  %v3013 = vsel %vm878, %v3003, 0.0
  %v3014 = vsel %vm879, %v3002, 0.0
  %v3015 = vsel %vm880, %v3001, 0.0
  %v3016 = vsel %vm881, %v3000, 0.0
  %v3017 = vsel %vm882, %v2999, 0.0
  %v3018 = vsel %vm883, %v2998, 0.0
  %v3019 = vsel %vm884, %v2997, 0.0
  %v3020 = vsel %vm885, %v2996, 0.0
  %v3021 = vsel %vm886, %v2995, 0.0
  %v3022 = vsel %vm887, %v2994, 0.0
  %v3023 = vsel %vm888, %v2993, 0.0
  %v3024 = vsel %vm889, %v3008, 0.0
  %v3041 = vrot.slane %v3009, 4
  %v3042 = vrot.slane %v3010, 4
  %v3043 = vrot.slane %v3011, 4
  %v3044 = vrot.slane %v3012, 4
  %v3045 = vrot.slane %v3013, 4
  %v3046 = vrot.slane %v3014, 4
  %v3047 = vrot.slane %v3015, 4
  %v3048 = vrot.slane %v3016, 4
  %v3049 = vrot.slane %v3017, 4
  %v3050 = vrot.slane %v3018, 4
  %v3051 = vrot.slane %v3019, 4
  %v3052 = vrot.slane %v3020, 4
  %v3053 = vrot.slane %v3021, 4
  %v3054 = vrot.slane %v3022, 4
  %v3055 = vrot.slane %v3023, 4
  %v3056 = vrot.slane %v3024, 4
  %3073 = vst [vmem:[#allocation2 + $0x100] sm:$0xf0] %v3041
  %3074 = vst [vmem:[#allocation2 + $0x108] sm:$0xf0] %v3042
  %3075 = vst [vmem:[#allocation2 + $0x110] sm:$0xf0] %v3043
  %3076 = vst [vmem:[#allocation2 + $0x118] sm:$0xf0] %v3044
  %3077 = vst [vmem:[#allocation2 + $0x120] sm:$0xf0] %v3045
  %3078 = vst [vmem:[#allocation2 + $0x128] sm:$0xf0] %v3046
  %3079 = vst [vmem:[#allocation2 + $0x130] sm:$0xf0] %v3047
  %3080 = vst [vmem:[#allocation2 + $0x138] sm:$0xf0] %v3048
  %3081 = vst [vmem:[#allocation2 + $0x140] sm:$0xf0] %v3049
  %3082 = vst [vmem:[#allocation2 + $0x148] sm:$0xf0] %v3050
  %3083 = vst [vmem:[#allocation2 + $0x150] sm:$0xf0] %v3051
  %3084 = vst [vmem:[#allocation2 + $0x158] sm:$0xf0] %v3052
  %3085 = vst [vmem:[#allocation2 + $0x160] sm:$0xf0] %v3053
  %3086 = vst [vmem:[#allocation2 + $0x168] sm:$0xf0] %v3054
  %3087 = vst [vmem:[#allocation2 + $0x170] sm:$0xf0] %v3055
  %3088 = vst [vmem:[#allocation2 + $0x178] sm:$0xf0] %v3056
  %3089 = vrot.lane.b32.xlu0 %v2513, 97
  %v3090 = vpop.permute.xlu0 %3089
  %3091 = vrot.lane.b32.xlu0 %v2514, 97
  %v3092 = vpop.permute.xlu0 %3091
  %3093 = vrot.lane.b32.xlu0 %v2515, 97
  %v3094 = vpop.permute.xlu0 %3093
  %3095 = vrot.lane.b32.xlu0 %v2516, 97
  %v3096 = vpop.permute.xlu0 %3095
  %3097 = vrot.lane.b32.xlu0 %v2517, 97
  %v3098 = vpop.permute.xlu0 %3097
  %3099 = vrot.lane.b32.xlu0 %v2518, 97
  %v3100 = vpop.permute.xlu0 %3099
  %3101 = vrot.lane.b32.xlu0 %v2519, 97
  %v3102 = vpop.permute.xlu0 %3101
  %3103 = vrot.lane.b32.xlu0 %v2520, 97
  %v3104 = vpop.permute.xlu0 %3103
  %3105 = vrot.lane.b32.xlu0 %v2521, 97
  %v3106 = vpop.permute.xlu0 %3105
  %3107 = vrot.lane.b32.xlu0 %v2522, 97
  %v3108 = vpop.permute.xlu0 %3107
  %3109 = vrot.lane.b32.xlu0 %v2523, 97
  %v3110 = vpop.permute.xlu0 %3109
  %3111 = vrot.lane.b32.xlu0 %v2524, 97
  %v3112 = vpop.permute.xlu0 %3111
  %3113 = vrot.lane.b32.xlu0 %v2525, 97
  %v3114 = vpop.permute.xlu0 %3113
  %3115 = vrot.lane.b32.xlu0 %v2526, 97
  %v3116 = vpop.permute.xlu0 %3115
  %3117 = vrot.lane.b32.xlu0 %v2527, 97
  %v3118 = vpop.permute.xlu0 %3117
  %3119 = vrot.lane.b32.xlu0 %v2528, 97
  %v3120 = vpop.permute.xlu0 %3119
  %v3121 = vsel %vm1002, %v3118, %v3120
  %v3122 = vsel %vm1002, %v3116, %v3118
  %v3123 = vsel %vm1002, %v3114, %v3116
  %v3124 = vsel %vm1002, %v3112, %v3114
  %v3125 = vsel %vm1002, %v3110, %v3112
  %v3126 = vsel %vm1002, %v3108, %v3110
  %v3127 = vsel %vm1002, %v3106, %v3108
  %v3128 = vsel %vm1002, %v3104, %v3106
  %v3129 = vsel %vm1002, %v3102, %v3104
  %v3130 = vsel %vm1002, %v3100, %v3102
  %v3131 = vsel %vm1002, %v3098, %v3100
  %v3132 = vsel %vm1002, %v3096, %v3098
  %v3133 = vsel %vm1002, %v3094, %v3096
  %v3134 = vsel %vm1002, %v3092, %v3094
  %v3135 = vsel %vm1002, %v3090, %v3092
  %v3136 = vsel %vm1002, %v3120, %v3090
  %v3137 = vsel %vm1035, %v3135, 0.0
  %v3138 = vsel %vm1036, %v3134, 0.0
  %v3139 = vsel %vm1037, %v3133, 0.0
  %v3140 = vsel %vm1038, %v3132, 0.0
  %v3141 = vsel %vm1039, %v3131, 0.0
  %v3142 = vsel %vm1040, %v3130, 0.0
  %v3143 = vsel %vm1041, %v3129, 0.0
  %v3144 = vsel %vm1042, %v3128, 0.0
  %v3145 = vsel %vm1043, %v3127, 0.0
  %v3146 = vsel %vm1044, %v3126, 0.0
  %v3147 = vsel %vm1045, %v3125, 0.0
  %v3148 = vsel %vm1046, %v3124, 0.0
  %v3149 = vsel %vm1047, %v3123, 0.0
  %v3150 = vsel %vm1048, %v3122, 0.0
  %v3151 = vsel %vm1049, %v3121, 0.0
  %v3152 = vsel %vm1050, %v3136, 0.0
  %3153 = vst [vmem:[#allocation2 + $0x180] sm:$0xf] %v3137
  %3154 = vst [vmem:[#allocation2 + $0x188] sm:$0xf] %v3138
  %3155 = vst [vmem:[#allocation2 + $0x190] sm:$0xf] %v3139
  %3156 = vst [vmem:[#allocation2 + $0x198] sm:$0xf] %v3140
  %3157 = vst [vmem:[#allocation2 + $0x1a0] sm:$0xf] %v3141
  %3158 = vst [vmem:[#allocation2 + $0x1a8] sm:$0xf] %v3142
  %3159 = vst [vmem:[#allocation2 + $0x1b0] sm:$0xf] %v3143
  %3160 = vst [vmem:[#allocation2 + $0x1b8] sm:$0xf] %v3144
  %3161 = vst [vmem:[#allocation2 + $0x1c0] sm:$0xf] %v3145
  %3162 = vst [vmem:[#allocation2 + $0x1c8] sm:$0xf] %v3146
  %3163 = vst [vmem:[#allocation2 + $0x1d0] sm:$0xf] %v3147
  %3164 = vst [vmem:[#allocation2 + $0x1d8] sm:$0xf] %v3148
  %3165 = vst [vmem:[#allocation2 + $0x1e0] sm:$0xf] %v3149
  %3166 = vst [vmem:[#allocation2 + $0x1e8] sm:$0xf] %v3150
  %3167 = vst [vmem:[#allocation2 + $0x1f0] sm:$0xf] %v3151
  %3168 = vst [vmem:[#allocation2 + $0x1f8] sm:$0xf] %v3152
  %3169 = vrot.lane.b32.xlu0 %v2513, 96
  %v3170 = vpop.permute.xlu0 %3169
  %3171 = vrot.lane.b32.xlu0 %v2514, 96
  %v3172 = vpop.permute.xlu0 %3171
  %3173 = vrot.lane.b32.xlu0 %v2515, 96
  %v3174 = vpop.permute.xlu0 %3173
  %3175 = vrot.lane.b32.xlu0 %v2516, 96
  %v3176 = vpop.permute.xlu0 %3175
  %3177 = vrot.lane.b32.xlu0 %v2517, 96
  %v3178 = vpop.permute.xlu0 %3177
  %3179 = vrot.lane.b32.xlu0 %v2518, 96
  %v3180 = vpop.permute.xlu0 %3179
  %3181 = vrot.lane.b32.xlu0 %v2519, 96
  %v3182 = vpop.permute.xlu0 %3181
  %3183 = vrot.lane.b32.xlu0 %v2520, 96
  %v3184 = vpop.permute.xlu0 %3183
  %3185 = vrot.lane.b32.xlu0 %v2521, 96
  %v3186 = vpop.permute.xlu0 %3185
  %3187 = vrot.lane.b32.xlu0 %v2522, 96
  %v3188 = vpop.permute.xlu0 %3187
  %3189 = vrot.lane.b32.xlu0 %v2523, 96
  %v3190 = vpop.permute.xlu0 %3189
  %3191 = vrot.lane.b32.xlu0 %v2524, 96
  %v3192 = vpop.permute.xlu0 %3191
  %3193 = vrot.lane.b32.xlu0 %v2525, 96
  %v3194 = vpop.permute.xlu0 %3193
  %3195 = vrot.lane.b32.xlu0 %v2526, 96
  %v3196 = vpop.permute.xlu0 %3195
  %3197 = vrot.lane.b32.xlu0 %v2527, 96
  %v3198 = vpop.permute.xlu0 %3197
  %3199 = vrot.lane.b32.xlu0 %v2528, 96
  %v3200 = vpop.permute.xlu0 %3199
  %v3201 = vsel %vm1115, %v3198, %v3200
  %v3202 = vsel %vm1115, %v3196, %v3198
  %v3203 = vsel %vm1115, %v3194, %v3196
  %v3204 = vsel %vm1115, %v3192, %v3194
  %v3205 = vsel %vm1115, %v3190, %v3192
  %v3206 = vsel %vm1115, %v3188, %v3190
  %v3207 = vsel %vm1115, %v3186, %v3188
  %v3208 = vsel %vm1115, %v3184, %v3186
  %v3209 = vsel %vm1115, %v3182, %v3184
  %v3210 = vsel %vm1115, %v3180, %v3182
  %v3211 = vsel %vm1115, %v3178, %v3180
  %v3212 = vsel %vm1115, %v3176, %v3178
  %v3213 = vsel %vm1115, %v3174, %v3176
  %v3214 = vsel %vm1115, %v3172, %v3174
  %v3215 = vsel %vm1115, %v3170, %v3172
  %v3216 = vsel %vm1115, %v3200, %v3170
  %v3217 = vsel %vm1148, %v3215, 0.0
  %v3218 = vsel %vm1149, %v3214, 0.0
  %v3219 = vsel %vm1150, %v3213, 0.0
  %v3220 = vsel %vm1151, %v3212, 0.0
  %v3221 = vsel %vm1152, %v3211, 0.0
  %v3222 = vsel %vm1153, %v3210, 0.0
  %v3223 = vsel %vm1154, %v3209, 0.0
  %v3224 = vsel %vm1155, %v3208, 0.0
  %v3225 = vsel %vm1156, %v3207, 0.0
  %v3226 = vsel %vm1157, %v3206, 0.0
  %v3227 = vsel %vm1158, %v3205, 0.0
  %v3228 = vsel %vm1159, %v3204, 0.0
  %v3229 = vsel %vm1160, %v3203, 0.0
  %v3230 = vsel %vm1161, %v3202, 0.0
  %v3231 = vsel %vm1162, %v3201, 0.0
  %v3232 = vsel %vm1163, %v3216, 0.0
  %v3249 = vrot.slane %v3217, 4
  %v3250 = vrot.slane %v3218, 4
  %v3251 = vrot.slane %v3219, 4
  %v3252 = vrot.slane %v3220, 4
  %v3253 = vrot.slane %v3221, 4
  %v3254 = vrot.slane %v3222, 4
  %v3255 = vrot.slane %v3223, 4
  %v3256 = vrot.slane %v3224, 4
  %v3257 = vrot.slane %v3225, 4
  %v3258 = vrot.slane %v3226, 4
  %v3259 = vrot.slane %v3227, 4
  %v3260 = vrot.slane %v3228, 4
  %v3261 = vrot.slane %v3229, 4
  %v3262 = vrot.slane %v3230, 4
  %v3263 = vrot.slane %v3231, 4
  %v3264 = vrot.slane %v3232, 4
  %3281 = vst [vmem:[#allocation2 + $0x180] sm:$0xf0] %v3249
  %3282 = vst [vmem:[#allocation2 + $0x188] sm:$0xf0] %v3250
  %3283 = vst [vmem:[#allocation2 + $0x190] sm:$0xf0] %v3251
  %3284 = vst [vmem:[#allocation2 + $0x198] sm:$0xf0] %v3252
  %3285 = vst [vmem:[#allocation2 + $0x1a0] sm:$0xf0] %v3253
  %3286 = vst [vmem:[#allocation2 + $0x1a8] sm:$0xf0] %v3254
  %3287 = vst [vmem:[#allocation2 + $0x1b0] sm:$0xf0] %v3255
  %3288 = vst [vmem:[#allocation2 + $0x1b8] sm:$0xf0] %v3256
  %3289 = vst [vmem:[#allocation2 + $0x1c0] sm:$0xf0] %v3257
  %3290 = vst [vmem:[#allocation2 + $0x1c8] sm:$0xf0] %v3258
  %3291 = vst [vmem:[#allocation2 + $0x1d0] sm:$0xf0] %v3259
  %3292 = vst [vmem:[#allocation2 + $0x1d8] sm:$0xf0] %v3260
  %3293 = vst [vmem:[#allocation2 + $0x1e0] sm:$0xf0] %v3261
  %3294 = vst [vmem:[#allocation2 + $0x1e8] sm:$0xf0] %v3262
  %3295 = vst [vmem:[#allocation2 + $0x1f0] sm:$0xf0] %v3263
  %3296 = vst [vmem:[#allocation2 + $0x1f8] sm:$0xf0] %v3264
  %3297 = vrot.lane.b32.xlu0 %v2513, 95
  %v3298 = vpop.permute.xlu0 %3297
  %3299 = vrot.lane.b32.xlu0 %v2514, 95
  %v3300 = vpop.permute.xlu0 %3299
  %3301 = vrot.lane.b32.xlu0 %v2515, 95
  %v3302 = vpop.permute.xlu0 %3301
  %3303 = vrot.lane.b32.xlu0 %v2516, 95
  %v3304 = vpop.permute.xlu0 %3303
  %3305 = vrot.lane.b32.xlu0 %v2517, 95
  %v3306 = vpop.permute.xlu0 %3305
  %3307 = vrot.lane.b32.xlu0 %v2518, 95
  %v3308 = vpop.permute.xlu0 %3307
  %3309 = vrot.lane.b32.xlu0 %v2519, 95
  %v3310 = vpop.permute.xlu0 %3309
  %3311 = vrot.lane.b32.xlu0 %v2520, 95
  %v3312 = vpop.permute.xlu0 %3311
  %3313 = vrot.lane.b32.xlu0 %v2521, 95
  %v3314 = vpop.permute.xlu0 %3313
  %3315 = vrot.lane.b32.xlu0 %v2522, 95
  %v3316 = vpop.permute.xlu0 %3315
  %3317 = vrot.lane.b32.xlu0 %v2523, 95
  %v3318 = vpop.permute.xlu0 %3317
  %3319 = vrot.lane.b32.xlu0 %v2524, 95
  %v3320 = vpop.permute.xlu0 %3319
  %3321 = vrot.lane.b32.xlu0 %v2525, 95
  %v3322 = vpop.permute.xlu0 %3321
  %3323 = vrot.lane.b32.xlu0 %v2526, 95
  %v3324 = vpop.permute.xlu0 %3323
  %3325 = vrot.lane.b32.xlu0 %v2527, 95
  %v3326 = vpop.permute.xlu0 %3325
  %3327 = vrot.lane.b32.xlu0 %v2528, 95
  %v3328 = vpop.permute.xlu0 %3327
  %v3329 = vsel %vm1276, %v3326, %v3328
  %v3330 = vsel %vm1276, %v3324, %v3326
  %v3331 = vsel %vm1276, %v3322, %v3324
  %v3332 = vsel %vm1276, %v3320, %v3322
  %v3333 = vsel %vm1276, %v3318, %v3320
  %v3334 = vsel %vm1276, %v3316, %v3318
  %v3335 = vsel %vm1276, %v3314, %v3316
  %v3336 = vsel %vm1276, %v3312, %v3314
  %v3337 = vsel %vm1276, %v3310, %v3312
  %v3338 = vsel %vm1276, %v3308, %v3310
  %v3339 = vsel %vm1276, %v3306, %v3308
  %v3340 = vsel %vm1276, %v3304, %v3306
  %v3341 = vsel %vm1276, %v3302, %v3304
  %v3342 = vsel %vm1276, %v3300, %v3302
  %v3343 = vsel %vm1276, %v3298, %v3300
  %v3344 = vsel %vm1276, %v3328, %v3298
  %v3345 = vsel %vm1309, %v3343, 0.0
  %v3346 = vsel %vm1310, %v3342, 0.0
  %v3347 = vsel %vm1311, %v3341, 0.0
  %v3348 = vsel %vm1312, %v3340, 0.0
  %v3349 = vsel %vm1313, %v3339, 0.0
  %v3350 = vsel %vm1314, %v3338, 0.0
  %v3351 = vsel %vm1315, %v3337, 0.0
  %v3352 = vsel %vm1316, %v3336, 0.0
  %v3353 = vsel %vm1317, %v3335, 0.0
  %v3354 = vsel %vm1318, %v3334, 0.0
  %v3355 = vsel %vm1319, %v3333, 0.0
  %v3356 = vsel %vm1320, %v3332, 0.0
  %v3357 = vsel %vm1321, %v3331, 0.0
  %v3358 = vsel %vm1322, %v3330, 0.0
  %v3359 = vsel %vm1323, %v3329, 0.0
  %v3360 = vsel %vm1324, %v3344, 0.0
  %3361 = vst [vmem:[#allocation2 + $0x200] sm:$0xf] %v3345
  %3362 = vst [vmem:[#allocation2 + $0x208] sm:$0xf] %v3346
  %3363 = vst [vmem:[#allocation2 + $0x210] sm:$0xf] %v3347
  %3364 = vst [vmem:[#allocation2 + $0x218] sm:$0xf] %v3348
  %3365 = vst [vmem:[#allocation2 + $0x220] sm:$0xf] %v3349
  %3366 = vst [vmem:[#allocation2 + $0x228] sm:$0xf] %v3350
  %3367 = vst [vmem:[#allocation2 + $0x230] sm:$0xf] %v3351
  %3368 = vst [vmem:[#allocation2 + $0x238] sm:$0xf] %v3352
  %3369 = vst [vmem:[#allocation2 + $0x240] sm:$0xf] %v3353
  %3370 = vst [vmem:[#allocation2 + $0x248] sm:$0xf] %v3354
  %3371 = vst [vmem:[#allocation2 + $0x250] sm:$0xf] %v3355
  %3372 = vst [vmem:[#allocation2 + $0x258] sm:$0xf] %v3356
  %3373 = vst [vmem:[#allocation2 + $0x260] sm:$0xf] %v3357
  %3374 = vst [vmem:[#allocation2 + $0x268] sm:$0xf] %v3358
  %3375 = vst [vmem:[#allocation2 + $0x270] sm:$0xf] %v3359
  %3376 = vst [vmem:[#allocation2 + $0x278] sm:$0xf] %v3360
  %v3377 = vld [vmem:[%s3] sm:$0xf]
  %v3378 = vld [vmem:[#allocation2] sm:$0xff]
  %v3379 = vld [vmem:[#allocation2 + $0x8] sm:$0xff]
  %v3380 = vld [vmem:[#allocation2 + $0x10] sm:$0xff]
  %v3381 = vld [vmem:[#allocation2 + $0x18] sm:$0xff]
  %v3382 = vld [vmem:[#allocation2 + $0x20] sm:$0xff]
  %v3383 = vld [vmem:[#allocation2 + $0x28] sm:$0xff]
  %v3384 = vld [vmem:[#allocation2 + $0x30] sm:$0xff]
  %v3385 = vld [vmem:[#allocation2 + $0x38] sm:$0xff]
  %v3386 = vld [vmem:[#allocation2 + $0x40] sm:$0xff]
  %v3387 = vld [vmem:[#allocation2 + $0x48] sm:$0xff]
  %v3388 = vld [vmem:[#allocation2 + $0x50] sm:$0xff]
  %v3389 = vld [vmem:[#allocation2 + $0x58] sm:$0xff]
  %v3390 = vld [vmem:[#allocation2 + $0x60] sm:$0xff]
  %v3391 = vld [vmem:[#allocation2 + $0x68] sm:$0xff]
  %v3392 = vld [vmem:[#allocation2 + $0x70] sm:$0xff]
  %v3393 = vld [vmem:[#allocation2 + $0x78] sm:$0xff]
  %v3394 = vld [vmem:[#allocation2 + $0x80] sm:$0xff]
  %v3395 = vld [vmem:[#allocation2 + $0x88] sm:$0xff]
  %v3396 = vld [vmem:[#allocation2 + $0x90] sm:$0xff]
  %v3397 = vld [vmem:[#allocation2 + $0x98] sm:$0xff]
  %v3398 = vld [vmem:[#allocation2 + $0xa0] sm:$0xff]
  %v3399 = vld [vmem:[#allocation2 + $0xa8] sm:$0xff]
  %v3400 = vld [vmem:[#allocation2 + $0xb0] sm:$0xff]
  %v3401 = vld [vmem:[#allocation2 + $0xb8] sm:$0xff]
  %v3402 = vld [vmem:[#allocation2 + $0xc0] sm:$0xff]
  %v3403 = vld [vmem:[#allocation2 + $0xc8] sm:$0xff]
  %v3404 = vld [vmem:[#allocation2 + $0xd0] sm:$0xff]
  %v3405 = vld [vmem:[#allocation2 + $0xd8] sm:$0xff]
  %v3406 = vld [vmem:[#allocation2 + $0xe0] sm:$0xff]
  %v3407 = vld [vmem:[#allocation2 + $0xe8] sm:$0xff]
  %v3408 = vld [vmem:[#allocation2 + $0xf0] sm:$0xff]
  %v3409 = vld [vmem:[#allocation2 + $0xf8] sm:$0xff]
  %v3410 = vld [vmem:[#allocation2 + $0x100] sm:$0xff]
  %v3411 = vld [vmem:[#allocation2 + $0x108] sm:$0xff]
  %v3412 = vld [vmem:[#allocation2 + $0x110] sm:$0xff]
  %v3413 = vld [vmem:[#allocation2 + $0x118] sm:$0xff]
  %v3414 = vld [vmem:[#allocation2 + $0x120] sm:$0xff]
  %v3415 = vld [vmem:[#allocation2 + $0x128] sm:$0xff]
  %v3416 = vld [vmem:[#allocation2 + $0x130] sm:$0xff]
  %v3417 = vld [vmem:[#allocation2 + $0x138] sm:$0xff]
  %v3418 = vld [vmem:[#allocation2 + $0x140] sm:$0xff]
  %v3419 = vld [vmem:[#allocation2 + $0x148] sm:$0xff]
  %v3420 = vld [vmem:[#allocation2 + $0x150] sm:$0xff]
  %v3421 = vld [vmem:[#allocation2 + $0x158] sm:$0xff]
  %v3422 = vld [vmem:[#allocation2 + $0x160] sm:$0xff]
  %v3423 = vld [vmem:[#allocation2 + $0x168] sm:$0xff]
  %v3424 = vld [vmem:[#allocation2 + $0x170] sm:$0xff]
  %v3425 = vld [vmem:[#allocation2 + $0x178] sm:$0xff]
  %v3426 = vld [vmem:[#allocation2 + $0x180] sm:$0xff]
  %v3427 = vld [vmem:[#allocation2 + $0x188] sm:$0xff]
  %v3428 = vld [vmem:[#allocation2 + $0x190] sm:$0xff]
  %v3429 = vld [vmem:[#allocation2 + $0x198] sm:$0xff]
  %v3430 = vld [vmem:[#allocation2 + $0x1a0] sm:$0xff]
  %v3431 = vld [vmem:[#allocation2 + $0x1a8] sm:$0xff]
  %v3432 = vld [vmem:[#allocation2 + $0x1b0] sm:$0xff]
  %v3433 = vld [vmem:[#allocation2 + $0x1b8] sm:$0xff]
  %v3434 = vld [vmem:[#allocation2 + $0x1c0] sm:$0xff]
  %v3435 = vld [vmem:[#allocation2 + $0x1c8] sm:$0xff]
  %v3436 = vld [vmem:[#allocation2 + $0x1d0] sm:$0xff]
  %v3437 = vld [vmem:[#allocation2 + $0x1d8] sm:$0xff]
  %v3438 = vld [vmem:[#allocation2 + $0x1e0] sm:$0xff]
  %v3439 = vld [vmem:[#allocation2 + $0x1e8] sm:$0xff]
  %v3440 = vld [vmem:[#allocation2 + $0x1f0] sm:$0xff]
  %v3441 = vld [vmem:[#allocation2 + $0x1f8] sm:$0xff]
  %v3442 = vld [vmem:[#allocation2 + $0x200] sm:$0xf]
  %v3443 = vld [vmem:[#allocation2 + $0x208] sm:$0xf]
  %v3444 = vld [vmem:[#allocation2 + $0x210] sm:$0xf]
  %v3445 = vld [vmem:[#allocation2 + $0x218] sm:$0xf]
  %v3446 = vld [vmem:[#allocation2 + $0x220] sm:$0xf]
  %v3447 = vld [vmem:[#allocation2 + $0x228] sm:$0xf]
  %v3448 = vld [vmem:[#allocation2 + $0x230] sm:$0xf]
  %v3449 = vld [vmem:[#allocation2 + $0x238] sm:$0xf]
  %v3450 = vld [vmem:[#allocation2 + $0x240] sm:$0xf]
  %v3451 = vld [vmem:[#allocation2 + $0x248] sm:$0xf]
  %v3452 = vld [vmem:[#allocation2 + $0x250] sm:$0xf]
  %v3453 = vld [vmem:[#allocation2 + $0x258] sm:$0xf]
  %v3454 = vld [vmem:[#allocation2 + $0x260] sm:$0xf]
  %v3455 = vld [vmem:[#allocation2 + $0x268] sm:$0xf]
  %v3456 = vld [vmem:[#allocation2 + $0x270] sm:$0xf]
  %v3457 = vld [vmem:[#allocation2 + $0x278] sm:$0xf]
  %v3458 = vld [vmem:[%s4] sm:$0xf]
  %3460 = vset.pattern.permute.xlu0 0
  %3461 = vperm.xlu0 %3460, %v3458
  %v3462 = vpop.permute.xlu0 %3461
  %v3465 = vsel %vm1444, %v3377, 0
  %v3468 = vsel %vm1448, %v3442, 0
  %v3471 = vsel %vm1448, %v3443, 0
  %v3474 = vsel %vm1448, %v3444, 0
  %v3477 = vsel %vm1448, %v3445, 0
  %v3480 = vsel %vm1448, %v3446, 0
  %v3483 = vsel %vm1448, %v3447, 0
  %v3486 = vsel %vm1448, %v3448, 0
  %v3489 = vsel %vm1448, %v3449, 0
  %v3492 = vsel %vm1448, %v3450, 0
  %v3495 = vsel %vm1448, %v3451, 0
  %v3498 = vsel %vm1448, %v3452, 0
  %v3501 = vsel %vm1448, %v3453, 0
  %v3504 = vsel %vm1448, %v3454, 0
  %v3507 = vsel %vm1448, %v3455, 0
  %v3510 = vsel %vm1448, %v3456, 0
  %v3513 = vsel %vm1448, %v3457, 0
  %3515 = vmatprep.subr.mxu0 0.0
  %3516 = vmatpush1.msra.mxu0 0.0
  %3517 = vmatprep.subr.mxu0 0.0
  %3518 = vmatpush1.msra.mxu0 0.0
  %3519 = vmatprep.subr.mxu0 0.0
  %3520 = vmatpush1.msra.mxu0 0.0
  %3521 = vmatprep.subr.mxu0 0.0
  %3522 = vmatpush1.msra.mxu0 0.0
  %3523 = vmatprep.subr.mxu0 0.0
  %3524 = vmatpush1.msra.mxu0 0.0
  %3525 = vmatprep.subr.mxu0 0.0
  %3526 = vmatpush1.msra.mxu0 0.0
  %3527 = vmatprep.subr.mxu0 0.0
  %3528 = vmatpush1.msra.mxu0 0.0
  %3529 = vmatprep.subr.mxu0 0.0
  %3530 = vmatpush1.msra.mxu0 0.0
  %3531 = vmatprep.subr.mxu0 0.0
  %3532 = vmatpush1.msra.mxu0 0.0
  %3533 = vmatprep.subr.mxu0 0.0
  %3534 = vmatpush1.msra.mxu0 0.0
  %3535 = vmatprep.subr.mxu0 0.0
  %3536 = vmatpush1.msra.mxu0 0.0
  %3537 = vmatprep.subr.mxu0 %v3471
  %3538 = vmatpush1.msra.mxu0 %v3468
  %3539 = vmatprep.subr.mxu0 %v3427
  %3540 = vmatpush1.msra.mxu0 %v3426
  %3541 = vmatprep.subr.mxu0 %v3411
  %3542 = vmatpush1.msra.mxu0 %v3410
  %3543 = vmatprep.subr.mxu0 %v3395
  %3544 = vmatpush1.msra.mxu0 %v3394
  %3545 = vmatprep.subr.mxu0 %v3379
  %3546 = vmatpush1.msra.mxu0 %v3378
  %3547 = vmatprep.subr.mxu0 0.0
  %3548 = vmatpush2.msra.mxu0 0.0
  %3549 = vmatprep.subr.mxu0 0.0
  %3550 = vmatpush2.msra.mxu0 0.0
  %3551 = vmatprep.subr.mxu0 0.0
  %3552 = vmatpush2.msra.mxu0 0.0
  %3553 = vmatprep.subr.mxu0 0.0
  %3554 = vmatpush2.msra.mxu0 0.0
  %3555 = vmatprep.subr.mxu0 0.0
  %3556 = vmatpush2.msra.mxu0 0.0
  %3557 = vmatprep.subr.mxu0 0.0
  %3558 = vmatpush2.msra.mxu0 0.0
  %3559 = vmatprep.subr.mxu0 0.0
  %3560 = vmatpush2.msra.mxu0 0.0
  %3561 = vmatprep.subr.mxu0 0.0
  %3562 = vmatpush2.msra.mxu0 0.0
  %3563 = vmatprep.subr.mxu0 0.0
  %3564 = vmatpush2.msra.mxu0 0.0
  %3565 = vmatprep.subr.mxu0 0.0
  %3566 = vmatpush2.msra.mxu0 0.0
  %3567 = vmatprep.subr.mxu0 0.0
  %3568 = vmatpush2.msra.mxu0 0.0
  %3569 = vmatprep.subr.mxu0 0.0
  %3570 = vmatpush2.msra.mxu0 0.0
  %3571 = vmatprep.subr.mxu0 0.0
  %3572 = vmatpush2.msra.mxu0 0.0
  %3573 = vmatprep.subr.mxu0 0.0
  %3574 = vmatpush2.msra.mxu0 0.0
  %3575 = vmatprep.subr.mxu0 0.0
  %3576 = vmatpush2.msra.mxu0 0.0
  %3577 = vmatprep.subr.mxu0 0.0
  %3578 = vmatpush2.msra.mxu0 0.0
  %3579 = vmatprep.mubr.f32.mxu0 0.0
  %3580 = vmatmul.mubr.f32.gmra.mxu0 %v3465
  %v3581 = vpop.f32.mrf.mxu0
  %v3582 = vadd.f32 %v3462, %v3581
  %v3583 = vpop.f32.mrf.mxu0
  %v3584 = vadd.f32 %v3462, %v3583
  %3585 = vdwg.mxu0
  %3586 = vmatprep.subr.mxu0 0.0
  %3587 = vmatpush1.msra.mxu0 0.0
  %3588 = vmatprep.subr.mxu0 0.0
  %3589 = vmatpush1.msra.mxu0 0.0
  %3590 = vmatprep.subr.mxu0 0.0
  %3591 = vmatpush1.msra.mxu0 0.0
  %3592 = vmatprep.subr.mxu0 0.0
  %3593 = vmatpush1.msra.mxu0 0.0
  %3594 = vmatprep.subr.mxu0 0.0
  %3595 = vmatpush1.msra.mxu0 0.0
  %3596 = vmatprep.subr.mxu0 0.0
  %3597 = vmatpush1.msra.mxu0 0.0
  %3598 = vmatprep.subr.mxu0 0.0
  %3599 = vmatpush1.msra.mxu0 0.0
  %3600 = vmatprep.subr.mxu0 0.0
  %3601 = vmatpush1.msra.mxu0 0.0
  %3602 = vmatprep.subr.mxu0 0.0
  %3603 = vmatpush1.msra.mxu0 0.0
  %3604 = vmatprep.subr.mxu0 0.0
  %3605 = vmatpush1.msra.mxu0 0.0
  %3606 = vmatprep.subr.mxu0 0.0
  %3607 = vmatpush1.msra.mxu0 0.0
  %3608 = vmatprep.subr.mxu0 %v3477
  %3609 = vmatpush1.msra.mxu0 %v3474
  %3610 = vmatprep.subr.mxu0 %v3429
  %3611 = vmatpush1.msra.mxu0 %v3428
  %3612 = vmatprep.subr.mxu0 %v3413
  %3613 = vmatpush1.msra.mxu0 %v3412
  %3614 = vmatprep.subr.mxu0 %v3397
  %3615 = vmatpush1.msra.mxu0 %v3396
  %3616 = vmatprep.subr.mxu0 %v3381
  %3617 = vmatpush1.msra.mxu0 %v3380
  %3618 = vmatprep.subr.mxu0 0.0
  %3619 = vmatpush2.msra.mxu0 0.0
  %3620 = vmatprep.subr.mxu0 0.0
  %3621 = vmatpush2.msra.mxu0 0.0
  %3622 = vmatprep.subr.mxu0 0.0
  %3623 = vmatpush2.msra.mxu0 0.0
  %3624 = vmatprep.subr.mxu0 0.0
  %3625 = vmatpush2.msra.mxu0 0.0
  %3626 = vmatprep.subr.mxu0 0.0
  %3627 = vmatpush2.msra.mxu0 0.0
  %3628 = vmatprep.subr.mxu0 0.0
  %3629 = vmatpush2.msra.mxu0 0.0
  %3630 = vmatprep.subr.mxu0 0.0
  %3631 = vmatpush2.msra.mxu0 0.0
  %3632 = vmatprep.subr.mxu0 0.0
  %3633 = vmatpush2.msra.mxu0 0.0
  %3634 = vmatprep.subr.mxu0 0.0
  %3635 = vmatpush2.msra.mxu0 0.0
  %3636 = vmatprep.subr.mxu0 0.0
  %3637 = vmatpush2.msra.mxu0 0.0
  %3638 = vmatprep.subr.mxu0 0.0
  %3639 = vmatpush2.msra.mxu0 0.0
  %3640 = vmatprep.subr.mxu0 0.0
  %3641 = vmatpush2.msra.mxu0 0.0
  %3642 = vmatprep.subr.mxu0 0.0
  %3643 = vmatpush2.msra.mxu0 0.0
  %3644 = vmatprep.subr.mxu0 0.0
  %3645 = vmatpush2.msra.mxu0 0.0
  %3646 = vmatprep.subr.mxu0 0.0
  %3647 = vmatpush2.msra.mxu0 0.0
  %3648 = vmatprep.subr.mxu0 0.0
  %3649 = vmatpush2.msra.mxu0 0.0
  %3650 = vmatprep.mubr.f32.mxu0 0.0
  %3651 = vmatmul.mubr.f32.gmra.mxu0 %v3465
  %v3652 = vpop.f32.mrf.mxu0
  %v3653 = vadd.f32 %v3462, %v3652
  %v3654 = vpop.f32.mrf.mxu0
  %v3655 = vadd.f32 %v3462, %v3654
  %3656 = vdwg.mxu0
  %3657 = vmatprep.subr.mxu0 0.0
  %3658 = vmatpush1.msra.mxu0 0.0
  %3659 = vmatprep.subr.mxu0 0.0
  %3660 = vmatpush1.msra.mxu0 0.0
  %3661 = vmatprep.subr.mxu0 0.0
  %3662 = vmatpush1.msra.mxu0 0.0
  %3663 = vmatprep.subr.mxu0 0.0
  %3664 = vmatpush1.msra.mxu0 0.0
  %3665 = vmatprep.subr.mxu0 0.0
  %3666 = vmatpush1.msra.mxu0 0.0
  %3667 = vmatprep.subr.mxu0 0.0
  %3668 = vmatpush1.msra.mxu0 0.0
  %3669 = vmatprep.subr.mxu0 0.0
  %3670 = vmatpush1.msra.mxu0 0.0
  %3671 = vmatprep.subr.mxu0 0.0
  %3672 = vmatpush1.msra.mxu0 0.0
  %3673 = vmatprep.subr.mxu0 0.0
  %3674 = vmatpush1.msra.mxu0 0.0
  %3675 = vmatprep.subr.mxu0 0.0
  %3676 = vmatpush1.msra.mxu0 0.0
  %3677 = vmatprep.subr.mxu0 0.0
  %3678 = vmatpush1.msra.mxu0 0.0
  %3679 = vmatprep.subr.mxu0 %v3483
  %3680 = vmatpush1.msra.mxu0 %v3480
  %3681 = vmatprep.subr.mxu0 %v3431
  %3682 = vmatpush1.msra.mxu0 %v3430
  %3683 = vmatprep.subr.mxu0 %v3415
  %3684 = vmatpush1.msra.mxu0 %v3414
  %3685 = vmatprep.subr.mxu0 %v3399
  %3686 = vmatpush1.msra.mxu0 %v3398
  %3687 = vmatprep.subr.mxu0 %v3383
  %3688 = vmatpush1.msra.mxu0 %v3382
  %3689 = vmatprep.subr.mxu0 0.0
  %3690 = vmatpush2.msra.mxu0 0.0
  %3691 = vmatprep.subr.mxu0 0.0
  %3692 = vmatpush2.msra.mxu0 0.0
  %3693 = vmatprep.subr.mxu0 0.0
  %3694 = vmatpush2.msra.mxu0 0.0
  %3695 = vmatprep.subr.mxu0 0.0
  %3696 = vmatpush2.msra.mxu0 0.0
  %3697 = vmatprep.subr.mxu0 0.0
  %3698 = vmatpush2.msra.mxu0 0.0
  %3699 = vmatprep.subr.mxu0 0.0
  %3700 = vmatpush2.msra.mxu0 0.0
  %3701 = vmatprep.subr.mxu0 0.0
  %3702 = vmatpush2.msra.mxu0 0.0
  %3703 = vmatprep.subr.mxu0 0.0
  %3704 = vmatpush2.msra.mxu0 0.0
  %3705 = vmatprep.subr.mxu0 0.0
  %3706 = vmatpush2.msra.mxu0 0.0
  %3707 = vmatprep.subr.mxu0 0.0
  %3708 = vmatpush2.msra.mxu0 0.0
  %3709 = vmatprep.subr.mxu0 0.0
  %3710 = vmatpush2.msra.mxu0 0.0
  %3711 = vmatprep.subr.mxu0 0.0
  %3712 = vmatpush2.msra.mxu0 0.0
  %3713 = vmatprep.subr.mxu0 0.0
  %3714 = vmatpush2.msra.mxu0 0.0
  %3715 = vmatprep.subr.mxu0 0.0
  %3716 = vmatpush2.msra.mxu0 0.0
  %3717 = vmatprep.subr.mxu0 0.0
  %3718 = vmatpush2.msra.mxu0 0.0
  %3719 = vmatprep.subr.mxu0 0.0
  %3720 = vmatpush2.msra.mxu0 0.0
  %3721 = vmatprep.mubr.f32.mxu0 0.0
  %3722 = vmatmul.mubr.f32.gmra.mxu0 %v3465
  %v3723 = vpop.f32.mrf.mxu0
  %v3724 = vadd.f32 %v3462, %v3723
  %v3725 = vpop.f32.mrf.mxu0
  %v3726 = vadd.f32 %v3462, %v3725
  %3727 = vdwg.mxu0
  %3728 = vmatprep.subr.mxu0 0.0
  %3729 = vmatpush1.msra.mxu0 0.0
  %3730 = vmatprep.subr.mxu0 0.0
  %3731 = vmatpush1.msra.mxu0 0.0
  %3732 = vmatprep.subr.mxu0 0.0
  %3733 = vmatpush1.msra.mxu0 0.0
  %3734 = vmatprep.subr.mxu0 0.0
  %3735 = vmatpush1.msra.mxu0 0.0
  %3736 = vmatprep.subr.mxu0 0.0
  %3737 = vmatpush1.msra.mxu0 0.0
  %3738 = vmatprep.subr.mxu0 0.0
  %3739 = vmatpush1.msra.mxu0 0.0
  %3740 = vmatprep.subr.mxu0 0.0
  %3741 = vmatpush1.msra.mxu0 0.0
  %3742 = vmatprep.subr.mxu0 0.0
  %3743 = vmatpush1.msra.mxu0 0.0
  %3744 = vmatprep.subr.mxu0 0.0
  %3745 = vmatpush1.msra.mxu0 0.0
  %3746 = vmatprep.subr.mxu0 0.0
  %3747 = vmatpush1.msra.mxu0 0.0
  %3748 = vmatprep.subr.mxu0 0.0
  %3749 = vmatpush1.msra.mxu0 0.0
  %3750 = vmatprep.subr.mxu0 %v3489
  %3751 = vmatpush1.msra.mxu0 %v3486
  %3752 = vmatprep.subr.mxu0 %v3433
  %3753 = vmatpush1.msra.mxu0 %v3432
  %3754 = vmatprep.subr.mxu0 %v3417
  %3755 = vmatpush1.msra.mxu0 %v3416
  %3756 = vmatprep.subr.mxu0 %v3401
  %3757 = vmatpush1.msra.mxu0 %v3400
  %3758 = vmatprep.subr.mxu0 %v3385
  %3759 = vmatpush1.msra.mxu0 %v3384
  %3760 = vmatprep.subr.mxu0 0.0
  %3761 = vmatpush2.msra.mxu0 0.0
  %3762 = vmatprep.subr.mxu0 0.0
  %3763 = vmatpush2.msra.mxu0 0.0
  %3764 = vmatprep.subr.mxu0 0.0
  %3765 = vmatpush2.msra.mxu0 0.0
  %3766 = vmatprep.subr.mxu0 0.0
  %3767 = vmatpush2.msra.mxu0 0.0
  %3768 = vmatprep.subr.mxu0 0.0
  %3769 = vmatpush2.msra.mxu0 0.0
  %3770 = vmatprep.subr.mxu0 0.0
  %3771 = vmatpush2.msra.mxu0 0.0
  %3772 = vmatprep.subr.mxu0 0.0
  %3773 = vmatpush2.msra.mxu0 0.0
  %3774 = vmatprep.subr.mxu0 0.0
  %3775 = vmatpush2.msra.mxu0 0.0
  %3776 = vmatprep.subr.mxu0 0.0
  %3777 = vmatpush2.msra.mxu0 0.0
  %3778 = vmatprep.subr.mxu0 0.0
  %3779 = vmatpush2.msra.mxu0 0.0
  %3780 = vmatprep.subr.mxu0 0.0
  %3781 = vmatpush2.msra.mxu0 0.0
  %3782 = vmatprep.subr.mxu0 0.0
  %3783 = vmatpush2.msra.mxu0 0.0
  %3784 = vmatprep.subr.mxu0 0.0
  %3785 = vmatpush2.msra.mxu0 0.0
  %3786 = vmatprep.subr.mxu0 0.0
  %3787 = vmatpush2.msra.mxu0 0.0
  %3788 = vmatprep.subr.mxu0 0.0
  %3789 = vmatpush2.msra.mxu0 0.0
  %3790 = vmatprep.subr.mxu0 0.0
  %3791 = vmatpush2.msra.mxu0 0.0
  %3792 = vmatprep.mubr.f32.mxu0 0.0
  %3793 = vmatmul.mubr.f32.gmra.mxu0 %v3465
  %v3794 = vpop.f32.mrf.mxu0
  %v3795 = vadd.f32 %v3462, %v3794
  %v3796 = vpop.f32.mrf.mxu0
  %v3797 = vadd.f32 %v3462, %v3796
  %3798 = vdwg.mxu0
  %3799 = vmatprep.subr.mxu0 0.0
  %3800 = vmatpush1.msra.mxu0 0.0
  %3801 = vmatprep.subr.mxu0 0.0
  %3802 = vmatpush1.msra.mxu0 0.0
  %3803 = vmatprep.subr.mxu0 0.0
  %3804 = vmatpush1.msra.mxu0 0.0
  %3805 = vmatprep.subr.mxu0 0.0
  %3806 = vmatpush1.msra.mxu0 0.0
  %3807 = vmatprep.subr.mxu0 0.0
  %3808 = vmatpush1.msra.mxu0 0.0
  %3809 = vmatprep.subr.mxu0 0.0
  %3810 = vmatpush1.msra.mxu0 0.0
  %3811 = vmatprep.subr.mxu0 0.0
  %3812 = vmatpush1.msra.mxu0 0.0
  %3813 = vmatprep.subr.mxu0 0.0
  %3814 = vmatpush1.msra.mxu0 0.0
  %3815 = vmatprep.subr.mxu0 0.0
  %3816 = vmatpush1.msra.mxu0 0.0
  %3817 = vmatprep.subr.mxu0 0.0
  %3818 = vmatpush1.msra.mxu0 0.0
  %3819 = vmatprep.subr.mxu0 0.0
  %3820 = vmatpush1.msra.mxu0 0.0
  %3821 = vmatprep.subr.mxu0 %v3495
  %3822 = vmatpush1.msra.mxu0 %v3492
  %3823 = vmatprep.subr.mxu0 %v3435
  %3824 = vmatpush1.msra.mxu0 %v3434
  %3825 = vmatprep.subr.mxu0 %v3419
  %3826 = vmatpush1.msra.mxu0 %v3418
  %3827 = vmatprep.subr.mxu0 %v3403
  %3828 = vmatpush1.msra.mxu0 %v3402
  %3829 = vmatprep.subr.mxu0 %v3387
  %3830 = vmatpush1.msra.mxu0 %v3386
  %3831 = vmatprep.subr.mxu0 0.0
  %3832 = vmatpush2.msra.mxu0 0.0
  %3833 = vmatprep.subr.mxu0 0.0
  %3834 = vmatpush2.msra.mxu0 0.0
  %3835 = vmatprep.subr.mxu0 0.0
  %3836 = vmatpush2.msra.mxu0 0.0
  %3837 = vmatprep.subr.mxu0 0.0
  %3838 = vmatpush2.msra.mxu0 0.0
  %3839 = vmatprep.subr.mxu0 0.0
  %3840 = vmatpush2.msra.mxu0 0.0
  %3841 = vmatprep.subr.mxu0 0.0
  %3842 = vmatpush2.msra.mxu0 0.0
  %3843 = vmatprep.subr.mxu0 0.0
  %3844 = vmatpush2.msra.mxu0 0.0
  %3845 = vmatprep.subr.mxu0 0.0
  %3846 = vmatpush2.msra.mxu0 0.0
  %3847 = vmatprep.subr.mxu0 0.0
  %3848 = vmatpush2.msra.mxu0 0.0
  %3849 = vmatprep.subr.mxu0 0.0
  %3850 = vmatpush2.msra.mxu0 0.0
  %3851 = vmatprep.subr.mxu0 0.0
  %3852 = vmatpush2.msra.mxu0 0.0
  %3853 = vmatprep.subr.mxu0 0.0
  %3854 = vmatpush2.msra.mxu0 0.0
  %3855 = vmatprep.subr.mxu0 0.0
  %3856 = vmatpush2.msra.mxu0 0.0
  %3857 = vmatprep.subr.mxu0 0.0
  %3858 = vmatpush2.msra.mxu0 0.0
  %3859 = vmatprep.subr.mxu0 0.0
  %3860 = vmatpush2.msra.mxu0 0.0
  %3861 = vmatprep.subr.mxu0 0.0
  %3862 = vmatpush2.msra.mxu0 0.0
  %3863 = vmatprep.mubr.f32.mxu0 0.0
  %3864 = vmatmul.mubr.f32.gmra.mxu0 %v3465
  %v3865 = vpop.f32.mrf.mxu0
  %v3866 = vadd.f32 %v3462, %v3865
  %v3867 = vpop.f32.mrf.mxu0
  %v3868 = vadd.f32 %v3462, %v3867
  %3869 = vdwg.mxu0
  %3870 = vmatprep.subr.mxu0 0.0
  %3871 = vmatpush1.msra.mxu0 0.0
  %3872 = vmatprep.subr.mxu0 0.0
  %3873 = vmatpush1.msra.mxu0 0.0
  %3874 = vmatprep.subr.mxu0 0.0
  %3875 = vmatpush1.msra.mxu0 0.0
  %3876 = vmatprep.subr.mxu0 0.0
  %3877 = vmatpush1.msra.mxu0 0.0
  %3878 = vmatprep.subr.mxu0 0.0
  %3879 = vmatpush1.msra.mxu0 0.0
  %3880 = vmatprep.subr.mxu0 0.0
  %3881 = vmatpush1.msra.mxu0 0.0
  %3882 = vmatprep.subr.mxu0 0.0
  %3883 = vmatpush1.msra.mxu0 0.0
  %3884 = vmatprep.subr.mxu0 0.0
  %3885 = vmatpush1.msra.mxu0 0.0
  %3886 = vmatprep.subr.mxu0 0.0
  %3887 = vmatpush1.msra.mxu0 0.0
  %3888 = vmatprep.subr.mxu0 0.0
  %3889 = vmatpush1.msra.mxu0 0.0
  %3890 = vmatprep.subr.mxu0 0.0
  %3891 = vmatpush1.msra.mxu0 0.0
  %3892 = vmatprep.subr.mxu0 %v3501
  %3893 = vmatpush1.msra.mxu0 %v3498
  %3894 = vmatprep.subr.mxu0 %v3437
  %3895 = vmatpush1.msra.mxu0 %v3436
  %3896 = vmatprep.subr.mxu0 %v3421
  %3897 = vmatpush1.msra.mxu0 %v3420
  %3898 = vmatprep.subr.mxu0 %v3405
  %3899 = vmatpush1.msra.mxu0 %v3404
  %3900 = vmatprep.subr.mxu0 %v3389
  %3901 = vmatpush1.msra.mxu0 %v3388
  %3902 = vmatprep.subr.mxu0 0.0
  %3903 = vmatpush2.msra.mxu0 0.0
  %3904 = vmatprep.subr.mxu0 0.0
  %3905 = vmatpush2.msra.mxu0 0.0
  %3906 = vmatprep.subr.mxu0 0.0
  %3907 = vmatpush2.msra.mxu0 0.0
  %3908 = vmatprep.subr.mxu0 0.0
  %3909 = vmatpush2.msra.mxu0 0.0
  %3910 = vmatprep.subr.mxu0 0.0
  %3911 = vmatpush2.msra.mxu0 0.0
  %3912 = vmatprep.subr.mxu0 0.0
  %3913 = vmatpush2.msra.mxu0 0.0
  %3914 = vmatprep.subr.mxu0 0.0
  %3915 = vmatpush2.msra.mxu0 0.0
  %3916 = vmatprep.subr.mxu0 0.0
  %3917 = vmatpush2.msra.mxu0 0.0
  %3918 = vmatprep.subr.mxu0 0.0
  %3919 = vmatpush2.msra.mxu0 0.0
  %3920 = vmatprep.subr.mxu0 0.0
  %3921 = vmatpush2.msra.mxu0 0.0
  %3922 = vmatprep.subr.mxu0 0.0
  %3923 = vmatpush2.msra.mxu0 0.0
  %3924 = vmatprep.subr.mxu0 0.0
  %3925 = vmatpush2.msra.mxu0 0.0
  %3926 = vmatprep.subr.mxu0 0.0
  %3927 = vmatpush2.msra.mxu0 0.0
  %3928 = vmatprep.subr.mxu0 0.0
  %3929 = vmatpush2.msra.mxu0 0.0
  %3930 = vmatprep.subr.mxu0 0.0
  %3931 = vmatpush2.msra.mxu0 0.0
  %3932 = vmatprep.subr.mxu0 0.0
  %3933 = vmatpush2.msra.mxu0 0.0
  %3934 = vmatprep.mubr.f32.mxu0 0.0
  %3935 = vmatmul.mubr.f32.gmra.mxu0 %v3465
  %v3936 = vpop.f32.mrf.mxu0
  %v3937 = vadd.f32 %v3462, %v3936
  %v3938 = vpop.f32.mrf.mxu0
  %v3939 = vadd.f32 %v3462, %v3938
  %3940 = vdwg.mxu0
  %3941 = vmatprep.subr.mxu0 0.0
  %3942 = vmatpush1.msra.mxu0 0.0
  %3943 = vmatprep.subr.mxu0 0.0
  %3944 = vmatpush1.msra.mxu0 0.0
  %3945 = vmatprep.subr.mxu0 0.0
  %3946 = vmatpush1.msra.mxu0 0.0
  %3947 = vmatprep.subr.mxu0 0.0
  %3948 = vmatpush1.msra.mxu0 0.0
  %3949 = vmatprep.subr.mxu0 0.0
  %3950 = vmatpush1.msra.mxu0 0.0
  %3951 = vmatprep.subr.mxu0 0.0
  %3952 = vmatpush1.msra.mxu0 0.0
  %3953 = vmatprep.subr.mxu0 0.0
  %3954 = vmatpush1.msra.mxu0 0.0
  %3955 = vmatprep.subr.mxu0 0.0
  %3956 = vmatpush1.msra.mxu0 0.0
  %3957 = vmatprep.subr.mxu0 0.0
  %3958 = vmatpush1.msra.mxu0 0.0
  %3959 = vmatprep.subr.mxu0 0.0
  %3960 = vmatpush1.msra.mxu0 0.0
  %3961 = vmatprep.subr.mxu0 0.0
  %3962 = vmatpush1.msra.mxu0 0.0
  %3963 = vmatprep.subr.mxu0 %v3507
  %3964 = vmatpush1.msra.mxu0 %v3504
  %3965 = vmatprep.subr.mxu0 %v3439
  %3966 = vmatpush1.msra.mxu0 %v3438
  %3967 = vmatprep.subr.mxu0 %v3423
  %3968 = vmatpush1.msra.mxu0 %v3422
  %3969 = vmatprep.subr.mxu0 %v3407
  %3970 = vmatpush1.msra.mxu0 %v3406
  %3971 = vmatprep.subr.mxu0 %v3391
  %3972 = vmatpush1.msra.mxu0 %v3390
  %3973 = vmatprep.subr.mxu0 0.0
  %3974 = vmatpush2.msra.mxu0 0.0
  %3975 = vmatprep.subr.mxu0 0.0
  %3976 = vmatpush2.msra.mxu0 0.0
  %3977 = vmatprep.subr.mxu0 0.0
  %3978 = vmatpush2.msra.mxu0 0.0
  %3979 = vmatprep.subr.mxu0 0.0
  %3980 = vmatpush2.msra.mxu0 0.0
  %3981 = vmatprep.subr.mxu0 0.0
  %3982 = vmatpush2.msra.mxu0 0.0
  %3983 = vmatprep.subr.mxu0 0.0
  %3984 = vmatpush2.msra.mxu0 0.0
  %3985 = vmatprep.subr.mxu0 0.0
  %3986 = vmatpush2.msra.mxu0 0.0
  %3987 = vmatprep.subr.mxu0 0.0
  %3988 = vmatpush2.msra.mxu0 0.0
  %3989 = vmatprep.subr.mxu0 0.0
  %3990 = vmatpush2.msra.mxu0 0.0
  %3991 = vmatprep.subr.mxu0 0.0
  %3992 = vmatpush2.msra.mxu0 0.0
  %3993 = vmatprep.subr.mxu0 0.0
  %3994 = vmatpush2.msra.mxu0 0.0
  %3995 = vmatprep.subr.mxu0 0.0
  %3996 = vmatpush2.msra.mxu0 0.0
  %3997 = vmatprep.subr.mxu0 0.0
  %3998 = vmatpush2.msra.mxu0 0.0
  %3999 = vmatprep.subr.mxu0 0.0
  %4000 = vmatpush2.msra.mxu0 0.0
  %4001 = vmatprep.subr.mxu0 0.0
  %4002 = vmatpush2.msra.mxu0 0.0
  %4003 = vmatprep.subr.mxu0 0.0
  %4004 = vmatpush2.msra.mxu0 0.0
  %4005 = vmatprep.mubr.f32.mxu0 0.0
  %4006 = vmatmul.mubr.f32.gmra.mxu0 %v3465
  %v4007 = vpop.f32.mrf.mxu0
  %v4008 = vadd.f32 %v3462, %v4007
  %v4009 = vpop.f32.mrf.mxu0
  %v4010 = vadd.f32 %v3462, %v4009
  %4011 = vdwg.mxu0
  %4012 = vmatprep.subr.mxu0 0.0
  %4013 = vmatpush1.msra.mxu0 0.0
  %4014 = vmatprep.subr.mxu0 0.0
  %4015 = vmatpush1.msra.mxu0 0.0
  %4016 = vmatprep.subr.mxu0 0.0
  %4017 = vmatpush1.msra.mxu0 0.0
  %4018 = vmatprep.subr.mxu0 0.0
  %4019 = vmatpush1.msra.mxu0 0.0
  %4020 = vmatprep.subr.mxu0 0.0
  %4021 = vmatpush1.msra.mxu0 0.0
  %4022 = vmatprep.subr.mxu0 0.0
  %4023 = vmatpush1.msra.mxu0 0.0
  %4024 = vmatprep.subr.mxu0 0.0
  %4025 = vmatpush1.msra.mxu0 0.0
  %4026 = vmatprep.subr.mxu0 0.0
  %4027 = vmatpush1.msra.mxu0 0.0
  %4028 = vmatprep.subr.mxu0 0.0
  %4029 = vmatpush1.msra.mxu0 0.0
  %4030 = vmatprep.subr.mxu0 0.0
  %4031 = vmatpush1.msra.mxu0 0.0
  %4032 = vmatprep.subr.mxu0 0.0
  %4033 = vmatpush1.msra.mxu0 0.0
  %4034 = vmatprep.subr.mxu0 %v3513
  %4035 = vmatpush1.msra.mxu0 %v3510
  %4036 = vmatprep.subr.mxu0 %v3441
  %4037 = vmatpush1.msra.mxu0 %v3440
  %4038 = vmatprep.subr.mxu0 %v3425
  %4039 = vmatpush1.msra.mxu0 %v3424
  %4040 = vmatprep.subr.mxu0 %v3409
  %4041 = vmatpush1.msra.mxu0 %v3408
  %4042 = vmatprep.subr.mxu0 %v3393
  %4043 = vmatpush1.msra.mxu0 %v3392
  %4044 = vmatprep.subr.mxu0 0.0
  %4045 = vmatpush2.msra.mxu0 0.0
  %4046 = vmatprep.subr.mxu0 0.0
  %4047 = vmatpush2.msra.mxu0 0.0
  %4048 = vmatprep.subr.mxu0 0.0
  %4049 = vmatpush2.msra.mxu0 0.0
  %4050 = vmatprep.subr.mxu0 0.0
  %4051 = vmatpush2.msra.mxu0 0.0
  %4052 = vmatprep.subr.mxu0 0.0
  %4053 = vmatpush2.msra.mxu0 0.0
  %4054 = vmatprep.subr.mxu0 0.0
  %4055 = vmatpush2.msra.mxu0 0.0
  %4056 = vmatprep.subr.mxu0 0.0
  %4057 = vmatpush2.msra.mxu0 0.0
  %4058 = vmatprep.subr.mxu0 0.0
  %4059 = vmatpush2.msra.mxu0 0.0
  %4060 = vmatprep.subr.mxu0 0.0
  %4061 = vmatpush2.msra.mxu0 0.0
  %4062 = vmatprep.subr.mxu0 0.0
  %4063 = vmatpush2.msra.mxu0 0.0
  %4064 = vmatprep.subr.mxu0 0.0
  %4065 = vmatpush2.msra.mxu0 0.0
  %4066 = vmatprep.subr.mxu0 0.0
  %4067 = vmatpush2.msra.mxu0 0.0
  %4068 = vmatprep.subr.mxu0 0.0
  %4069 = vmatpush2.msra.mxu0 0.0
  %4070 = vmatprep.subr.mxu0 0.0
  %4071 = vmatpush2.msra.mxu0 0.0
  %4072 = vmatprep.subr.mxu0 0.0
  %4073 = vmatpush2.msra.mxu0 0.0
  %4074 = vmatprep.subr.mxu0 0.0
  %4075 = vmatpush2.msra.mxu0 0.0
  %4076 = vmatprep.mubr.f32.mxu0 0.0
  %4077 = vmatmul.mubr.f32.gmra.mxu0 %v3465
  %v4078 = vpop.f32.mrf.mxu0
  %v4079 = vadd.f32 %v3462, %v4078
  %v4080 = vpop.f32.mrf.mxu0
  %v4081 = vadd.f32 %v3462, %v4080
  %4082 = vdwg.mxu0
  %v4091 = vcombine.low %v3582, %v3584
  %v4092 = vcombine.low %v3653, %v3655
  %v4093 = vcombine.low %v3724, %v3726
  %v4094 = vcombine.low %v3795, %v3797
  %4099 = vst [vmem:[%s5] sm:$0xff] %v4091
  %4100 = vst [vmem:[%s5 + $0x8] sm:$0xff] %v4092
  %4101 = vst [vmem:[%s5 + $0x10] sm:$0xff] %v4093
  %4102 = vst [vmem:[%s5 + $0x18] sm:$0xff] %v4094
  %v4111 = vcombine.low %v3866, %v3868
  %v4112 = vcombine.low %v3937, %v3939
  %v4113 = vcombine.low %v4008, %v4010
  %v4114 = vcombine.low %v4079, %v4081
  %s4119 = scalar_lea.vmem %s5, 32
  %4120 = vst [vmem:[%s4119] sm:$0xff] %v4111
  %4121 = vst [vmem:[%s4119 + $0x8] sm:$0xff] %v4112
  %4122 = vst [vmem:[%s4119 + $0x10] sm:$0xff] %v4113
  %4123 = vst [vmem:[%s4119 + $0x18] sm:$0xff] %v4114
  // Predicated region
  $region22: #{nearest_conv_upsampler.1} parent=0 // pred_check
    _
  $region23: #{nearest_conv_upsampler.1} parent=0 // pred_check_branch
    %4125 = sbr.rel (0) target = $region25
  $region24: #{nearest_conv_upsampler.1} parent=0 // pred_region
    _
  $region25: #{nearest_conv_upsampler.1} parent=0 // pred_fallthru
    _
  // Predicated region
  $region26: #{nearest_conv_upsampler.1} parent=0 // pred_check
    _
  $region27: #{nearest_conv_upsampler.1} parent=0 // pred_check_branch
    %4127 = sbr.rel (0) target = $region29
  $region28: #{nearest_conv_upsampler.1} parent=0 // pred_region
    _
  $region29: #{nearest_conv_upsampler.1} parent=0 // pred_fallthru
    _

</llo_original>
